<compile_context>
chip_gen: v7x
topology: tpu7x:2x2x1
jax: 0.10.0
libtpu: 0.0.40
codegen_flags: <defaults>
</compile_context>

<pallas_src>
import functools

import jax
import jax.numpy as jnp
from jax import lax
from jax.experimental import pallas as pl
from jax.experimental.pallas import tpu as pltpu

IN_CH = 159
OUT_CH = 64
KSIZE = 11
DILATION = 1
PAD = DILATION * (KSIZE - 1) // 2          # = 5 -> "same" output length
HALO = 2 * PAD                             # 10 columns of right halo per tile
EPS = 1e-5
CIN_PAD = ((IN_CH + 15) // 16) * 16        # 160: sublane-pad Cin (bf16 packs 16 rows/vreg)
MAX_TILE_L = 1024                          # lane tile cap (multiple of 128), ~3 MiB VMEM/step


def _conv_relu_stats_kernel(xa_ref, xb_ref, w_ref, b_ref, y_ref, stats_ref,
                            *, tile_l, l_valid):
    """One (batch, L-tile): 11 shifted bf16 matmuls (f32 acc) + bias + ReLU.

    xa_ref is body tile j of the padded input, xb_ref is a 128-lane block whose
    first HALO columns are the right halo (tile j+1).  Also writes per-channel
    (sum, sum of squares) partials for the training-mode BatchNorm.
    """
    xa = xa_ref[0]                                       # (CIN_PAD, tile_l) bf16
    xb = xb_ref[0, :, :HALO]                             # (CIN_PAD, 10) bf16
    xn = jnp.concatenate([xa, xb], axis=1)               # (CIN_PAD, tile_l + 10)

    acc = jnp.zeros((OUT_CH, tile_l), jnp.float32)
    for k in range(KSIZE):                               # static unroll over the 11 taps
        acc = acc + jnp.dot(
            w_ref[k],                                    # (OUT_CH, CIN_PAD) bf16
            xn[:, k:k + tile_l],                         # shifted (CIN_PAD, tile_l) window
            preferred_element_type=jnp.float32,          # f32 MXU accumulation
        )
    y = jnp.maximum(acc + b_ref[...], 0.0)               # (OUT_CH, tile_l) f32
    y_ref[0] = y

    # Exclude the L-padding tail (only possible on the last tile) from the BN stats.
    if l_valid % tile_l != 0:
        j = pl.program_id(1)
        pos = j * tile_l + lax.broadcasted_iota(jnp.int32, (1, tile_l), 1)
        y = jnp.where(pos < l_valid, y, 0.0)
    ssum = jnp.sum(y, axis=1, keepdims=True)             # (OUT_CH, 1)
    ssq = jnp.sum(y * y, axis=1, keepdims=True)          # (OUT_CH, 1)
    stats_ref[0, 0] = jnp.concatenate([ssum, ssq], axis=1)   # (OUT_CH, 2)


def _bn_apply_kernel(y_ref, scale_ref, shift_ref, o_ref):
    """One (batch, L-tile): folded BatchNorm affine, y*scale + shift."""
    o_ref[0] = y_ref[0] * scale_ref[...] + shift_ref[...]


@jax.jit
def conv_block_forward(x, w, b, gamma, beta):
    """x: (N, 159, L) float32 NCW; returns (N, 64, L) float32 NCW (training-mode BN)."""
    N, cin, L = x.shape
    assert cin == IN_CH
    tile_l = min(MAX_TILE_L, -(-L // 128) * 128)         # lane-dense (>=128) output tiles
    num_t = -(-L // tile_l)
    l_pad = num_t * tile_l
    halo_blocks = tile_l // 128                          # xb block-index stride (128-lane blocks)

    # Single fused pad+cast pass over x: zero-pad Cin->160, +PAD left halo, and one whole
    # spare tile on the right so the "j+1" halo block is always in range.
    xp = jnp.pad(
        x, ((0, 0), (0, CIN_PAD - IN_CH), (PAD, l_pad + tile_l - PAD - L))
    ).astype(jnp.bfloat16)                               # (N, 160, l_pad + tile_l)

    wk = jnp.transpose(
        jnp.pad(w, ((0, 0), (0, CIN_PAD - IN_CH), (0, 0))), (2, 0, 1)
    ).astype(jnp.bfloat16)                               # (KSIZE, OUT_CH, CIN_PAD)
    b2 = b.reshape(OUT_CH, 1).astype(jnp.float32)

    conv_flops = 2 * N * l_pad * OUT_CH * CIN_PAD * KSIZE
    conv_bytes = (N * num_t * CIN_PAD * (tile_l + 128) * 2
                  + KSIZE * OUT_CH * CIN_PAD * 2 + OUT_CH * 4
                  + N * OUT_CH * l_pad * 4 + N * num_t * OUT_CH * 2 * 4)

    y_pad, stats = pl.pallas_call(
        functools.partial(_conv_relu_stats_kernel, tile_l=tile_l, l_valid=L),
        grid=(N, num_t),
        in_specs=[
            # body tile j of the padded input
            pl.BlockSpec((1, CIN_PAD, tile_l), lambda n, j: (n, 0, j)),
            # narrow right-halo block: first 128 columns of tile j+1
            pl.BlockSpec((1, CIN_PAD, 128),
                         lambda n, j: (n, 0, (j + 1) * halo_blocks)),
            pl.BlockSpec((KSIZE, OUT_CH, CIN_PAD), lambda n, j: (0, 0, 0)),
            pl.BlockSpec((OUT_CH, 1), lambda n, j: (0, 0)),
        ],
        out_specs=(
            pl.BlockSpec((1, OUT_CH, tile_l), lambda n, j: (n, 0, j)),
            pl.BlockSpec((1, 1, OUT_CH, 2), lambda n, j: (n, j, 0, 0)),
        ),
        out_shape=(
            jax.ShapeDtypeStruct((N, OUT_CH, l_pad), jnp.float32),
            jax.ShapeDtypeStruct((N, num_t, OUT_CH, 2), jnp.float32),
        ),
        compiler_params=pltpu.CompilerParams(
            dimension_semantics=("parallel", "parallel"),
            vmem_limit_bytes=32 * 1024 * 1024,
        ),
        cost_estimate=pl.CostEstimate(
            flops=conv_flops, transcendentals=0, bytes_accessed=conv_bytes),
    )(xp, xp, wk, b2)

    # Training-mode BatchNorm1d: global per-channel stats over (batch, length),
    # folded into a per-channel affine (biased variance, matching PyTorch).
    s = jnp.sum(stats, axis=(0, 1))                      # (OUT_CH, 2)
    count = float(N * L)
    mean = s[:, 0] / count
    var = jnp.maximum(s[:, 1] / count - mean * mean, 0.0)
    inv_std = lax.rsqrt(var + EPS)
    scale = (gamma * inv_std).reshape(OUT_CH, 1).astype(jnp.float32)
    shift = (beta - mean * gamma * inv_std).reshape(OUT_CH, 1).astype(jnp.float32)
    # TODO(synk): nn.BatchNorm1d also updates running_mean/var buffers in training;
    # that state mutation is out of scope for the forward-pass kernel.

    bn_bytes = 2 * N * OUT_CH * l_pad * 4 + 2 * OUT_CH * 4
    out_pad = pl.pallas_call(
        _bn_apply_kernel,
        grid=(N, num_t),
        in_specs=[
            pl.BlockSpec((1, OUT_CH, tile_l), lambda n, j: (n, 0, j)),
            pl.BlockSpec((OUT_CH, 1), lambda n, j: (0, 0)),
            pl.BlockSpec((OUT_CH, 1), lambda n, j: (0, 0)),
        ],
        out_specs=pl.BlockSpec((1, OUT_CH, tile_l), lambda n, j: (n, 0, j)),
        out_shape=jax.ShapeDtypeStruct((N, OUT_CH, l_pad), jnp.float32),
        input_output_aliases={0: 0},                     # normalize y in place
        compiler_params=pltpu.CompilerParams(
            dimension_semantics=("parallel", "parallel"),
            vmem_limit_bytes=32 * 1024 * 1024,
        ),
        cost_estimate=pl.CostEstimate(
            flops=2 * N * OUT_CH * l_pad, transcendentals=0, bytes_accessed=bn_bytes),
    )(y_pad, scale, shift)

    return out_pad[:, :, :L]


def reference_forward(x, w, b, gamma, beta, compute_dtype=jnp.float32):
    """Plain-JAX reference matching PyTorch semantics (training-mode BatchNorm)."""
    y = lax.conv_general_dilated(
        x.astype(compute_dtype), w.astype(compute_dtype),
        window_strides=(1,), padding=[(PAD, PAD)], rhs_dilation=(DILATION,),
        dimension_numbers=("NCH", "OIH", "NCH"),
        preferred_element_type=jnp.float32,
    ) + b[None, :, None]
    y = jnp.maximum(y, 0.0)
    mean = jnp.mean(y, axis=(0, 2), keepdims=True)
    var = jnp.mean((y - mean) ** 2, axis=(0, 2), keepdims=True)
    return (y - mean) * lax.rsqrt(var + EPS) * gamma[None, :, None] + beta[None, :, None]


if __name__ == "__main__":
    key = jax.random.PRNGKey(0)
    kx, kw, kb, kg, kbeta = jax.random.split(key, 5)

    N, L = 2, 16
    x = jax.random.normal(kx, (N, IN_CH, L), dtype=jnp.float32)

    # Deterministic synthetic parameters (shapes match nn.Conv1d / nn.BatchNorm1d).
    fan_in = IN_CH * KSIZE
    w = jax.random.normal(kw, (OUT_CH, IN_CH, KSIZE), dtype=jnp.float32) / jnp.sqrt(fan_in)
    b = jax.random.normal(kb, (OUT_CH,), dtype=jnp.float32) * 0.1
    gamma = 1.0 + 0.1 * jax.random.normal(kg, (OUT_CH,), dtype=jnp.float32)
    beta = 0.1 * jax.random.normal(kbeta, (OUT_CH,), dtype=jnp.float32)

    out = conv_block_forward(x, w, b, gamma, beta)
    jax.block_until_ready(out)
    assert out.shape == (N, OUT_CH, L)

    # Semantic check vs a reference using the same bf16-MXU compute precision.
    ref_bf16 = reference_forward(x, w, b, gamma, beta, compute_dtype=jnp.bfloat16)
    err = float(jnp.max(jnp.abs(out - ref_bf16)))
    assert jnp.allclose(out, ref_bf16, atol=3e-3, rtol=3e-3), err

    # Coarse sanity bound vs the full-f32 reference (bf16 input rounding only).
    ref_f32 = reference_forward(x, w, b, gamma, beta, compute_dtype=jnp.float32)
    err32 = float(jnp.max(jnp.abs(out - ref_f32)))
    assert jnp.allclose(out, ref_f32, atol=1e-1, rtol=1e-1), err32

    print("KERNEL_OK")
</pallas_src>

<mosaic_0001>
module attributes {stable_mosaic.version = 11 : i64} {
  func.func @_conv_relu_stats_kernel(%arg0: i32, %arg1: i32, %arg2: memref<1x160x128xbf16, #tpu.memory_space<vmem>>, %arg3: memref<1x160x128xbf16, #tpu.memory_space<vmem>>, %arg4: memref<11x64x160xbf16, #tpu.memory_space<vmem>>, %arg5: memref<64x1xf32, #tpu.memory_space<vmem>>, %arg6: memref<1x64x128xf32, #tpu.memory_space<vmem>>, %arg7: memref<1x1x64x2xf32, #tpu.memory_space<vmem>>) attributes {dimension_semantics = [#tpu.dimension_semantics<parallel>, #tpu.dimension_semantics<parallel>], iteration_bounds = array<i64: 2, 1>, scalar_prefetch = 0 : i64, scratch_operands = 0 : i64, tpu.core_type = #tpu.core_type<tc>, window_params = [{transform_indices = @transform_0, window_bounds = array<i64: 1, 160, 128>}, {transform_indices = @transform_1, window_bounds = array<i64: 1, 160, 128>}, {pipeline_mode = #tpu.pipeline_mode<synchronous>, transform_indices = @transform_2, window_bounds = array<i64: 11, 64, 160>}, {pipeline_mode = #tpu.pipeline_mode<synchronous>, transform_indices = @transform_3, window_bounds = array<i64: 64, 1>}, {transform_indices = @transform_4, window_bounds = array<i64: 1, 64, 128>}, {transform_indices = @transform_5, window_bounds = array<i64: 1, 1, 64, 2>}]} {
    %c0 = arith.constant 0 : index
    %c0_0 = arith.constant 0 : index
    %c0_1 = arith.constant 0 : index
    %0 = vector.load %arg2[%c0, %c0_0, %c0_1] : memref<1x160x128xbf16, #tpu.memory_space<vmem>>, vector<1x160x128xbf16>
    %1 = vector.shape_cast %0 : vector<1x160x128xbf16> to vector<160x128xbf16>
    %c0_2 = arith.constant 0 : index
    %c0_3 = arith.constant 0 : index
    %c0_4 = arith.constant 0 : index
    %2 = vector.load %arg3[%c0_2, %c0_3, %c0_4] : memref<1x160x128xbf16, #tpu.memory_space<vmem>>, vector<1x160x10xbf16>
    %3 = vector.shape_cast %2 : vector<1x160x10xbf16> to vector<160x10xbf16>
    %4 = tpu.concatenate %1, %3 in 1 : vector<160x128xbf16>, vector<160x10xbf16> -> vector<160x138xbf16>
    %cst = arith.constant 0.000000e+00 : f32
    %5 = vector.broadcast %cst : f32 to vector<64x128xf32>
    %c0_5 = arith.constant 0 : index
    %c0_6 = arith.constant 0 : index
    %c0_7 = arith.constant 0 : index
    %6 = vector.load %arg4[%c0_5, %c0_6, %c0_7] : memref<11x64x160xbf16, #tpu.memory_space<vmem>>, vector<1x64x160xbf16>
    %7 = vector.shape_cast %6 : vector<1x64x160xbf16> to vector<64x160xbf16>
    %8 = vector.extract_strided_slice %4 {offsets = [0, 0], sizes = [160, 128], strides = [1, 1]} : vector<160x138xbf16> to vector<160x128xbf16>
    %cst_8 = arith.constant dense<0.000000e+00> : vector<64x128xf32>
    %9 = tpu.matmul %7, %8, %cst_8 {dimension_numbers = #tpu.dot_dimension_numbers<[1], [0], [0], [1], [0, 0, 1, 1], [], []>} : vector<64x160xbf16>, vector<160x128xbf16>, vector<64x128xf32> -> vector<64x128xf32>
    %10 = arith.addf %5, %9 : vector<64x128xf32>
    %c1 = arith.constant 1 : index
    %c0_9 = arith.constant 0 : index
    %c0_10 = arith.constant 0 : index
    %11 = vector.load %arg4[%c1, %c0_9, %c0_10] : memref<11x64x160xbf16, #tpu.memory_space<vmem>>, vector<1x64x160xbf16>
    %12 = vector.shape_cast %11 : vector<1x64x160xbf16> to vector<64x160xbf16>
    %13 = vector.extract_strided_slice %4 {offsets = [0, 1], sizes = [160, 128], strides = [1, 1]} : vector<160x138xbf16> to vector<160x128xbf16>
    %cst_11 = arith.constant dense<0.000000e+00> : vector<64x128xf32>
    %14 = tpu.matmul %12, %13, %cst_11 {dimension_numbers = #tpu.dot_dimension_numbers<[1], [0], [0], [1], [0, 0, 1, 1], [], []>} : vector<64x160xbf16>, vector<160x128xbf16>, vector<64x128xf32> -> vector<64x128xf32>
    %15 = arith.addf %10, %14 : vector<64x128xf32>
    %c2 = arith.constant 2 : index
    %c0_12 = arith.constant 0 : index
    %c0_13 = arith.constant 0 : index
    %16 = vector.load %arg4[%c2, %c0_12, %c0_13] : memref<11x64x160xbf16, #tpu.memory_space<vmem>>, vector<1x64x160xbf16>
    %17 = vector.shape_cast %16 : vector<1x64x160xbf16> to vector<64x160xbf16>
    %18 = vector.extract_strided_slice %4 {offsets = [0, 2], sizes = [160, 128], strides = [1, 1]} : vector<160x138xbf16> to vector<160x128xbf16>
    %cst_14 = arith.constant dense<0.000000e+00> : vector<64x128xf32>
    %19 = tpu.matmul %17, %18, %cst_14 {dimension_numbers = #tpu.dot_dimension_numbers<[1], [0], [0], [1], [0, 0, 1, 1], [], []>} : vector<64x160xbf16>, vector<160x128xbf16>, vector<64x128xf32> -> vector<64x128xf32>
    %20 = arith.addf %15, %19 : vector<64x128xf32>
    %c3 = arith.constant 3 : index
    %c0_15 = arith.constant 0 : index
    %c0_16 = arith.constant 0 : index
    %21 = vector.load %arg4[%c3, %c0_15, %c0_16] : memref<11x64x160xbf16, #tpu.memory_space<vmem>>, vector<1x64x160xbf16>
    %22 = vector.shape_cast %21 : vector<1x64x160xbf16> to vector<64x160xbf16>
    %23 = vector.extract_strided_slice %4 {offsets = [0, 3], sizes = [160, 128], strides = [1, 1]} : vector<160x138xbf16> to vector<160x128xbf16>
    %cst_17 = arith.constant dense<0.000000e+00> : vector<64x128xf32>
    %24 = tpu.matmul %22, %23, %cst_17 {dimension_numbers = #tpu.dot_dimension_numbers<[1], [0], [0], [1], [0, 0, 1, 1], [], []>} : vector<64x160xbf16>, vector<160x128xbf16>, vector<64x128xf32> -> vector<64x128xf32>
    %25 = arith.addf %20, %24 : vector<64x128xf32>
    %c4 = arith.constant 4 : index
    %c0_18 = arith.constant 0 : index
    %c0_19 = arith.constant 0 : index
    %26 = vector.load %arg4[%c4, %c0_18, %c0_19] : memref<11x64x160xbf16, #tpu.memory_space<vmem>>, vector<1x64x160xbf16>
    %27 = vector.shape_cast %26 : vector<1x64x160xbf16> to vector<64x160xbf16>
    %28 = vector.extract_strided_slice %4 {offsets = [0, 4], sizes = [160, 128], strides = [1, 1]} : vector<160x138xbf16> to vector<160x128xbf16>
    %cst_20 = arith.constant dense<0.000000e+00> : vector<64x128xf32>
    %29 = tpu.matmul %27, %28, %cst_20 {dimension_numbers = #tpu.dot_dimension_numbers<[1], [0], [0], [1], [0, 0, 1, 1], [], []>} : vector<64x160xbf16>, vector<160x128xbf16>, vector<64x128xf32> -> vector<64x128xf32>
    %30 = arith.addf %25, %29 : vector<64x128xf32>
    %c5 = arith.constant 5 : index
    %c0_21 = arith.constant 0 : index
    %c0_22 = arith.constant 0 : index
    %31 = vector.load %arg4[%c5, %c0_21, %c0_22] : memref<11x64x160xbf16, #tpu.memory_space<vmem>>, vector<1x64x160xbf16>
    %32 = vector.shape_cast %31 : vector<1x64x160xbf16> to vector<64x160xbf16>
    %33 = vector.extract_strided_slice %4 {offsets = [0, 5], sizes = [160, 128], strides = [1, 1]} : vector<160x138xbf16> to vector<160x128xbf16>
    %cst_23 = arith.constant dense<0.000000e+00> : vector<64x128xf32>
    %34 = tpu.matmul %32, %33, %cst_23 {dimension_numbers = #tpu.dot_dimension_numbers<[1], [0], [0], [1], [0, 0, 1, 1], [], []>} : vector<64x160xbf16>, vector<160x128xbf16>, vector<64x128xf32> -> vector<64x128xf32>
    %35 = arith.addf %30, %34 : vector<64x128xf32>
    %c6 = arith.constant 6 : index
    %c0_24 = arith.constant 0 : index
    %c0_25 = arith.constant 0 : index
    %36 = vector.load %arg4[%c6, %c0_24, %c0_25] : memref<11x64x160xbf16, #tpu.memory_space<vmem>>, vector<1x64x160xbf16>
    %37 = vector.shape_cast %36 : vector<1x64x160xbf16> to vector<64x160xbf16>
    %38 = vector.extract_strided_slice %4 {offsets = [0, 6], sizes = [160, 128], strides = [1, 1]} : vector<160x138xbf16> to vector<160x128xbf16>
    %cst_26 = arith.constant dense<0.000000e+00> : vector<64x128xf32>
    %39 = tpu.matmul %37, %38, %cst_26 {dimension_numbers = #tpu.dot_dimension_numbers<[1], [0], [0], [1], [0, 0, 1, 1], [], []>} : vector<64x160xbf16>, vector<160x128xbf16>, vector<64x128xf32> -> vector<64x128xf32>
    %40 = arith.addf %35, %39 : vector<64x128xf32>
    %c7 = arith.constant 7 : index
    %c0_27 = arith.constant 0 : index
    %c0_28 = arith.constant 0 : index
    %41 = vector.load %arg4[%c7, %c0_27, %c0_28] : memref<11x64x160xbf16, #tpu.memory_space<vmem>>, vector<1x64x160xbf16>
    %42 = vector.shape_cast %41 : vector<1x64x160xbf16> to vector<64x160xbf16>
    %43 = vector.extract_strided_slice %4 {offsets = [0, 7], sizes = [160, 128], strides = [1, 1]} : vector<160x138xbf16> to vector<160x128xbf16>
    %cst_29 = arith.constant dense<0.000000e+00> : vector<64x128xf32>
    %44 = tpu.matmul %42, %43, %cst_29 {dimension_numbers = #tpu.dot_dimension_numbers<[1], [0], [0], [1], [0, 0, 1, 1], [], []>} : vector<64x160xbf16>, vector<160x128xbf16>, vector<64x128xf32> -> vector<64x128xf32>
    %45 = arith.addf %40, %44 : vector<64x128xf32>
    %c8 = arith.constant 8 : index
    %c0_30 = arith.constant 0 : index
    %c0_31 = arith.constant 0 : index
    %46 = vector.load %arg4[%c8, %c0_30, %c0_31] : memref<11x64x160xbf16, #tpu.memory_space<vmem>>, vector<1x64x160xbf16>
    %47 = vector.shape_cast %46 : vector<1x64x160xbf16> to vector<64x160xbf16>
    %48 = vector.extract_strided_slice %4 {offsets = [0, 8], sizes = [160, 128], strides = [1, 1]} : vector<160x138xbf16> to vector<160x128xbf16>
    %cst_32 = arith.constant dense<0.000000e+00> : vector<64x128xf32>
    %49 = tpu.matmul %47, %48, %cst_32 {dimension_numbers = #tpu.dot_dimension_numbers<[1], [0], [0], [1], [0, 0, 1, 1], [], []>} : vector<64x160xbf16>, vector<160x128xbf16>, vector<64x128xf32> -> vector<64x128xf32>
    %50 = arith.addf %45, %49 : vector<64x128xf32>
    %c9 = arith.constant 9 : index
    %c0_33 = arith.constant 0 : index
    %c0_34 = arith.constant 0 : index
    %51 = vector.load %arg4[%c9, %c0_33, %c0_34] : memref<11x64x160xbf16, #tpu.memory_space<vmem>>, vector<1x64x160xbf16>
    %52 = vector.shape_cast %51 : vector<1x64x160xbf16> to vector<64x160xbf16>
    %53 = vector.extract_strided_slice %4 {offsets = [0, 9], sizes = [160, 128], strides = [1, 1]} : vector<160x138xbf16> to vector<160x128xbf16>
    %cst_35 = arith.constant dense<0.000000e+00> : vector<64x128xf32>
    %54 = tpu.matmul %52, %53, %cst_35 {dimension_numbers = #tpu.dot_dimension_numbers<[1], [0], [0], [1], [0, 0, 1, 1], [], []>} : vector<64x160xbf16>, vector<160x128xbf16>, vector<64x128xf32> -> vector<64x128xf32>
    %55 = arith.addf %50, %54 : vector<64x128xf32>
    %c10 = arith.constant 10 : index
    %c0_36 = arith.constant 0 : index
    %c0_37 = arith.constant 0 : index
    %56 = vector.load %arg4[%c10, %c0_36, %c0_37] : memref<11x64x160xbf16, #tpu.memory_space<vmem>>, vector<1x64x160xbf16>
    %57 = vector.shape_cast %56 : vector<1x64x160xbf16> to vector<64x160xbf16>
    %58 = vector.extract_strided_slice %4 {offsets = [0, 10], sizes = [160, 128], strides = [1, 1]} : vector<160x138xbf16> to vector<160x128xbf16>
    %cst_38 = arith.constant dense<0.000000e+00> : vector<64x128xf32>
    %59 = tpu.matmul %57, %58, %cst_38 {dimension_numbers = #tpu.dot_dimension_numbers<[1], [0], [0], [1], [0, 0, 1, 1], [], []>} : vector<64x160xbf16>, vector<160x128xbf16>, vector<64x128xf32> -> vector<64x128xf32>
    %60 = arith.addf %55, %59 : vector<64x128xf32>
    %c0_39 = arith.constant 0 : index
    %c0_40 = arith.constant 0 : index
    %61 = vector.load %arg5[%c0_39, %c0_40] : memref<64x1xf32, #tpu.memory_space<vmem>>, vector<64x1xf32>
    %62 = vector.broadcast %61 : vector<64x1xf32> to vector<64x128xf32>
    %63 = arith.addf %60, %62 : vector<64x128xf32>
    %cst_41 = arith.constant 0.000000e+00 : f32
    %64 = vector.broadcast %cst_41 : f32 to vector<64x128xf32>
    %65 = arith.maximumf %63, %64 : vector<64x128xf32>
    %c0_42 = arith.constant 0 : index
    %c0_43 = arith.constant 0 : index
    %c0_44 = arith.constant 0 : index
    %66 = vector.load %arg6[%c0_42, %c0_43, %c0_44] : memref<1x64x128xf32, #tpu.memory_space<vmem>>, vector<1x64x128xf32>
    %67 = vector.shape_cast %66 : vector<1x64x128xf32> to vector<64x128xf32>
    %68 = vector.shape_cast %65 : vector<64x128xf32> to vector<1x64x128xf32>
    tpu.vector_store %arg6[%c0_42, %c0_43, %c0_44], %68 {strides = array<i32>} : memref<1x64x128xf32, #tpu.memory_space<vmem>>, vector<1x64x128xf32>,
    %c128_i32 = arith.constant 128 : i32
    %69 = arith.muli %arg1, %c128_i32 : i32
    %70 = tpu.iota {dimensions = array<i32: 1>} : vector<1x128xi32>
    %71 = vector.broadcast %69 : i32 to vector<1x128xi32>
    %72 = arith.addi %71, %70 : vector<1x128xi32>
    %c16_i32 = arith.constant 16 : i32
    %73 = vector.broadcast %c16_i32 : i32 to vector<1x128xi32>
    %74 = arith.cmpi slt, %72, %73 : vector<1x128xi32>
    %cst_45 = arith.constant 0.000000e+00 : f32
    %75 = vector.shape_cast %74 : vector<1x128xi1> to vector<1x128xi1>
    %76 = vector.broadcast %75 : vector<1x128xi1> to vector<64x128xi1>
    %77 = vector.broadcast %cst_45 : f32 to vector<64x128xf32>
    %78 = arith.select %76, %65, %77 : vector<64x128xi1>, vector<64x128xf32>
    %cst_46 = arith.constant dense<0.000000e+00> : vector<64xf32>
    %79 = vector.multi_reduction <add>, %78, %cst_46 [1] : vector<64x128xf32> to vector<64xf32>
    %80 = vector.shape_cast %79 : vector<64xf32> to vector<64x1xf32>
    %81 = arith.mulf %78, %78 : vector<64x128xf32>
    %cst_47 = arith.constant dense<0.000000e+00> : vector<64xf32>
    %82 = vector.multi_reduction <add>, %81, %cst_47 [1] : vector<64x128xf32> to vector<64xf32>
    %83 = vector.shape_cast %82 : vector<64xf32> to vector<64x1xf32>
    %84 = tpu.concatenate %80, %83 in 1 : vector<64x1xf32>, vector<64x1xf32> -> vector<64x2xf32>
    %c0_48 = arith.constant 0 : index
    %c0_49 = arith.constant 0 : index
    %c0_50 = arith.constant 0 : index
    %c0_51 = arith.constant 0 : index
    %85 = vector.load %arg7[%c0_48, %c0_49, %c0_50, %c0_51] : memref<1x1x64x2xf32, #tpu.memory_space<vmem>>, vector<1x1x64x2xf32>
    %86 = vector.shape_cast %85 : vector<1x1x64x2xf32> to vector<64x2xf32>
    %87 = vector.shape_cast %84 : vector<64x2xf32> to vector<1x1x64x2xf32>
    tpu.vector_store %arg7[%c0_48, %c0_49, %c0_50, %c0_51], %87 {strides = array<i32>} : memref<1x1x64x2xf32, #tpu.memory_space<vmem>>, vector<1x1x64x2xf32>,
    return
  }
  func.func @transform_0(%arg0: i32, %arg1: i32) -> (i32, i32, i32) {
    %c0_i32 = arith.constant 0 : i32
    %c0_i32_0 = arith.constant 0 : i32
    return %arg0, %c0_i32, %arg1 : i32, i32, i32
  }
  func.func @transform_1(%arg0: i32, %arg1: i32) -> (i32, i32, i32) {
    %c1_i32 = arith.constant 1 : i32
    %0 = arith.addi %arg1, %c1_i32 : i32
    %c1_i32_0 = arith.constant 1 : i32
    %1 = arith.muli %0, %c1_i32_0 : i32
    %c0_i32 = arith.constant 0 : i32
    %c0_i32_1 = arith.constant 0 : i32
    return %arg0, %c0_i32, %1 : i32, i32, i32
  }
  func.func @transform_2(%arg0: i32, %arg1: i32) -> (i32, i32, i32) {
    %c0_i32 = arith.constant 0 : i32
    %c0_i32_0 = arith.constant 0 : i32
    %c0_i32_1 = arith.constant 0 : i32
    %c0_i32_2 = arith.constant 0 : i32
    return %c0_i32, %c0_i32_0, %c0_i32_1 : i32, i32, i32
  }
  func.func @transform_3(%arg0: i32, %arg1: i32) -> (i32, i32) {
    %c0_i32 = arith.constant 0 : i32
    %c0_i32_0 = arith.constant 0 : i32
    %c0_i32_1 = arith.constant 0 : i32
    return %c0_i32, %c0_i32_0 : i32, i32
  }
  func.func @transform_4(%arg0: i32, %arg1: i32) -> (i32, i32, i32) {
    %c0_i32 = arith.constant 0 : i32
    %c0_i32_0 = arith.constant 0 : i32
    return %arg0, %c0_i32, %arg1 : i32, i32, i32
  }
  func.func @transform_5(%arg0: i32, %arg1: i32) -> (i32, i32, i32, i32) {
    %c0_i32 = arith.constant 0 : i32
    %c0_i32_0 = arith.constant 0 : i32
    %c0_i32_1 = arith.constant 0 : i32
    return %arg0, %arg1, %c0_i32, %c0_i32_0 : i32, i32, i32, i32
  }
}

module attributes {stable_mosaic.version = 11 : i64} {
  func.func @_bn_apply_kernel(%arg0: i32, %arg1: i32, %arg2: memref<1x64x128xf32, #tpu.memory_space<vmem>>, %arg3: memref<64x1xf32, #tpu.memory_space<vmem>>, %arg4: memref<64x1xf32, #tpu.memory_space<vmem>>, %arg5: memref<1x64x128xf32, #tpu.memory_space<vmem>>) attributes {dimension_semantics = [#tpu.dimension_semantics<parallel>, #tpu.dimension_semantics<parallel>], iteration_bounds = array<i64: 2, 1>, scalar_prefetch = 0 : i64, scratch_operands = 0 : i64, tpu.core_type = #tpu.core_type<tc>, window_params = [{transform_indices = @transform_0, window_bounds = array<i64: 1, 64, 128>}, {pipeline_mode = #tpu.pipeline_mode<synchronous>, transform_indices = @transform_1, window_bounds = array<i64: 64, 1>}, {pipeline_mode = #tpu.pipeline_mode<synchronous>, transform_indices = @transform_2, window_bounds = array<i64: 64, 1>}, {transform_indices = @transform_3, window_bounds = array<i64: 1, 64, 128>}]} {
    %c0 = arith.constant 0 : index
    %c0_0 = arith.constant 0 : index
    %c0_1 = arith.constant 0 : index
    %0 = vector.load %arg2[%c0, %c0_0, %c0_1] : memref<1x64x128xf32, #tpu.memory_space<vmem>>, vector<1x64x128xf32>
    %1 = vector.shape_cast %0 : vector<1x64x128xf32> to vector<64x128xf32>
    %c0_2 = arith.constant 0 : index
    %c0_3 = arith.constant 0 : index
    %2 = vector.load %arg3[%c0_2, %c0_3] : memref<64x1xf32, #tpu.memory_space<vmem>>, vector<64x1xf32>
    %3 = vector.broadcast %2 : vector<64x1xf32> to vector<64x128xf32>
    %4 = arith.mulf %1, %3 : vector<64x128xf32>
    %c0_4 = arith.constant 0 : index
    %c0_5 = arith.constant 0 : index
    %5 = vector.load %arg4[%c0_4, %c0_5] : memref<64x1xf32, #tpu.memory_space<vmem>>, vector<64x1xf32>
    %6 = vector.broadcast %5 : vector<64x1xf32> to vector<64x128xf32>
    %7 = arith.addf %4, %6 : vector<64x128xf32>
    %c0_6 = arith.constant 0 : index
    %c0_7 = arith.constant 0 : index
    %c0_8 = arith.constant 0 : index
    %8 = vector.load %arg5[%c0_6, %c0_7, %c0_8] : memref<1x64x128xf32, #tpu.memory_space<vmem>>, vector<1x64x128xf32>
    %9 = vector.shape_cast %8 : vector<1x64x128xf32> to vector<64x128xf32>
    %10 = vector.shape_cast %7 : vector<64x128xf32> to vector<1x64x128xf32>
    tpu.vector_store %arg5[%c0_6, %c0_7, %c0_8], %10 {strides = array<i32>} : memref<1x64x128xf32, #tpu.memory_space<vmem>>, vector<1x64x128xf32>,
    return
  }
  func.func @transform_0(%arg0: i32, %arg1: i32) -> (i32, i32, i32) {
    %c0_i32 = arith.constant 0 : i32
    %c0_i32_0 = arith.constant 0 : i32
    return %arg0, %c0_i32, %arg1 : i32, i32, i32
  }
  func.func @transform_1(%arg0: i32, %arg1: i32) -> (i32, i32) {
    %c0_i32 = arith.constant 0 : i32
    %c0_i32_0 = arith.constant 0 : i32
    %c0_i32_1 = arith.constant 0 : i32
    return %c0_i32, %c0_i32_0 : i32, i32
  }
  func.func @transform_2(%arg0: i32, %arg1: i32) -> (i32, i32) {
    %c0_i32 = arith.constant 0 : i32
    %c0_i32_0 = arith.constant 0 : i32
    %c0_i32_1 = arith.constant 0 : i32
    return %c0_i32, %c0_i32_0 : i32, i32
  }
  func.func @transform_3(%arg0: i32, %arg1: i32) -> (i32, i32, i32) {
    %c0_i32 = arith.constant 0 : i32
    %c0_i32_0 = arith.constant 0 : i32
    return %arg0, %c0_i32, %arg1 : i32, i32, i32
  }
}

</mosaic_0001>

<llo_original>
// kernel: conv_block_forward.3
$region0: #{conv_block_forward.3}
  #allocation0 [shape = 'u32[]', space=smem, size = 0x4, offset = 0x4, fixed_abs, tag = 'smem constant byte address 0x4 - core index']
  #allocation1 [shape = 'u32[144,128]{1,0:T(1,128)}', space=vmem, size = 0x12000, scoped, tag = 'internal scratch']
  %s0 = inlined_call_operand.vmem [shape: f32[2,64,128], index: 0, kind: input, shape index: {}, may-alias: {0,3}]
  %s1 = inlined_call_operand.vmem [shape: f32[64,1], index: 1, kind: input, shape index: {}]
  %s2 = inlined_call_operand.vmem [shape: f32[64,1], index: 2, kind: input, shape index: {}]
  %s3 = inlined_call_operand.vmem [shape: f32[2,64,128], index: 3, kind: output, shape index: {}, may-alias: {0,3}]
  %s4 = sld [smem:[#allocation0]]
  $region45: #{conv_block_forward.3} parent=0
    _
  %s6 = ssub.s32 1, %s4
  %s7 = scalar_select 0, %s6, %s4
  loop: start=0, step=1, limit=4
  $region2: #{conv_block_forward.3} parent=0 // loop_pre_header
    _
  $region3: #{conv_block_forward.3} parent=0 // loop_header
    %s9 = sphi 0, %s13
    %p10 = scmp.ge.s32.totalorder %s9, 4
    %s16 = sphi 0, %s28
    %s17 = sphi 0, %s24
    %s18 = sphi 0, %s16
    %s19 = sphi 0, %s17
    %s20 = sphi 0, %s18
    %s21 = sphi 0, %s19
    %s33 = sphi 0, %s35
    %s36 = sphi 0, %s33
    %s37 = sphi 0, %s36
    %s53 = sphi 0, %s37
    %s57 = sphi 0, %s57
    %s59 = sphi 0, %s57
    %s60 = sphi 0, %s59
    %s74 = sphi 0, %s60
    %s78 = sphi 0, %s78
    %s80 = sphi 0, %s78
    %s81 = sphi 0, %s80
    %s95 = sphi 0, %s81
    %s103 = sphi 0, %s105
    %s106 = sphi 0, %s103
    %s107 = sphi 0, %s106
    %s123 = sphi 0, %s107
  $region4: #{conv_block_forward.3} parent=0 // loop_header_branch
    %12 = sbr.rel (%p10) target = $region8
  $region5: #{conv_block_forward.3} parent=0 // loop_body
    %s14 = ssub.s32 %s9, 1
    %s15 = ssub.s32 %s9, 2
    %s22 = sadd.s32 1, %s17
    %p23 = scmp.ge.s32.totalorder %s22, 1
    %s24 = scalar_select %p23, 0, %s22
    %s25 = sadd.s32 1, %s16
    %s26 = scalar_select %p23, %s25, %s16
    %p27 = scmp.ge.s32.totalorder %s26, 2
    %s28 = scalar_select %p27, 0, %s26
    %s29 = ssub.s32 %s16, %s28
    %s30 = ssub.s32 %s17, %s24
    %s31 = sor.u32 %s29, %s30
    %p32 = scmp.eq.s32.totalorder %s31, 0
    %s34 = sadd.s32 %s33, 1
    %s35 = scalar_select %p32, %s33, %s34
    %p38 = pneg %p32
    %p39 = scmp.eq.s32.totalorder %s9, 1
    %p40 = por %p38, %p39
    %p41 = scmp.ne.s32.totalorder %s33, %s36
    %p42 = scmp.eq.s32.totalorder %s9, 0
    %p43 = por %p41, %p42
    %p44 = scmp.ne.s32.totalorder %s33, %s36
    %p45 = scmp.eq.s32.totalorder %s14, 1
    %p46 = por %p44, %p45
    %p47 = scmp.ne.s32.totalorder %s36, %s37
    %p48 = scmp.eq.s32.totalorder %s14, 0
    %p49 = por %p47, %p48
    %p50 = scmp.ne.s32.totalorder %s36, %s37
    %p51 = scmp.eq.s32.totalorder %s15, 1
    %p52 = por %p50, %p51
    %p54 = scmp.ne.s32.totalorder %s37, %s53
    %p55 = scmp.eq.s32.totalorder %s15, 0
    %p56 = por %p54, %p55
    %s58 = sadd.s32 %s57, 1
    %p61 = scmp.eq.s32.totalorder %s9, 1
    %p62 = scmp.ne.s32.totalorder %s57, %s59
    %p63 = scmp.eq.s32.totalorder %s9, 0
    %p64 = por %p62, %p63
    %p65 = scmp.ne.s32.totalorder %s57, %s59
    %p66 = scmp.eq.s32.totalorder %s14, 1
    %p67 = por %p65, %p66
    %p68 = scmp.ne.s32.totalorder %s59, %s60
    %p69 = scmp.eq.s32.totalorder %s14, 0
    %p70 = por %p68, %p69
    %p71 = scmp.ne.s32.totalorder %s59, %s60
    %p72 = scmp.eq.s32.totalorder %s15, 1
    %p73 = por %p71, %p72
    %p75 = scmp.ne.s32.totalorder %s60, %s74
    %p76 = scmp.eq.s32.totalorder %s15, 0
    %p77 = por %p75, %p76
    %s79 = sadd.s32 %s78, 1
    %p82 = scmp.eq.s32.totalorder %s9, 1
    %p83 = scmp.ne.s32.totalorder %s78, %s80
    %p84 = scmp.eq.s32.totalorder %s9, 0
    %p85 = por %p83, %p84
    %p86 = scmp.ne.s32.totalorder %s78, %s80
    %p87 = scmp.eq.s32.totalorder %s14, 1
    %p88 = por %p86, %p87
    %p89 = scmp.ne.s32.totalorder %s80, %s81
    %p90 = scmp.eq.s32.totalorder %s14, 0
    %p91 = por %p89, %p90
    %p92 = scmp.ne.s32.totalorder %s80, %s81
    %p93 = scmp.eq.s32.totalorder %s15, 1
    %p94 = por %p92, %p93
    %p96 = scmp.ne.s32.totalorder %s81, %s95
    %p97 = scmp.eq.s32.totalorder %s15, 0
    %p98 = por %p96, %p97
    %s99 = ssub.s32 %s16, %s28
    %s100 = ssub.s32 %s17, %s24
    %s101 = sor.u32 %s99, %s100
    %p102 = scmp.eq.s32.totalorder %s101, 0
    %s104 = sadd.s32 %s103, 1
    %s105 = scalar_select %p102, %s103, %s104
    %p108 = pneg %p102
    %p109 = scmp.eq.s32.totalorder %s9, 1
    %p110 = por %p108, %p109
    %p111 = scmp.ne.s32.totalorder %s103, %s106
    %p112 = scmp.eq.s32.totalorder %s9, 0
    %p113 = por %p111, %p112
    %p114 = scmp.ne.s32.totalorder %s103, %s106
    %p115 = scmp.eq.s32.totalorder %s14, 1
    %p116 = por %p114, %p115
    %p117 = scmp.ne.s32.totalorder %s106, %s107
    %p118 = scmp.eq.s32.totalorder %s14, 0
    %p119 = por %p117, %p118
    %p120 = scmp.ne.s32.totalorder %s106, %s107
    %p121 = scmp.eq.s32.totalorder %s15, 1
    %p122 = por %p120, %p121
    %p124 = scmp.ne.s32.totalorder %s107, %s123
    %p125 = scmp.eq.s32.totalorder %s15, 0
    %p126 = por %p124, %p125
    %p127 = scmp.le.s32.totalorder 1, %s9
    %p128 = scmp.lt.s32.totalorder %s9, 3
    %p129 = pnand %p127, %p128
    %p130 = pneg %p129
    // Predicated region
    $region9: #{conv_block_forward.3} parent=5 // pred_check
      _
    $region10: #{conv_block_forward.3} parent=5 // pred_check_branch
      %132 = sbr.rel (%p129) target = $region12
    $region11: #{conv_block_forward.3} parent=5 // pred_region
      %s133 = ssub.s32 %s9, 1
      // Predicated region
      $region13: #{conv_block_forward.3} parent=11 // pred_check
        %p134 = pneg %p70
      $region14: #{conv_block_forward.3} parent=11 // pred_check_branch
        %136 = sbr.rel (%p134) target = $region16
      $region15: #{conv_block_forward.3} parent=11 // pred_region
        _
      $region16: #{conv_block_forward.3} parent=11 // pred_fallthru
        _
      // Predicated region
      $region17: #{conv_block_forward.3} parent=11 // pred_check
        %p137 = pneg %p91
      $region18: #{conv_block_forward.3} parent=11 // pred_check_branch
        %139 = sbr.rel (%p137) target = $region20
      $region19: #{conv_block_forward.3} parent=11 // pred_region
        _
      $region20: #{conv_block_forward.3} parent=11 // pred_fallthru
        _
    $region12: #{conv_block_forward.3} parent=5 // pred_fallthru
      _
    %p140 = scmp.lt.s32.totalorder %s9, 2
    // Predicated region
    $region21: #{conv_block_forward.3} parent=5 // pred_check
      %p141 = pneg %p140
    $region22: #{conv_block_forward.3} parent=5 // pred_check_branch
      %143 = sbr.rel (%p141) target = $region24
    $region23: #{conv_block_forward.3} parent=5 // pred_region
      // Predicated region
      $region25: #{conv_block_forward.3} parent=23 // pred_check
        %p144 = pneg %p43
      $region26: #{conv_block_forward.3} parent=23 // pred_check_branch
        %146 = sbr.rel (%p144) target = $region28
      $region27: #{conv_block_forward.3} parent=23 // pred_region
        %p147 = scmp.lt.s32.totalorder %s16, 1
        %s148 = scalar_select %p147, %s16, 1
        %p149 = scmp.lt.s32.totalorder %s17, 0
        %s150 = scalar_select %p149, %s17, 0
        %s151 = smul.addr %s148, 8
        %s152 = sadd.s32 %s150, %s151
        %s153 = smul.addr %s152, 8
        %s154 = scalar_lea.vmem %s0, %s153
      $region28: #{conv_block_forward.3} parent=23 // pred_fallthru
        _
    $region24: #{conv_block_forward.3} parent=5 // pred_fallthru
      _
    %p155 = scmp.le.s32.totalorder 1, %s9
    %p156 = scmp.lt.s32.totalorder %s9, 3
    %p157 = pnand %p155, %p156
    %p158 = pneg %p157
    // Predicated region
    $region29: #{conv_block_forward.3} parent=5 // pred_check
      _
    $region30: #{conv_block_forward.3} parent=5 // pred_check_branch
      %160 = sbr.rel (%p157) target = $region32
    $region31: #{conv_block_forward.3} parent=5 // pred_region
      %s161 = ssub.s32 %s9, 1
      %p162 = scmp.lt.s32.totalorder %s18, 1
      %s163 = scalar_select %p162, %s18, 1
      %p164 = scmp.lt.s32.totalorder %s19, 0
      %s165 = scalar_select %p164, %s19, 0
      %s166 = smul.addr %s163, 8
      %s167 = sadd.s32 %s165, %s166
      %s168 = smul.addr %s167, 8
      %s169 = scalar_lea.vmem %s0, %s168
      %p170 = pneg %p49
      %p171 = pneg %p46
      %p172 = pneg %p70
      %p173 = pneg %p67
      %p174 = pneg %p91
      %p175 = pneg %p88
      %p176 = pneg %p119
      %p177 = pneg %p116
      %p178 = scmp.lt.s32.totalorder %s18, 1
      %s179 = scalar_select %p178, %s18, 1
      %p180 = scmp.lt.s32.totalorder %s19, 0
      %s181 = scalar_select %p180, %s19, 0
      %s182 = smul.addr %s179, 8
      %s183 = sadd.s32 %s181, %s182
      %s184 = smul.addr %s183, 8
      %s185 = scalar_lea.vmem %s3, %s184
      %p186 = scmp.lt.s32.totalorder %s18, 1
      %s187 = scalar_select %p186, %s18, 1
      %p188 = scmp.lt.s32.totalorder %s19, 0
      %s189 = scalar_select %p188, %s19, 0
      %s190 = smul.addr %s187, 8
      %s191 = sadd.s32 %s189, %s190
      %s192 = smul.addr %s191, 8
      %s193 = scalar_lea.vmem %s0, %s192
      %p194 = scmp.lt.s32.totalorder %s18, 1
      %s195 = scalar_select %p194, %s18, 1
      %p196 = scmp.lt.s32.totalorder %s19, 0
      %s197 = scalar_select %p196, %s19, 0
      %s198 = smul.addr %s195, 8
      %s199 = sadd.s32 %s197, %s198
      %s200 = smul.addr %s199, 8
      %s201 = scalar_lea.vmem %s3, %s200
      %v202 = vld [vmem:[%s193] sm:$0xff]
      %v203 = vld [vmem:[%s193 + $0x8] sm:$0xff]
      %v204 = vld [vmem:[%s193 + $0x10] sm:$0xff]
      %v205 = vld [vmem:[%s193 + $0x18] sm:$0xff]
      %v206 = vld [vmem:[%s193 + $0x20] sm:$0xff]
      %v207 = vld [vmem:[%s193 + $0x28] sm:$0xff]
      %v208 = vld [vmem:[%s193 + $0x30] sm:$0xff]
      %v209 = vld [vmem:[%s193 + $0x38] sm:$0xff]
      %v210 = vld [vmem:[%s1] sm:$0xff]
      %v211 = vld [vmem:[%s1 + $0x8] sm:$0xff]
      %v212 = vld [vmem:[%s1 + $0x10] sm:$0xff]
      %v213 = vld [vmem:[%s1 + $0x18] sm:$0xff]
      %v214 = vld [vmem:[%s1 + $0x20] sm:$0xff]
      %v215 = vld [vmem:[%s1 + $0x28] sm:$0xff]
      %v216 = vld [vmem:[%s1 + $0x30] sm:$0xff]
      %v217 = vld [vmem:[%s1 + $0x38] sm:$0xff]
      %219 = vset.pattern.permute.xlu0 0
      %220 = vperm.xlu0 %219, %v210
      %v221 = vpop.permute.xlu0 %220
      %224 = vset.pattern.permute.xlu0 0
      %225 = vperm.xlu0 %224, %v211
      %v226 = vpop.permute.xlu0 %225
      %229 = vset.pattern.permute.xlu0 0
      %230 = vperm.xlu0 %229, %v212
      %v231 = vpop.permute.xlu0 %230
      %234 = vset.pattern.permute.xlu0 0
      %235 = vperm.xlu0 %234, %v213
      %v236 = vpop.permute.xlu0 %235
      %239 = vset.pattern.permute.xlu0 0
      %240 = vperm.xlu0 %239, %v214
      %v241 = vpop.permute.xlu0 %240
      %244 = vset.pattern.permute.xlu0 0
      %245 = vperm.xlu0 %244, %v215
      %v246 = vpop.permute.xlu0 %245
      %249 = vset.pattern.permute.xlu0 0
      %250 = vperm.xlu0 %249, %v216
      %v251 = vpop.permute.xlu0 %250
      %254 = vset.pattern.permute.xlu0 0
      %255 = vperm.xlu0 %254, %v217
      %v256 = vpop.permute.xlu0 %255
      %v258 = vmul.f32 %v202, %v221
      %v259 = vmul.f32 %v203, %v226
      %v260 = vmul.f32 %v204, %v231
      %v261 = vmul.f32 %v205, %v236
      %v262 = vmul.f32 %v206, %v241
      %v263 = vmul.f32 %v207, %v246
      %v264 = vmul.f32 %v208, %v251
      %v265 = vmul.f32 %v209, %v256
      %v266 = vld [vmem:[%s2] sm:$0xff]
      %v267 = vld [vmem:[%s2 + $0x8] sm:$0xff]
      %v268 = vld [vmem:[%s2 + $0x10] sm:$0xff]
      %v269 = vld [vmem:[%s2 + $0x18] sm:$0xff]
      %v270 = vld [vmem:[%s2 + $0x20] sm:$0xff]
      %v271 = vld [vmem:[%s2 + $0x28] sm:$0xff]
      %v272 = vld [vmem:[%s2 + $0x30] sm:$0xff]
      %v273 = vld [vmem:[%s2 + $0x38] sm:$0xff]
      %275 = vset.pattern.permute.xlu0 0
      %276 = vperm.xlu0 %275, %v266
      %v277 = vpop.permute.xlu0 %276
      %280 = vset.pattern.permute.xlu0 0
      %281 = vperm.xlu0 %280, %v267
      %v282 = vpop.permute.xlu0 %281
      %285 = vset.pattern.permute.xlu0 0
      %286 = vperm.xlu0 %285, %v268
      %v287 = vpop.permute.xlu0 %286
      %290 = vset.pattern.permute.xlu0 0
      %291 = vperm.xlu0 %290, %v269
      %v292 = vpop.permute.xlu0 %291
      %295 = vset.pattern.permute.xlu0 0
      %296 = vperm.xlu0 %295, %v270
      %v297 = vpop.permute.xlu0 %296
      %300 = vset.pattern.permute.xlu0 0
      %301 = vperm.xlu0 %300, %v271
      %v302 = vpop.permute.xlu0 %301
      %305 = vset.pattern.permute.xlu0 0
      %306 = vperm.xlu0 %305, %v272
      %v307 = vpop.permute.xlu0 %306
      %310 = vset.pattern.permute.xlu0 0
      %311 = vperm.xlu0 %310, %v273
      %v312 = vpop.permute.xlu0 %311
      %v314 = vadd.f32 %v258, %v277
      %v315 = vadd.f32 %v259, %v282
      %v316 = vadd.f32 %v260, %v287
      %v317 = vadd.f32 %v261, %v292
      %v318 = vadd.f32 %v262, %v297
      %v319 = vadd.f32 %v263, %v302
      %v320 = vadd.f32 %v264, %v307
      %v321 = vadd.f32 %v265, %v312
      %322 = vst [vmem:[%s201] sm:$0xff] %v314
      %323 = vst [vmem:[%s201 + $0x8] sm:$0xff] %v315
      %324 = vst [vmem:[%s201 + $0x10] sm:$0xff] %v316
      %325 = vst [vmem:[%s201 + $0x18] sm:$0xff] %v317
      %326 = vst [vmem:[%s201 + $0x20] sm:$0xff] %v318
      %327 = vst [vmem:[%s201 + $0x28] sm:$0xff] %v319
      %328 = vst [vmem:[%s201 + $0x30] sm:$0xff] %v320
      %329 = vst [vmem:[%s201 + $0x38] sm:$0xff] %v321
      %p330 = scmp.lt.s32.totalorder %s18, 1
      %s331 = scalar_select %p330, %s18, 1
      %p332 = scmp.lt.s32.totalorder %s19, 0
      %s333 = scalar_select %p332, %s19, 0
      %s334 = smul.addr %s331, 8
      %s335 = sadd.s32 %s333, %s334
      %s336 = smul.addr %s335, 8
      %s337 = scalar_lea.vmem %s3, %s336
      // Predicated region
      $region33: #{conv_block_forward.3} parent=31 // pred_check
        %p338 = pneg %p116
      $region34: #{conv_block_forward.3} parent=31 // pred_check_branch
        %340 = sbr.rel (%p338) target = $region36
      $region35: #{conv_block_forward.3} parent=31 // pred_region
        _
      $region36: #{conv_block_forward.3} parent=31 // pred_fallthru
        _
    $region32: #{conv_block_forward.3} parent=5 // pred_fallthru
      _
    %p341 = scmp.le.s32.totalorder 2, %s9
    // Predicated region
    $region37: #{conv_block_forward.3} parent=5 // pred_check
      %p342 = pneg %p341
    $region38: #{conv_block_forward.3} parent=5 // pred_check_branch
      %344 = sbr.rel (%p342) target = $region40
    $region39: #{conv_block_forward.3} parent=5 // pred_region
      %s345 = ssub.s32 %s9, 2
      // Predicated region
      $region41: #{conv_block_forward.3} parent=39 // pred_check
        %p346 = pneg %p122
      $region42: #{conv_block_forward.3} parent=39 // pred_check_branch
        %348 = sbr.rel (%p346) target = $region44
      $region43: #{conv_block_forward.3} parent=39 // pred_region
        %p349 = scmp.lt.s32.totalorder %s20, 1
        %s350 = scalar_select %p349, %s20, 1
        %p351 = scmp.lt.s32.totalorder %s21, 0
        %s352 = scalar_select %p351, %s21, 0
        %s353 = smul.addr %s350, 8
        %s354 = sadd.s32 %s352, %s353
        %s355 = smul.addr %s354, 8
        %s356 = scalar_lea.vmem %s3, %s355
      $region44: #{conv_block_forward.3} parent=39 // pred_fallthru
        _
    $region40: #{conv_block_forward.3} parent=5 // pred_fallthru
      _
  $region6: #{conv_block_forward.3} parent=0 // loop_footer
    %s13 = sadd.s32 1, %s9
  $region7: #{conv_block_forward.3} parent=0 // loop_footer_branch
    %8 = sbr.rel target = $region3
  $region8: #{conv_block_forward.3} parent=0 // loop_exit
    _

// kernel: conv_block_forward.2
$region0: #{conv_block_forward.2}
  #allocation0 [shape = 'u32[]', space=smem, size = 0x4, offset = 0x4, fixed_abs, tag = 'smem constant byte address 0x4 - core index']
  #allocation1 [shape = 'u32[144,128]{1,0:T(1,128)}', space=vmem, size = 0x12000, scoped, tag = 'internal scratch']
  %s0 = inlined_call_operand.vmem [shape: bf16[2,160,256], index: 0, kind: input, shape index: {}, may-alias: {0,1}]
  %s1 = inlined_call_operand.vmem [shape: bf16[2,160,256], index: 1, kind: input, shape index: {}, may-alias: {0,1}]
  %s2 = inlined_call_operand.vmem [shape: bf16[11,64,160], index: 2, kind: input, shape index: {}]
  %s3 = inlined_call_operand.vmem [shape: f32[64,1], index: 3, kind: input, shape index: {}]
  %s4 = inlined_call_operand.vmem [shape: f32[2,64,128], index: 4, kind: output, shape index: {0}]
  %s5 = inlined_call_operand.vmem [shape: f32[2,1,64,2], index: 5, kind: output, shape index: {1}]
  %6 = xla_tuple %s4, %s5
  %s7 = sld [smem:[#allocation0]]
  $region139: #{conv_block_forward.2} parent=0
    _
  %s9 = ssub.s32 1, %s7
  %s10 = scalar_select 0, %s9, %s7
  $region1: #{conv_block_forward.2} parent=0
    #allocation2 [shape = 'u8[81920]{0}', space=vmem, size = 0x14000, scoped, tag = 'input window, operand 0']
    #allocation3 [shape = 'u8[81920]{0}', space=vmem, size = 0x14000, scoped, tag = 'input window, operand 1']
    loop: start=0, step=1, limit=4
    $region2: #{conv_block_forward.2} parent=1 // loop_pre_header
      _
    $region3: #{conv_block_forward.2} parent=1 // loop_header
      %s12 = sphi 0, %s16
      %p13 = scmp.ge.s32.totalorder %s12, 4
      %s19 = sphi 0, %s31
      %s20 = sphi 0, %s27
      %s21 = sphi 0, %s19
      %s22 = sphi 0, %s20
      %s23 = sphi 0, %s21
      %s24 = sphi 0, %s22
      %s36 = sphi 0, %s38
      %s39 = sphi 0, %s36
      %s40 = sphi 0, %s39
      %s56 = sphi 0, %s40
      %s66 = sphi 0, %s68
      %s69 = sphi 0, %s66
      %s70 = sphi 0, %s69
      %s86 = sphi 0, %s70
      %s90 = sphi 0, %s90
      %s92 = sphi 0, %s90
      %s93 = sphi 0, %s92
      %s107 = sphi 0, %s93
      %s111 = sphi 0, %s111
      %s113 = sphi 0, %s111
      %s114 = sphi 0, %s113
      %s128 = sphi 0, %s114
      %s136 = sphi 0, %s138
      %s139 = sphi 0, %s136
      %s140 = sphi 0, %s139
      %s156 = sphi 0, %s140
      %s164 = sphi 0, %s166
      %s167 = sphi 0, %s164
      %s168 = sphi 0, %s167
      %s184 = sphi 0, %s168
    $region4: #{conv_block_forward.2} parent=1 // loop_header_branch
      %15 = sbr.rel (%p13) target = $region8
    $region5: #{conv_block_forward.2} parent=1 // loop_body
      %s17 = ssub.s32 %s12, 1
      %s18 = ssub.s32 %s12, 2
      %s25 = sadd.s32 1, %s20
      %p26 = scmp.ge.s32.totalorder %s25, 1
      %s27 = scalar_select %p26, 0, %s25
      %s28 = sadd.s32 1, %s19
      %s29 = scalar_select %p26, %s28, %s19
      %p30 = scmp.ge.s32.totalorder %s29, 2
      %s31 = scalar_select %p30, 0, %s29
      %s32 = ssub.s32 %s19, %s31
      %s33 = ssub.s32 %s20, %s27
      %s34 = sor.u32 %s32, %s33
      %p35 = scmp.eq.s32.totalorder %s34, 0
      %s37 = sadd.s32 %s36, 1
      %s38 = scalar_select %p35, %s36, %s37
      %p41 = pneg %p35
      %p42 = scmp.eq.s32.totalorder %s12, 1
      %p43 = por %p41, %p42
      %p44 = scmp.ne.s32.totalorder %s36, %s39
      %p45 = scmp.eq.s32.totalorder %s12, 0
      %p46 = por %p44, %p45
      %p47 = scmp.ne.s32.totalorder %s36, %s39
      %p48 = scmp.eq.s32.totalorder %s17, 1
      %p49 = por %p47, %p48
      %p50 = scmp.ne.s32.totalorder %s39, %s40
      %p51 = scmp.eq.s32.totalorder %s17, 0
      %p52 = por %p50, %p51
      %p53 = scmp.ne.s32.totalorder %s39, %s40
      %p54 = scmp.eq.s32.totalorder %s18, 1
      %p55 = por %p53, %p54
      %p57 = scmp.ne.s32.totalorder %s40, %s56
      %p58 = scmp.eq.s32.totalorder %s18, 0
      %p59 = por %p57, %p58
      %s60 = sadd.s32 %s20, 1
      %s61 = sadd.s32 %s27, 1
      %s62 = ssub.s32 %s19, %s31
      %s63 = ssub.s32 %s60, %s61
      %s64 = sor.u32 %s62, %s63
      %p65 = scmp.eq.s32.totalorder %s64, 0
      %s67 = sadd.s32 %s66, 1
      %s68 = scalar_select %p65, %s66, %s67
      %p71 = pneg %p65
      %p72 = scmp.eq.s32.totalorder %s12, 1
      %p73 = por %p71, %p72
      %p74 = scmp.ne.s32.totalorder %s66, %s69
      %p75 = scmp.eq.s32.totalorder %s12, 0
      %p76 = por %p74, %p75
      %p77 = scmp.ne.s32.totalorder %s66, %s69
      %p78 = scmp.eq.s32.totalorder %s17, 1
      %p79 = por %p77, %p78
      %p80 = scmp.ne.s32.totalorder %s69, %s70
      %p81 = scmp.eq.s32.totalorder %s17, 0
      %p82 = por %p80, %p81
      %p83 = scmp.ne.s32.totalorder %s69, %s70
      %p84 = scmp.eq.s32.totalorder %s18, 1
      %p85 = por %p83, %p84
      %p87 = scmp.ne.s32.totalorder %s70, %s86
      %p88 = scmp.eq.s32.totalorder %s18, 0
      %p89 = por %p87, %p88
      %s91 = sadd.s32 %s90, 1
      %p94 = scmp.eq.s32.totalorder %s12, 1
      %p95 = scmp.ne.s32.totalorder %s90, %s92
      %p96 = scmp.eq.s32.totalorder %s12, 0
      %p97 = por %p95, %p96
      %p98 = scmp.ne.s32.totalorder %s90, %s92
      %p99 = scmp.eq.s32.totalorder %s17, 1
      %p100 = por %p98, %p99
      %p101 = scmp.ne.s32.totalorder %s92, %s93
      %p102 = scmp.eq.s32.totalorder %s17, 0
      %p103 = por %p101, %p102
      %p104 = scmp.ne.s32.totalorder %s92, %s93
      %p105 = scmp.eq.s32.totalorder %s18, 1
      %p106 = por %p104, %p105
      %p108 = scmp.ne.s32.totalorder %s93, %s107
      %p109 = scmp.eq.s32.totalorder %s18, 0
      %p110 = por %p108, %p109
      %s112 = sadd.s32 %s111, 1
      %p115 = scmp.eq.s32.totalorder %s12, 1
      %p116 = scmp.ne.s32.totalorder %s111, %s113
      %p117 = scmp.eq.s32.totalorder %s12, 0
      %p118 = por %p116, %p117
      %p119 = scmp.ne.s32.totalorder %s111, %s113
      %p120 = scmp.eq.s32.totalorder %s17, 1
      %p121 = por %p119, %p120
      %p122 = scmp.ne.s32.totalorder %s113, %s114
      %p123 = scmp.eq.s32.totalorder %s17, 0
      %p124 = por %p122, %p123
      %p125 = scmp.ne.s32.totalorder %s113, %s114
      %p126 = scmp.eq.s32.totalorder %s18, 1
      %p127 = por %p125, %p126
      %p129 = scmp.ne.s32.totalorder %s114, %s128
      %p130 = scmp.eq.s32.totalorder %s18, 0
      %p131 = por %p129, %p130
      %s132 = ssub.s32 %s19, %s31
      %s133 = ssub.s32 %s20, %s27
      %s134 = sor.u32 %s132, %s133
      %p135 = scmp.eq.s32.totalorder %s134, 0
      %s137 = sadd.s32 %s136, 1
      %s138 = scalar_select %p135, %s136, %s137
      %p141 = pneg %p135
      %p142 = scmp.eq.s32.totalorder %s12, 1
      %p143 = por %p141, %p142
      %p144 = scmp.ne.s32.totalorder %s136, %s139
      %p145 = scmp.eq.s32.totalorder %s12, 0
      %p146 = por %p144, %p145
      %p147 = scmp.ne.s32.totalorder %s136, %s139
      %p148 = scmp.eq.s32.totalorder %s17, 1
      %p149 = por %p147, %p148
      %p150 = scmp.ne.s32.totalorder %s139, %s140
      %p151 = scmp.eq.s32.totalorder %s17, 0
      %p152 = por %p150, %p151
      %p153 = scmp.ne.s32.totalorder %s139, %s140
      %p154 = scmp.eq.s32.totalorder %s18, 1
      %p155 = por %p153, %p154
      %p157 = scmp.ne.s32.totalorder %s140, %s156
      %p158 = scmp.eq.s32.totalorder %s18, 0
      %p159 = por %p157, %p158
      %s160 = ssub.s32 %s19, %s31
      %s161 = ssub.s32 %s20, %s27
      %s162 = sor.u32 %s160, %s161
      %p163 = scmp.eq.s32.totalorder %s162, 0
      %s165 = sadd.s32 %s164, 1
      %s166 = scalar_select %p163, %s164, %s165
      %p169 = pneg %p163
      %p170 = scmp.eq.s32.totalorder %s12, 1
      %p171 = por %p169, %p170
      %p172 = scmp.ne.s32.totalorder %s164, %s167
      %p173 = scmp.eq.s32.totalorder %s12, 0
      %p174 = por %p172, %p173
      %p175 = scmp.ne.s32.totalorder %s164, %s167
      %p176 = scmp.eq.s32.totalorder %s17, 1
      %p177 = por %p175, %p176
      %p178 = scmp.ne.s32.totalorder %s167, %s168
      %p179 = scmp.eq.s32.totalorder %s17, 0
      %p180 = por %p178, %p179
      %p181 = scmp.ne.s32.totalorder %s167, %s168
      %p182 = scmp.eq.s32.totalorder %s18, 1
      %p183 = por %p181, %p182
      %p185 = scmp.ne.s32.totalorder %s168, %s184
      %p186 = scmp.eq.s32.totalorder %s18, 0
      %p187 = por %p185, %p186
      %p188 = scmp.le.s32.totalorder 1, %s12
      %p189 = scmp.lt.s32.totalorder %s12, 3
      %p190 = pnand %p188, %p189
      %p191 = pneg %p190
      // Predicated region
      $region9: #{conv_block_forward.2} parent=5 // pred_check
        _
      $region10: #{conv_block_forward.2} parent=5 // pred_check_branch
        %193 = sbr.rel (%p190) target = $region12
      $region11: #{conv_block_forward.2} parent=5 // pred_region
        %s194 = ssub.s32 %s12, 1
        // Predicated region
        $region13: #{conv_block_forward.2} parent=11 // pred_check
          %p195 = pneg %p103
        $region14: #{conv_block_forward.2} parent=11 // pred_check_branch
          %197 = sbr.rel (%p195) target = $region16
        $region15: #{conv_block_forward.2} parent=11 // pred_region
          _
        $region16: #{conv_block_forward.2} parent=11 // pred_fallthru
          _
        // Predicated region
        $region17: #{conv_block_forward.2} parent=11 // pred_check
          %p198 = pneg %p124
        $region18: #{conv_block_forward.2} parent=11 // pred_check_branch
          %200 = sbr.rel (%p198) target = $region20
        $region19: #{conv_block_forward.2} parent=11 // pred_region
          _
        $region20: #{conv_block_forward.2} parent=11 // pred_fallthru
          _
      $region12: #{conv_block_forward.2} parent=5 // pred_fallthru
        _
      %p201 = scmp.lt.s32.totalorder %s12, 2
      // Predicated region
      $region21: #{conv_block_forward.2} parent=5 // pred_check
        %p202 = pneg %p201
      $region22: #{conv_block_forward.2} parent=5 // pred_check_branch
        %204 = sbr.rel (%p202) target = $region24
      $region23: #{conv_block_forward.2} parent=5 // pred_region
        // Predicated region
        $region25: #{conv_block_forward.2} parent=23 // pred_check
          %p205 = pneg %p46
        $region26: #{conv_block_forward.2} parent=23 // pred_check_branch
          %207 = sbr.rel (%p205) target = $region28
        $region27: #{conv_block_forward.2} parent=23 // pred_region
          %s208 = sand.u32 %s36, 1
          %s209 = sand.u32 %s36, 1
          %s210 = smul.addr %s209, 80
          %s211 = scalar_lea.vmem [#allocation2], %s210
          %s212 = smul.addr %s19, 40
          %s213 = sadd.s32 %s20, %s212
          %s214 = smul.addr %s213, 4
          %s215 = scalar_lea.vmem %s0, %s214
          // Predicated region
          $region29: #{conv_block_forward.2} parent=27 // pred_check
            _
          $region30: #{conv_block_forward.2} parent=27 // pred_check_branch
            %217 = sbr.rel (0) target = $region32
          $region31: #{conv_block_forward.2} parent=27 // pred_region
            // Predicated region
            $region33: #{conv_block_forward.2} parent=31 // pred_check
              _
            $region34: #{conv_block_forward.2} parent=31 // pred_check_branch
              %219 = sbr.rel target = $region36
            $region35: #{conv_block_forward.2} parent=31 // pred_region
              // Predicated region
              $region48: #{conv_block_forward.2} parent=35 // pred_check
                _
              $region49: #{conv_block_forward.2} parent=35 // pred_check_branch
                %272 = sbr.rel (0) target = $region51
              $region50: #{conv_block_forward.2} parent=35 // pred_region
                loop: start=0, step=1, limit=1
                $region52: #{conv_block_forward.2} parent=50 // loop_pre_header
                  _
                $region53: #{conv_block_forward.2} parent=50 // loop_header
                  %s274 = sphi 0, %s278
                  %p275 = scmp.ge.s32.totalorder %s274, 1
                  %s279 = sphi %s215, %s215
                  %s280 = sphi %s211, %s211
                $region54: #{conv_block_forward.2} parent=50 // loop_header_branch
                  %277 = sbr.rel (%p275) target = $region58
                $region55: #{conv_block_forward.2} parent=50 // loop_body
                  _
                $region56: #{conv_block_forward.2} parent=50 // loop_footer
                  %s278 = sadd.s32 1, %s274
                $region57: #{conv_block_forward.2} parent=50 // loop_footer_branch
                  %273 = sbr.rel target = $region53
                $region58: #{conv_block_forward.2} parent=50 // loop_exit
                  _
                loop: start=0, step=1, limit=1
                $region59: #{conv_block_forward.2} parent=50 // loop_pre_header
                  _
                $region60: #{conv_block_forward.2} parent=50 // loop_header
                  %s283 = sphi 0, %s287
                  %p284 = scmp.ge.s32.totalorder %s283, 1
                  %s288 = sphi %s215, %s215
                  %s289 = sphi %s211, %s211
                $region61: #{conv_block_forward.2} parent=50 // loop_header_branch
                  %286 = sbr.rel (%p284) target = $region65
                $region62: #{conv_block_forward.2} parent=50 // loop_body
                  %v290 = vld [vmem:[%s288] sm:$0xf]
                  %291 = vst [vmem:[%s289] sm:$0xf] %v290
                  %v292 = vld [vmem:[%s288 + $0x8] sm:$0xf]
                  %293 = vst [vmem:[%s289 + $0x4] sm:$0xf] %v292
                  %v294 = vld [vmem:[%s288 + $0x10] sm:$0xf]
                  %295 = vst [vmem:[%s289 + $0x8] sm:$0xf] %v294
                  %v296 = vld [vmem:[%s288 + $0x18] sm:$0xf]
                  %297 = vst [vmem:[%s289 + $0xc] sm:$0xf] %v296
                  %v298 = vld [vmem:[%s288 + $0x20] sm:$0xf]
                  %299 = vst [vmem:[%s289 + $0x10] sm:$0xf] %v298
                  %v300 = vld [vmem:[%s288 + $0x28] sm:$0xf]
                  %301 = vst [vmem:[%s289 + $0x14] sm:$0xf] %v300
                  %v302 = vld [vmem:[%s288 + $0x30] sm:$0xf]
                  %303 = vst [vmem:[%s289 + $0x18] sm:$0xf] %v302
                  %v304 = vld [vmem:[%s288 + $0x38] sm:$0xf]
                  %305 = vst [vmem:[%s289 + $0x1c] sm:$0xf] %v304
                  %v306 = vld [vmem:[%s288 + $0x40] sm:$0xf]
                  %307 = vst [vmem:[%s289 + $0x20] sm:$0xf] %v306
                  %v308 = vld [vmem:[%s288 + $0x48] sm:$0xf]
                  %309 = vst [vmem:[%s289 + $0x24] sm:$0xf] %v308
                  %v310 = vld [vmem:[%s288 + $0x50] sm:$0xf]
                  %311 = vst [vmem:[%s289 + $0x28] sm:$0xf] %v310
                  %v312 = vld [vmem:[%s288 + $0x58] sm:$0xf]
                  %313 = vst [vmem:[%s289 + $0x2c] sm:$0xf] %v312
                  %v314 = vld [vmem:[%s288 + $0x60] sm:$0xf]
                  %315 = vst [vmem:[%s289 + $0x30] sm:$0xf] %v314
                  %v316 = vld [vmem:[%s288 + $0x68] sm:$0xf]
                  %317 = vst [vmem:[%s289 + $0x34] sm:$0xf] %v316
                  %v318 = vld [vmem:[%s288 + $0x70] sm:$0xf]
                  %319 = vst [vmem:[%s289 + $0x38] sm:$0xf] %v318
                  %v320 = vld [vmem:[%s288 + $0x78] sm:$0xf]
                  %321 = vst [vmem:[%s289 + $0x3c] sm:$0xf] %v320
                  %v322 = vld [vmem:[%s288 + $0x80] sm:$0xf]
                  %323 = vst [vmem:[%s289 + $0x40] sm:$0xf] %v322
                  %v324 = vld [vmem:[%s288 + $0x88] sm:$0xf]
                  %325 = vst [vmem:[%s289 + $0x44] sm:$0xf] %v324
                  %v326 = vld [vmem:[%s288 + $0x90] sm:$0xf]
                  %327 = vst [vmem:[%s289 + $0x48] sm:$0xf] %v326
                  %v328 = vld [vmem:[%s288 + $0x98] sm:$0xf]
                  %329 = vst [vmem:[%s289 + $0x4c] sm:$0xf] %v328
                $region63: #{conv_block_forward.2} parent=50 // loop_footer
                  %s287 = sadd.s32 1, %s283
                $region64: #{conv_block_forward.2} parent=50 // loop_footer_branch
                  %282 = sbr.rel target = $region60
                $region65: #{conv_block_forward.2} parent=50 // loop_exit
                  _
              $region51: #{conv_block_forward.2} parent=35 // pred_fallthru
                _
            $region36: #{conv_block_forward.2} parent=31 // pred_fallthru
              _
            // Predicated region
            $region37: #{conv_block_forward.2} parent=31 // pred_check
              _
            $region38: #{conv_block_forward.2} parent=31 // pred_check_branch
              %221 = sbr.rel (0) target = $region40
            $region39: #{conv_block_forward.2} parent=31 // pred_region
              loop: start=0, step=1, limit=1
              $region41: #{conv_block_forward.2} parent=39 // loop_pre_header
                _
              $region42: #{conv_block_forward.2} parent=39 // loop_header
                %s224 = sphi 0, %s228
                %p225 = scmp.ge.s32.totalorder %s224, 1
                %s229 = sphi %s215, %s215
                %s230 = sphi %s211, %s211
              $region43: #{conv_block_forward.2} parent=39 // loop_header_branch
                %227 = sbr.rel (%p225) target = $region47
              $region44: #{conv_block_forward.2} parent=39 // loop_body
                %v231 = vld [vmem:[%s229] sm:$0xf]
                %232 = vst [vmem:[%s230] sm:$0xf] %v231
                %v233 = vld [vmem:[%s229 + $0x8] sm:$0xf]
                %234 = vst [vmem:[%s230 + $0x4] sm:$0xf] %v233
                %v235 = vld [vmem:[%s229 + $0x10] sm:$0xf]
                %236 = vst [vmem:[%s230 + $0x8] sm:$0xf] %v235
                %v237 = vld [vmem:[%s229 + $0x18] sm:$0xf]
                %238 = vst [vmem:[%s230 + $0xc] sm:$0xf] %v237
                %v239 = vld [vmem:[%s229 + $0x20] sm:$0xf]
                %240 = vst [vmem:[%s230 + $0x10] sm:$0xf] %v239
                %v241 = vld [vmem:[%s229 + $0x28] sm:$0xf]
                %242 = vst [vmem:[%s230 + $0x14] sm:$0xf] %v241
                %v243 = vld [vmem:[%s229 + $0x30] sm:$0xf]
                %244 = vst [vmem:[%s230 + $0x18] sm:$0xf] %v243
                %v245 = vld [vmem:[%s229 + $0x38] sm:$0xf]
                %246 = vst [vmem:[%s230 + $0x1c] sm:$0xf] %v245
                %v247 = vld [vmem:[%s229 + $0x40] sm:$0xf]
                %248 = vst [vmem:[%s230 + $0x20] sm:$0xf] %v247
                %v249 = vld [vmem:[%s229 + $0x48] sm:$0xf]
                %250 = vst [vmem:[%s230 + $0x24] sm:$0xf] %v249
                %v251 = vld [vmem:[%s229 + $0x50] sm:$0xf]
                %252 = vst [vmem:[%s230 + $0x28] sm:$0xf] %v251
                %v253 = vld [vmem:[%s229 + $0x58] sm:$0xf]
                %254 = vst [vmem:[%s230 + $0x2c] sm:$0xf] %v253
                %v255 = vld [vmem:[%s229 + $0x60] sm:$0xf]
                %256 = vst [vmem:[%s230 + $0x30] sm:$0xf] %v255
                %v257 = vld [vmem:[%s229 + $0x68] sm:$0xf]
                %258 = vst [vmem:[%s230 + $0x34] sm:$0xf] %v257
                %v259 = vld [vmem:[%s229 + $0x70] sm:$0xf]
                %260 = vst [vmem:[%s230 + $0x38] sm:$0xf] %v259
                %v261 = vld [vmem:[%s229 + $0x78] sm:$0xf]
                %262 = vst [vmem:[%s230 + $0x3c] sm:$0xf] %v261
                %v263 = vld [vmem:[%s229 + $0x80] sm:$0xf]
                %264 = vst [vmem:[%s230 + $0x40] sm:$0xf] %v263
                %v265 = vld [vmem:[%s229 + $0x88] sm:$0xf]
                %266 = vst [vmem:[%s230 + $0x44] sm:$0xf] %v265
                %v267 = vld [vmem:[%s229 + $0x90] sm:$0xf]
                %268 = vst [vmem:[%s230 + $0x48] sm:$0xf] %v267
                %v269 = vld [vmem:[%s229 + $0x98] sm:$0xf]
                %270 = vst [vmem:[%s230 + $0x4c] sm:$0xf] %v269
              $region45: #{conv_block_forward.2} parent=39 // loop_footer
                %s228 = sadd.s32 1, %s224
              $region46: #{conv_block_forward.2} parent=39 // loop_footer_branch
                %223 = sbr.rel target = $region42
              $region47: #{conv_block_forward.2} parent=39 // loop_exit
                _
            $region40: #{conv_block_forward.2} parent=31 // pred_fallthru
              _
          $region32: #{conv_block_forward.2} parent=27 // pred_fallthru
            _
          %330 = vnop
        $region28: #{conv_block_forward.2} parent=23 // pred_fallthru
          _
        // Predicated region
        $region66: #{conv_block_forward.2} parent=23 // pred_check
          %p331 = pneg %p76
        $region67: #{conv_block_forward.2} parent=23 // pred_check_branch
          %333 = sbr.rel (%p331) target = $region69
        $region68: #{conv_block_forward.2} parent=23 // pred_region
          %s334 = sand.u32 %s66, 1
          %s335 = sand.u32 %s66, 1
          %s336 = smul.addr %s335, 80
          %s337 = scalar_lea.vmem [#allocation3], %s336
          %s338 = sadd.s32 %s20, 1
          %s339 = smul.addr %s19, 40
          %s340 = sadd.s32 %s338, %s339
          %s341 = smul.addr %s340, 4
          %s342 = scalar_lea.vmem %s1, %s341
          // Predicated region
          $region70: #{conv_block_forward.2} parent=68 // pred_check
            _
          $region71: #{conv_block_forward.2} parent=68 // pred_check_branch
            %344 = sbr.rel (0) target = $region73
          $region72: #{conv_block_forward.2} parent=68 // pred_region
            // Predicated region
            $region74: #{conv_block_forward.2} parent=72 // pred_check
              _
            $region75: #{conv_block_forward.2} parent=72 // pred_check_branch
              %346 = sbr.rel target = $region77
            $region76: #{conv_block_forward.2} parent=72 // pred_region
              // Predicated region
              $region89: #{conv_block_forward.2} parent=76 // pred_check
                _
              $region90: #{conv_block_forward.2} parent=76 // pred_check_branch
                %399 = sbr.rel (0) target = $region92
              $region91: #{conv_block_forward.2} parent=76 // pred_region
                loop: start=0, step=1, limit=1
                $region93: #{conv_block_forward.2} parent=91 // loop_pre_header
                  _
                $region94: #{conv_block_forward.2} parent=91 // loop_header
                  %s401 = sphi 0, %s405
                  %p402 = scmp.ge.s32.totalorder %s401, 1
                  %s406 = sphi %s342, %s342
                  %s407 = sphi %s337, %s337
                $region95: #{conv_block_forward.2} parent=91 // loop_header_branch
                  %404 = sbr.rel (%p402) target = $region99
                $region96: #{conv_block_forward.2} parent=91 // loop_body
                  _
                $region97: #{conv_block_forward.2} parent=91 // loop_footer
                  %s405 = sadd.s32 1, %s401
                $region98: #{conv_block_forward.2} parent=91 // loop_footer_branch
                  %400 = sbr.rel target = $region94
                $region99: #{conv_block_forward.2} parent=91 // loop_exit
                  _
                loop: start=0, step=1, limit=1
                $region100: #{conv_block_forward.2} parent=91 // loop_pre_header
                  _
                $region101: #{conv_block_forward.2} parent=91 // loop_header
                  %s410 = sphi 0, %s414
                  %p411 = scmp.ge.s32.totalorder %s410, 1
                  %s415 = sphi %s342, %s342
                  %s416 = sphi %s337, %s337
                $region102: #{conv_block_forward.2} parent=91 // loop_header_branch
                  %413 = sbr.rel (%p411) target = $region106
                $region103: #{conv_block_forward.2} parent=91 // loop_body
                  %v417 = vld [vmem:[%s415] sm:$0xf]
                  %418 = vst [vmem:[%s416] sm:$0xf] %v417
                  %v419 = vld [vmem:[%s415 + $0x8] sm:$0xf]
                  %420 = vst [vmem:[%s416 + $0x4] sm:$0xf] %v419
                  %v421 = vld [vmem:[%s415 + $0x10] sm:$0xf]
                  %422 = vst [vmem:[%s416 + $0x8] sm:$0xf] %v421
                  %v423 = vld [vmem:[%s415 + $0x18] sm:$0xf]
                  %424 = vst [vmem:[%s416 + $0xc] sm:$0xf] %v423
                  %v425 = vld [vmem:[%s415 + $0x20] sm:$0xf]
                  %426 = vst [vmem:[%s416 + $0x10] sm:$0xf] %v425
                  %v427 = vld [vmem:[%s415 + $0x28] sm:$0xf]
                  %428 = vst [vmem:[%s416 + $0x14] sm:$0xf] %v427
                  %v429 = vld [vmem:[%s415 + $0x30] sm:$0xf]
                  %430 = vst [vmem:[%s416 + $0x18] sm:$0xf] %v429
                  %v431 = vld [vmem:[%s415 + $0x38] sm:$0xf]
                  %432 = vst [vmem:[%s416 + $0x1c] sm:$0xf] %v431
                  %v433 = vld [vmem:[%s415 + $0x40] sm:$0xf]
                  %434 = vst [vmem:[%s416 + $0x20] sm:$0xf] %v433
                  %v435 = vld [vmem:[%s415 + $0x48] sm:$0xf]
                  %436 = vst [vmem:[%s416 + $0x24] sm:$0xf] %v435
                  %v437 = vld [vmem:[%s415 + $0x50] sm:$0xf]
                  %438 = vst [vmem:[%s416 + $0x28] sm:$0xf] %v437
                  %v439 = vld [vmem:[%s415 + $0x58] sm:$0xf]
                  %440 = vst [vmem:[%s416 + $0x2c] sm:$0xf] %v439
                  %v441 = vld [vmem:[%s415 + $0x60] sm:$0xf]
                  %442 = vst [vmem:[%s416 + $0x30] sm:$0xf] %v441
                  %v443 = vld [vmem:[%s415 + $0x68] sm:$0xf]
                  %444 = vst [vmem:[%s416 + $0x34] sm:$0xf] %v443
                  %v445 = vld [vmem:[%s415 + $0x70] sm:$0xf]
                  %446 = vst [vmem:[%s416 + $0x38] sm:$0xf] %v445
                  %v447 = vld [vmem:[%s415 + $0x78] sm:$0xf]
                  %448 = vst [vmem:[%s416 + $0x3c] sm:$0xf] %v447
                  %v449 = vld [vmem:[%s415 + $0x80] sm:$0xf]
                  %450 = vst [vmem:[%s416 + $0x40] sm:$0xf] %v449
                  %v451 = vld [vmem:[%s415 + $0x88] sm:$0xf]
                  %452 = vst [vmem:[%s416 + $0x44] sm:$0xf] %v451
                  %v453 = vld [vmem:[%s415 + $0x90] sm:$0xf]
                  %454 = vst [vmem:[%s416 + $0x48] sm:$0xf] %v453
                  %v455 = vld [vmem:[%s415 + $0x98] sm:$0xf]
                  %456 = vst [vmem:[%s416 + $0x4c] sm:$0xf] %v455
                $region104: #{conv_block_forward.2} parent=91 // loop_footer
                  %s414 = sadd.s32 1, %s410
                $region105: #{conv_block_forward.2} parent=91 // loop_footer_branch
                  %409 = sbr.rel target = $region101
                $region106: #{conv_block_forward.2} parent=91 // loop_exit
                  _
              $region92: #{conv_block_forward.2} parent=76 // pred_fallthru
                _
            $region77: #{conv_block_forward.2} parent=72 // pred_fallthru
              _
            // Predicated region
            $region78: #{conv_block_forward.2} parent=72 // pred_check
              _
            $region79: #{conv_block_forward.2} parent=72 // pred_check_branch
              %348 = sbr.rel (0) target = $region81
            $region80: #{conv_block_forward.2} parent=72 // pred_region
              loop: start=0, step=1, limit=1
              $region82: #{conv_block_forward.2} parent=80 // loop_pre_header
                _
              $region83: #{conv_block_forward.2} parent=80 // loop_header
                %s351 = sphi 0, %s355
                %p352 = scmp.ge.s32.totalorder %s351, 1
                %s356 = sphi %s342, %s342
                %s357 = sphi %s337, %s337
              $region84: #{conv_block_forward.2} parent=80 // loop_header_branch
                %354 = sbr.rel (%p352) target = $region88
              $region85: #{conv_block_forward.2} parent=80 // loop_body
                %v358 = vld [vmem:[%s356] sm:$0xf]
                %359 = vst [vmem:[%s357] sm:$0xf] %v358
                %v360 = vld [vmem:[%s356 + $0x8] sm:$0xf]
                %361 = vst [vmem:[%s357 + $0x4] sm:$0xf] %v360
                %v362 = vld [vmem:[%s356 + $0x10] sm:$0xf]
                %363 = vst [vmem:[%s357 + $0x8] sm:$0xf] %v362
                %v364 = vld [vmem:[%s356 + $0x18] sm:$0xf]
                %365 = vst [vmem:[%s357 + $0xc] sm:$0xf] %v364
                %v366 = vld [vmem:[%s356 + $0x20] sm:$0xf]
                %367 = vst [vmem:[%s357 + $0x10] sm:$0xf] %v366
                %v368 = vld [vmem:[%s356 + $0x28] sm:$0xf]
                %369 = vst [vmem:[%s357 + $0x14] sm:$0xf] %v368
                %v370 = vld [vmem:[%s356 + $0x30] sm:$0xf]
                %371 = vst [vmem:[%s357 + $0x18] sm:$0xf] %v370
                %v372 = vld [vmem:[%s356 + $0x38] sm:$0xf]
                %373 = vst [vmem:[%s357 + $0x1c] sm:$0xf] %v372
                %v374 = vld [vmem:[%s356 + $0x40] sm:$0xf]
                %375 = vst [vmem:[%s357 + $0x20] sm:$0xf] %v374
                %v376 = vld [vmem:[%s356 + $0x48] sm:$0xf]
                %377 = vst [vmem:[%s357 + $0x24] sm:$0xf] %v376
                %v378 = vld [vmem:[%s356 + $0x50] sm:$0xf]
                %379 = vst [vmem:[%s357 + $0x28] sm:$0xf] %v378
                %v380 = vld [vmem:[%s356 + $0x58] sm:$0xf]
                %381 = vst [vmem:[%s357 + $0x2c] sm:$0xf] %v380
                %v382 = vld [vmem:[%s356 + $0x60] sm:$0xf]
                %383 = vst [vmem:[%s357 + $0x30] sm:$0xf] %v382
                %v384 = vld [vmem:[%s356 + $0x68] sm:$0xf]
                %385 = vst [vmem:[%s357 + $0x34] sm:$0xf] %v384
                %v386 = vld [vmem:[%s356 + $0x70] sm:$0xf]
                %387 = vst [vmem:[%s357 + $0x38] sm:$0xf] %v386
                %v388 = vld [vmem:[%s356 + $0x78] sm:$0xf]
                %389 = vst [vmem:[%s357 + $0x3c] sm:$0xf] %v388
                %v390 = vld [vmem:[%s356 + $0x80] sm:$0xf]
                %391 = vst [vmem:[%s357 + $0x40] sm:$0xf] %v390
                %v392 = vld [vmem:[%s356 + $0x88] sm:$0xf]
                %393 = vst [vmem:[%s357 + $0x44] sm:$0xf] %v392
                %v394 = vld [vmem:[%s356 + $0x90] sm:$0xf]
                %395 = vst [vmem:[%s357 + $0x48] sm:$0xf] %v394
                %v396 = vld [vmem:[%s356 + $0x98] sm:$0xf]
                %397 = vst [vmem:[%s357 + $0x4c] sm:$0xf] %v396
              $region86: #{conv_block_forward.2} parent=80 // loop_footer
                %s355 = sadd.s32 1, %s351
              $region87: #{conv_block_forward.2} parent=80 // loop_footer_branch
                %350 = sbr.rel target = $region83
              $region88: #{conv_block_forward.2} parent=80 // loop_exit
                _
            $region81: #{conv_block_forward.2} parent=72 // pred_fallthru
              _
          $region73: #{conv_block_forward.2} parent=68 // pred_fallthru
            _
          %457 = vnop
        $region69: #{conv_block_forward.2} parent=23 // pred_fallthru
          _
      $region24: #{conv_block_forward.2} parent=5 // pred_fallthru
        _
      %p458 = scmp.le.s32.totalorder 1, %s12
      %p459 = scmp.lt.s32.totalorder %s12, 3
      %p460 = pnand %p458, %p459
      %p461 = pneg %p460
      // Predicated region
      $region107: #{conv_block_forward.2} parent=5 // pred_check
        _
      $region108: #{conv_block_forward.2} parent=5 // pred_check_branch
        %463 = sbr.rel (%p460) target = $region110
      $region109: #{conv_block_forward.2} parent=5 // pred_region
        %s464 = ssub.s32 %s12, 1
        %s465 = sand.u32 %s39, 1
        %s466 = sand.u32 %s39, 1
        %s467 = smul.addr %s466, 80
        %s468 = scalar_lea.vmem [#allocation2], %s467
        // Predicated region
        $region111: #{conv_block_forward.2} parent=109 // pred_check
          %p469 = pneg %p52
        $region112: #{conv_block_forward.2} parent=109 // pred_check_branch
          %471 = sbr.rel (%p469) target = $region114
        $region113: #{conv_block_forward.2} parent=109 // pred_region
          _
        $region114: #{conv_block_forward.2} parent=109 // pred_fallthru
          _
        %s472 = sand.u32 %s69, 1
        %s473 = sand.u32 %s69, 1
        %s474 = smul.addr %s473, 80
        %s475 = scalar_lea.vmem [#allocation3], %s474
        // Predicated region
        $region115: #{conv_block_forward.2} parent=109 // pred_check
          %p476 = pneg %p82
        $region116: #{conv_block_forward.2} parent=109 // pred_check_branch
          %478 = sbr.rel (%p476) target = $region118
        $region117: #{conv_block_forward.2} parent=109 // pred_region
          _
        $region118: #{conv_block_forward.2} parent=109 // pred_fallthru
          _
        %s479 = sand.u32 %s39, 1
        %s480 = sand.u32 %s39, 1
        %s481 = smul.addr %s480, 80
        %s482 = scalar_lea.vmem [#allocation2], %s481
        %p483 = pneg %p52
        %p484 = pneg %p49
        %s485 = sand.u32 %s69, 1
        %s486 = sand.u32 %s69, 1
        %s487 = smul.addr %s486, 80
        %s488 = scalar_lea.vmem [#allocation3], %s487
        %p489 = pneg %p82
        %p490 = pneg %p79
        %p491 = pneg %p103
        %p492 = pneg %p100
        %p493 = pneg %p124
        %p494 = pneg %p121
        %p495 = pneg %p152
        %p496 = pneg %p149
        %p497 = scmp.lt.s32.totalorder %s21, 1
        %s498 = scalar_select %p497, %s21, 1
        %p499 = scmp.lt.s32.totalorder %s22, 0
        %s500 = scalar_select %p499, %s22, 0
        %s501 = smul.addr %s498, 8
        %s502 = sadd.s32 %s500, %s501
        %s503 = smul.addr %s502, 8
        %s504 = scalar_lea.vmem %s4, %s503
        %p505 = pneg %p180
        %p506 = pneg %p177
        %p507 = scmp.lt.s32.totalorder %s21, 1
        %s508 = scalar_select %p507, %s21, 1
        %p509 = scmp.lt.s32.totalorder %s22, 0
        %s510 = scalar_select %p509, %s22, 0
        %s511 = smul.addr %s510, 8
        %s512 = smul.addr %s508, 8
        %s513 = sadd.s32 %s511, %s512
        %s514 = smul.addr %s513, 8
        %s515 = scalar_lea.vmem %s5, %s514
        %s516 = sadd.s32 %s22, 1
        %p517 = scmp.lt.s32.totalorder %s21, 1
        %s518 = scalar_select %p517, %s21, 1
        %p519 = scmp.lt.s32.totalorder %s22, 0
        %s520 = scalar_select %p519, %s22, 0
        %s521 = smul.addr %s518, 8
        %s522 = sadd.s32 %s520, %s521
        %s523 = smul.addr %s522, 8
        %s524 = scalar_lea.vmem %s4, %s523
        %p525 = scmp.lt.s32.totalorder %s21, 1
        %s526 = scalar_select %p525, %s21, 1
        %p527 = scmp.lt.s32.totalorder %s22, 0
        %s528 = scalar_select %p527, %s22, 0
        %s529 = smul.addr %s528, 8
        %s530 = smul.addr %s526, 8
        %s531 = sadd.s32 %s529, %s530
        %s532 = smul.addr %s531, 8
        %s533 = scalar_lea.vmem %s5, %s532
        %v535 = vld [vmem:[%s468] sm:$0xf]
        %v536 = vld [vmem:[%s468 + $0x4] sm:$0xf]
        %v537 = vld [vmem:[%s468 + $0x8] sm:$0xf]
        %v538 = vld [vmem:[%s468 + $0xc] sm:$0xf]
        %v539 = vld [vmem:[%s468 + $0x10] sm:$0xf]
        %v540 = vld [vmem:[%s468 + $0x14] sm:$0xf]
        %v541 = vld [vmem:[%s468 + $0x18] sm:$0xf]
        %v542 = vld [vmem:[%s468 + $0x1c] sm:$0xf]
        %v543 = vld [vmem:[%s468 + $0x20] sm:$0xf]
        %v544 = vld [vmem:[%s468 + $0x24] sm:$0xf]
        %v545 = vld [vmem:[%s468 + $0x28] sm:$0xf]
        %v546 = vld [vmem:[%s468 + $0x2c] sm:$0xf]
        %v547 = vld [vmem:[%s468 + $0x30] sm:$0xf]
        %v548 = vld [vmem:[%s468 + $0x34] sm:$0xf]
        %v549 = vld [vmem:[%s468 + $0x38] sm:$0xf]
        %v550 = vld [vmem:[%s468 + $0x3c] sm:$0xf]
        %v551 = vld [vmem:[%s468 + $0x40] sm:$0xf]
        %v552 = vld [vmem:[%s468 + $0x44] sm:$0xf]
        %v553 = vld [vmem:[%s468 + $0x48] sm:$0xf]
        %v554 = vld [vmem:[%s468 + $0x4c] sm:$0xf]
        %v555 = vld [vmem:[%s475] sm:$0xf]
        %v556 = vld [vmem:[%s475 + $0x4] sm:$0xf]
        %v557 = vld [vmem:[%s475 + $0x8] sm:$0xf]
        %v558 = vld [vmem:[%s475 + $0xc] sm:$0xf]
        %v559 = vld [vmem:[%s475 + $0x10] sm:$0xf]
        %v560 = vld [vmem:[%s475 + $0x14] sm:$0xf]
        %v561 = vld [vmem:[%s475 + $0x18] sm:$0xf]
        %v562 = vld [vmem:[%s475 + $0x1c] sm:$0xf]
        %v563 = vld [vmem:[%s475 + $0x20] sm:$0xf]
        %v564 = vld [vmem:[%s475 + $0x24] sm:$0xf]
        %v565 = vld [vmem:[%s475 + $0x28] sm:$0xf]
        %v566 = vld [vmem:[%s475 + $0x2c] sm:$0xf]
        %v567 = vld [vmem:[%s475 + $0x30] sm:$0xf]
        %v568 = vld [vmem:[%s475 + $0x34] sm:$0xf]
        %v569 = vld [vmem:[%s475 + $0x38] sm:$0xf]
        %v570 = vld [vmem:[%s475 + $0x3c] sm:$0xf]
        %v571 = vld [vmem:[%s475 + $0x40] sm:$0xf]
        %v572 = vld [vmem:[%s475 + $0x44] sm:$0xf]
        %v573 = vld [vmem:[%s475 + $0x48] sm:$0xf]
        %v574 = vld [vmem:[%s475 + $0x4c] sm:$0xf]
        %v595 = vunpack.c.l.b16 %v535
        %v596 = vunpack.c.l.b16 %v536
        %v597 = vunpack.c.l.b16 %v537
        %v598 = vunpack.c.l.b16 %v538
        %v599 = vunpack.c.l.b16 %v539
        %v600 = vunpack.c.l.b16 %v540
        %v601 = vunpack.c.l.b16 %v541
        %v602 = vunpack.c.l.b16 %v542
        %v603 = vunpack.c.l.b16 %v543
        %v604 = vunpack.c.l.b16 %v544
        %v605 = vunpack.c.l.b16 %v545
        %v606 = vunpack.c.l.b16 %v546
        %v607 = vunpack.c.l.b16 %v547
        %v608 = vunpack.c.l.b16 %v548
        %v609 = vunpack.c.l.b16 %v549
        %v610 = vunpack.c.l.b16 %v550
        %v611 = vunpack.c.l.b16 %v551
        %v612 = vunpack.c.l.b16 %v552
        %v613 = vunpack.c.l.b16 %v553
        %v614 = vunpack.c.l.b16 %v554
        %v615 = vpack.c.b16 %v596, %v595
        %v616 = vpack.c.b16 %v598, %v597
        %v617 = vpack.c.b16 %v600, %v599
        %v618 = vpack.c.b16 %v602, %v601
        %v619 = vpack.c.b16 %v604, %v603
        %v620 = vpack.c.b16 %v606, %v605
        %v621 = vpack.c.b16 %v608, %v607
        %v622 = vpack.c.b16 %v610, %v609
        %v623 = vpack.c.b16 %v612, %v611
        %v624 = vpack.c.b16 %v614, %v613
        %v655 = vunpack.c.l.b16 %v555
        %v656 = vunpack.c.l.b16 %v556
        %v657 = vunpack.c.l.b16 %v557
        %v658 = vunpack.c.l.b16 %v558
        %v659 = vunpack.c.l.b16 %v559
        %v660 = vunpack.c.l.b16 %v560
        %v661 = vunpack.c.l.b16 %v561
        %v662 = vunpack.c.l.b16 %v562
        %v663 = vunpack.c.l.b16 %v563
        %v664 = vunpack.c.l.b16 %v564
        %v665 = vunpack.c.l.b16 %v565
        %v666 = vunpack.c.l.b16 %v566
        %v667 = vunpack.c.l.b16 %v567
        %v668 = vunpack.c.l.b16 %v568
        %v669 = vunpack.c.l.b16 %v569
        %v670 = vunpack.c.l.b16 %v570
        %v671 = vunpack.c.l.b16 %v571
        %v672 = vunpack.c.l.b16 %v572
        %v673 = vunpack.c.l.b16 %v573
        %v674 = vunpack.c.l.b16 %v574
        %v675 = vpack.c.b16 %v656, %v655
        %v676 = vpack.c.b16 %v658, %v657
        %v677 = vpack.c.b16 %v660, %v659
        %v678 = vpack.c.b16 %v662, %v661
        %v679 = vpack.c.b16 %v664, %v663
        %v680 = vpack.c.b16 %v666, %v665
        %v681 = vpack.c.b16 %v668, %v667
        %v682 = vpack.c.b16 %v670, %v669
        %v683 = vpack.c.b16 %v672, %v671
        %v684 = vpack.c.b16 %v674, %v673
        %v685 = vld [vmem:[%s2] sm:$0xff]
        %v686 = vld [vmem:[%s2 + $0x8] sm:$0xff]
        %v687 = vld [vmem:[%s2 + $0x10] sm:$0xff]
        %v688 = vld [vmem:[%s2 + $0x18] sm:$0xff]
        %v689 = vld [vmem:[%s2 + $0x20] sm:$0xff]
        %v690 = vld [vmem:[%s2 + $0x28] sm:$0xff]
        %v691 = vld [vmem:[%s2 + $0x30] sm:$0xff]
        %v692 = vld [vmem:[%s2 + $0x38] sm:$0xff]
        %s693 = scalar_lea.vmem %s2, 64
        %v694 = vld [vmem:[%s693] sm:$0xff]
        %v695 = vld [vmem:[%s693 + $0x8] sm:$0xff]
        %v696 = vld [vmem:[%s693 + $0x10] sm:$0xff]
        %v697 = vld [vmem:[%s693 + $0x18] sm:$0xff]
        %v698 = vld [vmem:[%s693 + $0x20] sm:$0xff]
        %v699 = vld [vmem:[%s693 + $0x28] sm:$0xff]
        %v700 = vld [vmem:[%s693 + $0x30] sm:$0xff]
        %v701 = vld [vmem:[%s693 + $0x38] sm:$0xff]
        %v710 = vunpack.c.l.b16 %v694
        %v711 = vunpack.c.h.b16 %v694
        %v712 = vunpack.c.l.b16 %v695
        %v713 = vunpack.c.h.b16 %v695
        %v714 = vunpack.c.l.b16 %v696
        %v715 = vunpack.c.h.b16 %v696
        %v716 = vunpack.c.l.b16 %v697
        %v717 = vunpack.c.h.b16 %v697
        %v718 = vunpack.c.l.b16 %v698
        %v719 = vunpack.c.h.b16 %v698
        %v720 = vunpack.c.l.b16 %v699
        %v721 = vunpack.c.h.b16 %v699
        %v722 = vunpack.c.l.b16 %v700
        %v723 = vunpack.c.h.b16 %v700
        %v724 = vunpack.c.l.b16 %v701
        %v725 = vunpack.c.h.b16 %v701
        %v726 = vpack.c.b16 %v712, %v710
        %v727 = vpack.c.b16 %v713, %v711
        %v728 = vpack.c.b16 %v716, %v714
        %v729 = vpack.c.b16 %v717, %v715
        %v730 = vpack.c.b16 %v720, %v718
        %v731 = vpack.c.b16 %v721, %v719
        %v732 = vpack.c.b16 %v724, %v722
        %v733 = vpack.c.b16 %v725, %v723
        %738 = vrot.lane.b32.xlu0 %v615, 127
        %v739 = vpop.permute.xlu0 %738
        %740 = vrot.lane.b32.xlu0 %v675, 127
        %v741 = vpop.permute.xlu0 %740
        %742 = vrot.lane.b32.xlu0 %v616, 127
        %v743 = vpop.permute.xlu0 %742
        %744 = vrot.lane.b32.xlu0 %v676, 127
        %v745 = vpop.permute.xlu0 %744
        %746 = vrot.lane.b32.xlu0 %v617, 127
        %v747 = vpop.permute.xlu0 %746
        %748 = vrot.lane.b32.xlu0 %v677, 127
        %v749 = vpop.permute.xlu0 %748
        %750 = vrot.lane.b32.xlu0 %v618, 127
        %v751 = vpop.permute.xlu0 %750
        %752 = vrot.lane.b32.xlu0 %v678, 127
        %v753 = vpop.permute.xlu0 %752
        %754 = vrot.lane.b32.xlu0 %v619, 127
        %v755 = vpop.permute.xlu0 %754
        %756 = vrot.lane.b32.xlu0 %v679, 127
        %v757 = vpop.permute.xlu0 %756
        %758 = vrot.lane.b32.xlu0 %v620, 127
        %v759 = vpop.permute.xlu0 %758
        %760 = vrot.lane.b32.xlu0 %v680, 127
        %v761 = vpop.permute.xlu0 %760
        %762 = vrot.lane.b32.xlu0 %v621, 127
        %v763 = vpop.permute.xlu0 %762
        %764 = vrot.lane.b32.xlu0 %v681, 127
        %v765 = vpop.permute.xlu0 %764
        %766 = vrot.lane.b32.xlu0 %v622, 127
        %v767 = vpop.permute.xlu0 %766
        %768 = vrot.lane.b32.xlu0 %v682, 127
        %v769 = vpop.permute.xlu0 %768
        %770 = vrot.lane.b32.xlu0 %v623, 127
        %v771 = vpop.permute.xlu0 %770
        %772 = vrot.lane.b32.xlu0 %v683, 127
        %v773 = vpop.permute.xlu0 %772
        %774 = vrot.lane.b32.xlu0 %v624, 127
        %v775 = vpop.permute.xlu0 %774
        %776 = vrot.lane.b32.xlu0 %v684, 127
        %v777 = vpop.permute.xlu0 %776
        %vm778 = vcmask 1039360
        %v779 = vsel %vm778, %v739, %v741
        %v780 = vsel %vm778, %v743, %v745
        %v781 = vsel %vm778, %v747, %v749
        %v782 = vsel %vm778, %v751, %v753
        %v783 = vsel %vm778, %v755, %v757
        %v784 = vsel %vm778, %v759, %v761
        %v785 = vsel %vm778, %v763, %v765
        %v786 = vsel %vm778, %v767, %v769
        %v787 = vsel %vm778, %v771, %v773
        %v788 = vsel %vm778, %v775, %v777
        %vm799 = vcmask 261120
        %v801 = vsel %vm799, %v727, 0
        %v804 = vsel %vm799, %v729, 0
        %v807 = vsel %vm799, %v731, 0
        %v810 = vsel %vm799, %v733, 0
        %812 = vmatprep.subr.bf16.mxu0 0
        %813 = vmatpush1.bf16.msra.mxu0 %v779
        %814 = vmatprep.subr.bf16.mxu0 0
        %815 = vmatpush1.bf16.msra.mxu0 %v780
        %816 = vmatprep.subr.bf16.mxu0 0
        %817 = vmatpush1.bf16.msra.mxu0 %v781
        %818 = vmatprep.subr.bf16.mxu0 0
        %819 = vmatpush1.bf16.msra.mxu0 %v782
        %820 = vmatprep.subr.bf16.mxu0 0
        %821 = vmatpush1.bf16.msra.mxu0 %v783
        %822 = vmatprep.subr.bf16.mxu0 0
        %823 = vmatpush1.bf16.msra.mxu0 %v784
        %824 = vmatprep.subr.bf16.mxu0 0
        %825 = vmatpush1.bf16.msra.mxu0 %v785
        %826 = vmatprep.subr.bf16.mxu0 0
        %827 = vmatpush1.bf16.msra.mxu0 %v786
        %828 = vmatprep.subr.bf16.mxu0 0
        %829 = vmatpush1.bf16.msra.mxu0 %v787
        %830 = vmatprep.subr.bf16.mxu0 0
        %831 = vmatpush1.bf16.msra.mxu0 %v788
        %832 = vmatprep.subr.bf16.mxu0 0
        %833 = vmatpush1.bf16.msra.mxu0 0
        %834 = vmatprep.subr.bf16.mxu0 0
        %835 = vmatpush1.bf16.msra.mxu0 0
        %836 = vmatprep.subr.bf16.mxu0 0
        %837 = vmatpush1.bf16.msra.mxu0 0
        %838 = vmatprep.subr.bf16.mxu0 0
        %839 = vmatpush1.bf16.msra.mxu0 0
        %840 = vmatprep.subr.bf16.mxu0 0
        %841 = vmatpush1.bf16.msra.mxu0 0
        %842 = vmatprep.subr.bf16.mxu0 0
        %843 = vmatpush1.bf16.msra.mxu0 0
        %844 = vmatprep.mubr.bf16.mxu0 %v801
        %845 = vmatmul.mubr.bf16.gmra.mrb[0].mxu0 %v726
        %v846 = vpop.f32.mrb[0].mxu0
        %v847 = vadd.f32 0.0, %v846
        %v848 = vpop.f32.mrb[0].mxu0
        %v849 = vpop.f32.mrb[0].mxu0
        %v850 = vadd.f32 0.0, %v849
        %v851 = vpop.f32.mrb[0].mxu0
        %852 = vmatprep.mubr.bf16.mxu0 %v804
        %853 = vmatmul.mubr.bf16.gmra.mrb[0].mxu0 %v728
        %v854 = vpop.f32.mrb[0].mxu0
        %v855 = vadd.f32 0.0, %v854
        %v856 = vpop.f32.mrb[0].mxu0
        %v857 = vpop.f32.mrb[0].mxu0
        %v858 = vadd.f32 0.0, %v857
        %v859 = vpop.f32.mrb[0].mxu0
        %860 = vmatprep.mubr.bf16.mxu0 %v807
        %861 = vmatmul.mubr.bf16.gmra.mrb[0].mxu0 %v730
        %v862 = vpop.f32.mrb[0].mxu0
        %v863 = vadd.f32 0.0, %v862
        %v864 = vpop.f32.mrb[0].mxu0
        %v865 = vpop.f32.mrb[0].mxu0
        %v866 = vadd.f32 0.0, %v865
        %v867 = vpop.f32.mrb[0].mxu0
        %868 = vmatprep.mubr.bf16.mxu0 %v810
        %869 = vmatmul.mubr.bf16.gmra.mrb[0].mxu0 %v732
        %v870 = vpop.f32.mrb[0].mxu0
        %v871 = vadd.f32 0.0, %v870
        %v872 = vpop.f32.mrb[0].mxu0
        %v873 = vpop.f32.mrb[0].mxu0
        %v874 = vadd.f32 0.0, %v873
        %v875 = vpop.f32.mrb[0].mxu0
        %876 = vdwg.mxu0
        %v885 = vunpack.c.l.b16 %v685
        %v886 = vunpack.c.h.b16 %v685
        %v887 = vunpack.c.l.b16 %v686
        %v888 = vunpack.c.h.b16 %v686
        %v889 = vunpack.c.l.b16 %v687
        %v890 = vunpack.c.h.b16 %v687
        %v891 = vunpack.c.l.b16 %v688
        %v892 = vunpack.c.h.b16 %v688
        %v893 = vunpack.c.l.b16 %v689
        %v894 = vunpack.c.h.b16 %v689
        %v895 = vunpack.c.l.b16 %v690
        %v896 = vunpack.c.h.b16 %v690
        %v897 = vunpack.c.l.b16 %v691
        %v898 = vunpack.c.h.b16 %v691
        %v899 = vunpack.c.l.b16 %v692
        %v900 = vunpack.c.h.b16 %v692
        %v901 = vpack.c.b16 %v887, %v885
        %v902 = vpack.c.b16 %v888, %v886
        %v903 = vpack.c.b16 %v891, %v889
        %v904 = vpack.c.b16 %v892, %v890
        %v905 = vpack.c.b16 %v895, %v893
        %v906 = vpack.c.b16 %v896, %v894
        %v907 = vpack.c.b16 %v899, %v897
        %v908 = vpack.c.b16 %v900, %v898
        %v914 = vsel %vm799, %v902, 0
        %v917 = vsel %vm799, %v904, 0
        %v920 = vsel %vm799, %v906, 0
        %v923 = vsel %vm799, %v908, 0
        %925 = vmatprep.subr.bf16.mxu0 0
        %926 = vmatpush1.bf16.msra.mxu0 %v615
        %927 = vmatprep.subr.bf16.mxu0 0
        %928 = vmatpush1.bf16.msra.mxu0 %v616
        %929 = vmatprep.subr.bf16.mxu0 0
        %930 = vmatpush1.bf16.msra.mxu0 %v617
        %931 = vmatprep.subr.bf16.mxu0 0
        %932 = vmatpush1.bf16.msra.mxu0 %v618
        %933 = vmatprep.subr.bf16.mxu0 0
        %934 = vmatpush1.bf16.msra.mxu0 %v619
        %935 = vmatprep.subr.bf16.mxu0 0
        %936 = vmatpush1.bf16.msra.mxu0 %v620
        %937 = vmatprep.subr.bf16.mxu0 0
        %938 = vmatpush1.bf16.msra.mxu0 %v621
        %939 = vmatprep.subr.bf16.mxu0 0
        %940 = vmatpush1.bf16.msra.mxu0 %v622
        %941 = vmatprep.subr.bf16.mxu0 0
        %942 = vmatpush1.bf16.msra.mxu0 %v623
        %943 = vmatprep.subr.bf16.mxu0 0
        %944 = vmatpush1.bf16.msra.mxu0 %v624
        %945 = vmatprep.subr.bf16.mxu0 0
        %946 = vmatpush1.bf16.msra.mxu0 0
        %947 = vmatprep.subr.bf16.mxu0 0
        %948 = vmatpush1.bf16.msra.mxu0 0
        %949 = vmatprep.subr.bf16.mxu0 0
        %950 = vmatpush1.bf16.msra.mxu0 0
        %951 = vmatprep.subr.bf16.mxu0 0
        %952 = vmatpush1.bf16.msra.mxu0 0
        %953 = vmatprep.subr.bf16.mxu0 0
        %954 = vmatpush1.bf16.msra.mxu0 0
        %955 = vmatprep.subr.bf16.mxu0 0
        %956 = vmatpush1.bf16.msra.mxu0 0
        %957 = vmatprep.mubr.bf16.mxu0 %v914
        %958 = vmatmul.mubr.bf16.gmra.mrb[0].mxu0 %v901
        %v959 = vpop.f32.mrb[0].mxu0
        %v960 = vadd.f32 %v847, %v959
        %v961 = vpop.f32.mrb[0].mxu0
        %v962 = vpop.f32.mrb[0].mxu0
        %v963 = vadd.f32 %v850, %v962
        %v964 = vpop.f32.mrb[0].mxu0
        %965 = vmatprep.mubr.bf16.mxu0 %v917
        %966 = vmatmul.mubr.bf16.gmra.mrb[0].mxu0 %v903
        %v967 = vpop.f32.mrb[0].mxu0
        %v968 = vadd.f32 %v855, %v967
        %v969 = vpop.f32.mrb[0].mxu0
        %v970 = vpop.f32.mrb[0].mxu0
        %v971 = vadd.f32 %v858, %v970
        %v972 = vpop.f32.mrb[0].mxu0
        %973 = vmatprep.mubr.bf16.mxu0 %v920
        %974 = vmatmul.mubr.bf16.gmra.mrb[0].mxu0 %v905
        %v975 = vpop.f32.mrb[0].mxu0
        %v976 = vadd.f32 %v863, %v975
        %v977 = vpop.f32.mrb[0].mxu0
        %v978 = vpop.f32.mrb[0].mxu0
        %v979 = vadd.f32 %v866, %v978
        %v980 = vpop.f32.mrb[0].mxu0
        %981 = vmatprep.mubr.bf16.mxu0 %v923
        %982 = vmatmul.mubr.bf16.gmra.mrb[0].mxu0 %v907
        %v983 = vpop.f32.mrb[0].mxu0
        %v984 = vadd.f32 %v871, %v983
        %v985 = vpop.f32.mrb[0].mxu0
        %v986 = vpop.f32.mrb[0].mxu0
        %v987 = vadd.f32 %v874, %v986
        %v988 = vpop.f32.mrb[0].mxu0
        %989 = vdwg.mxu0
        %s990 = scalar_lea.vmem %s2, 128
        %v991 = vld [vmem:[%s990] sm:$0xff]
        %v992 = vld [vmem:[%s990 + $0x8] sm:$0xff]
        %v993 = vld [vmem:[%s990 + $0x10] sm:$0xff]
        %v994 = vld [vmem:[%s990 + $0x18] sm:$0xff]
        %v995 = vld [vmem:[%s990 + $0x20] sm:$0xff]
        %v996 = vld [vmem:[%s990 + $0x28] sm:$0xff]
        %v997 = vld [vmem:[%s990 + $0x30] sm:$0xff]
        %v998 = vld [vmem:[%s990 + $0x38] sm:$0xff]
        %v1007 = vunpack.c.l.b16 %v991
        %v1008 = vunpack.c.h.b16 %v991
        %v1009 = vunpack.c.l.b16 %v992
        %v1010 = vunpack.c.h.b16 %v992
        %v1011 = vunpack.c.l.b16 %v993
        %v1012 = vunpack.c.h.b16 %v993
        %v1013 = vunpack.c.l.b16 %v994
        %v1014 = vunpack.c.h.b16 %v994
        %v1015 = vunpack.c.l.b16 %v995
        %v1016 = vunpack.c.h.b16 %v995
        %v1017 = vunpack.c.l.b16 %v996
        %v1018 = vunpack.c.h.b16 %v996
        %v1019 = vunpack.c.l.b16 %v997
        %v1020 = vunpack.c.h.b16 %v997
        %v1021 = vunpack.c.l.b16 %v998
        %v1022 = vunpack.c.h.b16 %v998
        %v1023 = vpack.c.b16 %v1009, %v1007
        %v1024 = vpack.c.b16 %v1010, %v1008
        %v1025 = vpack.c.b16 %v1013, %v1011
        %v1026 = vpack.c.b16 %v1014, %v1012
        %v1027 = vpack.c.b16 %v1017, %v1015
        %v1028 = vpack.c.b16 %v1018, %v1016
        %v1029 = vpack.c.b16 %v1021, %v1019
        %v1030 = vpack.c.b16 %v1022, %v1020
        %1035 = vrot.lane.b32.xlu0 %v615, 126
        %v1036 = vpop.permute.xlu0 %1035
        %1037 = vrot.lane.b32.xlu0 %v675, 126
        %v1038 = vpop.permute.xlu0 %1037
        %1039 = vrot.lane.b32.xlu0 %v616, 126
        %v1040 = vpop.permute.xlu0 %1039
        %1041 = vrot.lane.b32.xlu0 %v676, 126
        %v1042 = vpop.permute.xlu0 %1041
        %1043 = vrot.lane.b32.xlu0 %v617, 126
        %v1044 = vpop.permute.xlu0 %1043
        %1045 = vrot.lane.b32.xlu0 %v677, 126
        %v1046 = vpop.permute.xlu0 %1045
        %1047 = vrot.lane.b32.xlu0 %v618, 126
        %v1048 = vpop.permute.xlu0 %1047
        %1049 = vrot.lane.b32.xlu0 %v678, 126
        %v1050 = vpop.permute.xlu0 %1049
        %1051 = vrot.lane.b32.xlu0 %v619, 126
        %v1052 = vpop.permute.xlu0 %1051
        %1053 = vrot.lane.b32.xlu0 %v679, 126
        %v1054 = vpop.permute.xlu0 %1053
        %1055 = vrot.lane.b32.xlu0 %v620, 126
        %v1056 = vpop.permute.xlu0 %1055
        %1057 = vrot.lane.b32.xlu0 %v680, 126
        %v1058 = vpop.permute.xlu0 %1057
        %1059 = vrot.lane.b32.xlu0 %v621, 126
        %v1060 = vpop.permute.xlu0 %1059
        %1061 = vrot.lane.b32.xlu0 %v681, 126
        %v1062 = vpop.permute.xlu0 %1061
        %1063 = vrot.lane.b32.xlu0 %v622, 126
        %v1064 = vpop.permute.xlu0 %1063
        %1065 = vrot.lane.b32.xlu0 %v682, 126
        %v1066 = vpop.permute.xlu0 %1065
        %1067 = vrot.lane.b32.xlu0 %v623, 126
        %v1068 = vpop.permute.xlu0 %1067
        %1069 = vrot.lane.b32.xlu0 %v683, 126
        %v1070 = vpop.permute.xlu0 %1069
        %1071 = vrot.lane.b32.xlu0 %v624, 126
        %v1072 = vpop.permute.xlu0 %1071
        %1073 = vrot.lane.b32.xlu0 %v684, 126
        %v1074 = vpop.permute.xlu0 %1073
        %vm1075 = vcmask 1031168
        %v1076 = vsel %vm1075, %v1036, %v1038
        %v1077 = vsel %vm1075, %v1040, %v1042
        %v1078 = vsel %vm1075, %v1044, %v1046
        %v1079 = vsel %vm1075, %v1048, %v1050
        %v1080 = vsel %vm1075, %v1052, %v1054
        %v1081 = vsel %vm1075, %v1056, %v1058
        %v1082 = vsel %vm1075, %v1060, %v1062
        %v1083 = vsel %vm1075, %v1064, %v1066
        %v1084 = vsel %vm1075, %v1068, %v1070
        %v1085 = vsel %vm1075, %v1072, %v1074
        %v1097 = vsel %vm799, %v1024, 0
        %v1100 = vsel %vm799, %v1026, 0
        %v1103 = vsel %vm799, %v1028, 0
        %v1106 = vsel %vm799, %v1030, 0
        %1108 = vmatprep.subr.bf16.mxu0 0
        %1109 = vmatpush1.bf16.msra.mxu0 %v1076
        %1110 = vmatprep.subr.bf16.mxu0 0
        %1111 = vmatpush1.bf16.msra.mxu0 %v1077
        %1112 = vmatprep.subr.bf16.mxu0 0
        %1113 = vmatpush1.bf16.msra.mxu0 %v1078
        %1114 = vmatprep.subr.bf16.mxu0 0
        %1115 = vmatpush1.bf16.msra.mxu0 %v1079
        %1116 = vmatprep.subr.bf16.mxu0 0
        %1117 = vmatpush1.bf16.msra.mxu0 %v1080
        %1118 = vmatprep.subr.bf16.mxu0 0
        %1119 = vmatpush1.bf16.msra.mxu0 %v1081
        %1120 = vmatprep.subr.bf16.mxu0 0
        %1121 = vmatpush1.bf16.msra.mxu0 %v1082
        %1122 = vmatprep.subr.bf16.mxu0 0
        %1123 = vmatpush1.bf16.msra.mxu0 %v1083
        %1124 = vmatprep.subr.bf16.mxu0 0
        %1125 = vmatpush1.bf16.msra.mxu0 %v1084
        %1126 = vmatprep.subr.bf16.mxu0 0
        %1127 = vmatpush1.bf16.msra.mxu0 %v1085
        %1128 = vmatprep.subr.bf16.mxu0 0
        %1129 = vmatpush1.bf16.msra.mxu0 0
        %1130 = vmatprep.subr.bf16.mxu0 0
        %1131 = vmatpush1.bf16.msra.mxu0 0
        %1132 = vmatprep.subr.bf16.mxu0 0
        %1133 = vmatpush1.bf16.msra.mxu0 0
        %1134 = vmatprep.subr.bf16.mxu0 0
        %1135 = vmatpush1.bf16.msra.mxu0 0
        %1136 = vmatprep.subr.bf16.mxu0 0
        %1137 = vmatpush1.bf16.msra.mxu0 0
        %1138 = vmatprep.subr.bf16.mxu0 0
        %1139 = vmatpush1.bf16.msra.mxu0 0
        %1140 = vmatprep.mubr.bf16.mxu0 %v1097
        %1141 = vmatmul.mubr.bf16.gmra.mrb[0].mxu0 %v1023
        %v1142 = vpop.f32.mrb[0].mxu0
        %v1143 = vadd.f32 0.0, %v1142
        %v1144 = vpop.f32.mrb[0].mxu0
        %v1145 = vpop.f32.mrb[0].mxu0
        %v1146 = vadd.f32 0.0, %v1145
        %v1147 = vpop.f32.mrb[0].mxu0
        %1148 = vmatprep.mubr.bf16.mxu0 %v1100
        %1149 = vmatmul.mubr.bf16.gmra.mrb[0].mxu0 %v1025
        %v1150 = vpop.f32.mrb[0].mxu0
        %v1151 = vadd.f32 0.0, %v1150
        %v1152 = vpop.f32.mrb[0].mxu0
        %v1153 = vpop.f32.mrb[0].mxu0
        %v1154 = vadd.f32 0.0, %v1153
        %v1155 = vpop.f32.mrb[0].mxu0
        %1156 = vmatprep.mubr.bf16.mxu0 %v1103
        %1157 = vmatmul.mubr.bf16.gmra.mrb[0].mxu0 %v1027
        %v1158 = vpop.f32.mrb[0].mxu0
        %v1159 = vadd.f32 0.0, %v1158
        %v1160 = vpop.f32.mrb[0].mxu0
        %v1161 = vpop.f32.mrb[0].mxu0
        %v1162 = vadd.f32 0.0, %v1161
        %v1163 = vpop.f32.mrb[0].mxu0
        %1164 = vmatprep.mubr.bf16.mxu0 %v1106
        %1165 = vmatmul.mubr.bf16.gmra.mrb[0].mxu0 %v1029
        %v1166 = vpop.f32.mrb[0].mxu0
        %v1167 = vadd.f32 0.0, %v1166
        %v1168 = vpop.f32.mrb[0].mxu0
        %v1169 = vpop.f32.mrb[0].mxu0
        %v1170 = vadd.f32 0.0, %v1169
        %v1171 = vpop.f32.mrb[0].mxu0
        %1172 = vdwg.mxu0
        %v1173 = vadd.f32 %v960, %v1143
        %v1174 = vadd.f32 %v963, %v1146
        %v1175 = vadd.f32 %v968, %v1151
        %v1176 = vadd.f32 %v971, %v1154
        %v1177 = vadd.f32 %v976, %v1159
        %v1178 = vadd.f32 %v979, %v1162
        %v1179 = vadd.f32 %v984, %v1167
        %v1180 = vadd.f32 %v987, %v1170
        %s1181 = scalar_lea.vmem %s2, 192
        %v1182 = vld [vmem:[%s1181] sm:$0xff]
        %v1183 = vld [vmem:[%s1181 + $0x8] sm:$0xff]
        %v1184 = vld [vmem:[%s1181 + $0x10] sm:$0xff]
        %v1185 = vld [vmem:[%s1181 + $0x18] sm:$0xff]
        %v1186 = vld [vmem:[%s1181 + $0x20] sm:$0xff]
        %v1187 = vld [vmem:[%s1181 + $0x28] sm:$0xff]
        %v1188 = vld [vmem:[%s1181 + $0x30] sm:$0xff]
        %v1189 = vld [vmem:[%s1181 + $0x38] sm:$0xff]
        %v1198 = vunpack.c.l.b16 %v1182
        %v1199 = vunpack.c.h.b16 %v1182
        %v1200 = vunpack.c.l.b16 %v1183
        %v1201 = vunpack.c.h.b16 %v1183
        %v1202 = vunpack.c.l.b16 %v1184
        %v1203 = vunpack.c.h.b16 %v1184
        %v1204 = vunpack.c.l.b16 %v1185
        %v1205 = vunpack.c.h.b16 %v1185
        %v1206 = vunpack.c.l.b16 %v1186
        %v1207 = vunpack.c.h.b16 %v1186
        %v1208 = vunpack.c.l.b16 %v1187
        %v1209 = vunpack.c.h.b16 %v1187
        %v1210 = vunpack.c.l.b16 %v1188
        %v1211 = vunpack.c.h.b16 %v1188
        %v1212 = vunpack.c.l.b16 %v1189
        %v1213 = vunpack.c.h.b16 %v1189
        %v1214 = vpack.c.b16 %v1200, %v1198
        %v1215 = vpack.c.b16 %v1201, %v1199
        %v1216 = vpack.c.b16 %v1204, %v1202
        %v1217 = vpack.c.b16 %v1205, %v1203
        %v1218 = vpack.c.b16 %v1208, %v1206
        %v1219 = vpack.c.b16 %v1209, %v1207
        %v1220 = vpack.c.b16 %v1212, %v1210
        %v1221 = vpack.c.b16 %v1213, %v1211
        %1226 = vrot.lane.b32.xlu0 %v615, 125
        %v1227 = vpop.permute.xlu0 %1226
        %1228 = vrot.lane.b32.xlu0 %v675, 125
        %v1229 = vpop.permute.xlu0 %1228
        %1230 = vrot.lane.b32.xlu0 %v616, 125
        %v1231 = vpop.permute.xlu0 %1230
        %1232 = vrot.lane.b32.xlu0 %v676, 125
        %v1233 = vpop.permute.xlu0 %1232
        %1234 = vrot.lane.b32.xlu0 %v617, 125
        %v1235 = vpop.permute.xlu0 %1234
        %1236 = vrot.lane.b32.xlu0 %v677, 125
        %v1237 = vpop.permute.xlu0 %1236
        %1238 = vrot.lane.b32.xlu0 %v618, 125
        %v1239 = vpop.permute.xlu0 %1238
        %1240 = vrot.lane.b32.xlu0 %v678, 125
        %v1241 = vpop.permute.xlu0 %1240
        %1242 = vrot.lane.b32.xlu0 %v619, 125
        %v1243 = vpop.permute.xlu0 %1242
        %1244 = vrot.lane.b32.xlu0 %v679, 125
        %v1245 = vpop.permute.xlu0 %1244
        %1246 = vrot.lane.b32.xlu0 %v620, 125
        %v1247 = vpop.permute.xlu0 %1246
        %1248 = vrot.lane.b32.xlu0 %v680, 125
        %v1249 = vpop.permute.xlu0 %1248
        %1250 = vrot.lane.b32.xlu0 %v621, 125
        %v1251 = vpop.permute.xlu0 %1250
        %1252 = vrot.lane.b32.xlu0 %v681, 125
        %v1253 = vpop.permute.xlu0 %1252
        %1254 = vrot.lane.b32.xlu0 %v622, 125
        %v1255 = vpop.permute.xlu0 %1254
        %1256 = vrot.lane.b32.xlu0 %v682, 125
        %v1257 = vpop.permute.xlu0 %1256
        %1258 = vrot.lane.b32.xlu0 %v623, 125
        %v1259 = vpop.permute.xlu0 %1258
        %1260 = vrot.lane.b32.xlu0 %v683, 125
        %v1261 = vpop.permute.xlu0 %1260
        %1262 = vrot.lane.b32.xlu0 %v624, 125
        %v1263 = vpop.permute.xlu0 %1262
        %1264 = vrot.lane.b32.xlu0 %v684, 125
        %v1265 = vpop.permute.xlu0 %1264
        %vm1266 = vcmask 1022976
        %v1267 = vsel %vm1266, %v1227, %v1229
        %v1268 = vsel %vm1266, %v1231, %v1233
        %v1269 = vsel %vm1266, %v1235, %v1237
        %v1270 = vsel %vm1266, %v1239, %v1241
        %v1271 = vsel %vm1266, %v1243, %v1245
        %v1272 = vsel %vm1266, %v1247, %v1249
        %v1273 = vsel %vm1266, %v1251, %v1253
        %v1274 = vsel %vm1266, %v1255, %v1257
        %v1275 = vsel %vm1266, %v1259, %v1261
        %v1276 = vsel %vm1266, %v1263, %v1265
        %v1288 = vsel %vm799, %v1215, 0
        %v1291 = vsel %vm799, %v1217, 0
        %v1294 = vsel %vm799, %v1219, 0
        %v1297 = vsel %vm799, %v1221, 0
        %1299 = vmatprep.subr.bf16.mxu0 0
        %1300 = vmatpush1.bf16.msra.mxu0 %v1267
        %1301 = vmatprep.subr.bf16.mxu0 0
        %1302 = vmatpush1.bf16.msra.mxu0 %v1268
        %1303 = vmatprep.subr.bf16.mxu0 0
        %1304 = vmatpush1.bf16.msra.mxu0 %v1269
        %1305 = vmatprep.subr.bf16.mxu0 0
        %1306 = vmatpush1.bf16.msra.mxu0 %v1270
        %1307 = vmatprep.subr.bf16.mxu0 0
        %1308 = vmatpush1.bf16.msra.mxu0 %v1271
        %1309 = vmatprep.subr.bf16.mxu0 0
        %1310 = vmatpush1.bf16.msra.mxu0 %v1272
        %1311 = vmatprep.subr.bf16.mxu0 0
        %1312 = vmatpush1.bf16.msra.mxu0 %v1273
        %1313 = vmatprep.subr.bf16.mxu0 0
        %1314 = vmatpush1.bf16.msra.mxu0 %v1274
        %1315 = vmatprep.subr.bf16.mxu0 0
        %1316 = vmatpush1.bf16.msra.mxu0 %v1275
        %1317 = vmatprep.subr.bf16.mxu0 0
        %1318 = vmatpush1.bf16.msra.mxu0 %v1276
        %1319 = vmatprep.subr.bf16.mxu0 0
        %1320 = vmatpush1.bf16.msra.mxu0 0
        %1321 = vmatprep.subr.bf16.mxu0 0
        %1322 = vmatpush1.bf16.msra.mxu0 0
        %1323 = vmatprep.subr.bf16.mxu0 0
        %1324 = vmatpush1.bf16.msra.mxu0 0
        %1325 = vmatprep.subr.bf16.mxu0 0
        %1326 = vmatpush1.bf16.msra.mxu0 0
        %1327 = vmatprep.subr.bf16.mxu0 0
        %1328 = vmatpush1.bf16.msra.mxu0 0
        %1329 = vmatprep.subr.bf16.mxu0 0
        %1330 = vmatpush1.bf16.msra.mxu0 0
        %1331 = vmatprep.mubr.bf16.mxu0 %v1288
        %1332 = vmatmul.mubr.bf16.gmra.mrb[0].mxu0 %v1214
        %v1333 = vpop.f32.mrb[0].mxu0
        %v1334 = vadd.f32 0.0, %v1333
        %v1335 = vpop.f32.mrb[0].mxu0
        %v1336 = vpop.f32.mrb[0].mxu0
        %v1337 = vadd.f32 0.0, %v1336
        %v1338 = vpop.f32.mrb[0].mxu0
        %1339 = vmatprep.mubr.bf16.mxu0 %v1291
        %1340 = vmatmul.mubr.bf16.gmra.mrb[0].mxu0 %v1216
        %v1341 = vpop.f32.mrb[0].mxu0
        %v1342 = vadd.f32 0.0, %v1341
        %v1343 = vpop.f32.mrb[0].mxu0
        %v1344 = vpop.f32.mrb[0].mxu0
        %v1345 = vadd.f32 0.0, %v1344
        %v1346 = vpop.f32.mrb[0].mxu0
        %1347 = vmatprep.mubr.bf16.mxu0 %v1294
        %1348 = vmatmul.mubr.bf16.gmra.mrb[0].mxu0 %v1218
        %v1349 = vpop.f32.mrb[0].mxu0
        %v1350 = vadd.f32 0.0, %v1349
        %v1351 = vpop.f32.mrb[0].mxu0
        %v1352 = vpop.f32.mrb[0].mxu0
        %v1353 = vadd.f32 0.0, %v1352
        %v1354 = vpop.f32.mrb[0].mxu0
        %1355 = vmatprep.mubr.bf16.mxu0 %v1297
        %1356 = vmatmul.mubr.bf16.gmra.mrb[0].mxu0 %v1220
        %v1357 = vpop.f32.mrb[0].mxu0
        %v1358 = vadd.f32 0.0, %v1357
        %v1359 = vpop.f32.mrb[0].mxu0
        %v1360 = vpop.f32.mrb[0].mxu0
        %v1361 = vadd.f32 0.0, %v1360
        %v1362 = vpop.f32.mrb[0].mxu0
        %1363 = vdwg.mxu0
        %v1364 = vadd.f32 %v1173, %v1334
        %v1365 = vadd.f32 %v1174, %v1337
        %v1366 = vadd.f32 %v1175, %v1342
        %v1367 = vadd.f32 %v1176, %v1345
        %v1368 = vadd.f32 %v1177, %v1350
        %v1369 = vadd.f32 %v1178, %v1353
        %v1370 = vadd.f32 %v1179, %v1358
        %v1371 = vadd.f32 %v1180, %v1361
        %s1372 = scalar_lea.vmem %s2, 256
        %v1373 = vld [vmem:[%s1372] sm:$0xff]
        %v1374 = vld [vmem:[%s1372 + $0x8] sm:$0xff]
        %v1375 = vld [vmem:[%s1372 + $0x10] sm:$0xff]
        %v1376 = vld [vmem:[%s1372 + $0x18] sm:$0xff]
        %v1377 = vld [vmem:[%s1372 + $0x20] sm:$0xff]
        %v1378 = vld [vmem:[%s1372 + $0x28] sm:$0xff]
        %v1379 = vld [vmem:[%s1372 + $0x30] sm:$0xff]
        %v1380 = vld [vmem:[%s1372 + $0x38] sm:$0xff]
        %v1389 = vunpack.c.l.b16 %v1373
        %v1390 = vunpack.c.h.b16 %v1373
        %v1391 = vunpack.c.l.b16 %v1374
        %v1392 = vunpack.c.h.b16 %v1374
        %v1393 = vunpack.c.l.b16 %v1375
        %v1394 = vunpack.c.h.b16 %v1375
        %v1395 = vunpack.c.l.b16 %v1376
        %v1396 = vunpack.c.h.b16 %v1376
        %v1397 = vunpack.c.l.b16 %v1377
        %v1398 = vunpack.c.h.b16 %v1377
        %v1399 = vunpack.c.l.b16 %v1378
        %v1400 = vunpack.c.h.b16 %v1378
        %v1401 = vunpack.c.l.b16 %v1379
        %v1402 = vunpack.c.h.b16 %v1379
        %v1403 = vunpack.c.l.b16 %v1380
        %v1404 = vunpack.c.h.b16 %v1380
        %v1405 = vpack.c.b16 %v1391, %v1389
        %v1406 = vpack.c.b16 %v1392, %v1390
        %v1407 = vpack.c.b16 %v1395, %v1393
        %v1408 = vpack.c.b16 %v1396, %v1394
        %v1409 = vpack.c.b16 %v1399, %v1397
        %v1410 = vpack.c.b16 %v1400, %v1398
        %v1411 = vpack.c.b16 %v1403, %v1401
        %v1412 = vpack.c.b16 %v1404, %v1402
        %1417 = vrot.lane.b32.xlu0 %v615, 124
        %v1418 = vpop.permute.xlu0 %1417
        %1419 = vrot.lane.b32.xlu0 %v675, 124
        %v1420 = vpop.permute.xlu0 %1419
        %1421 = vrot.lane.b32.xlu0 %v616, 124
        %v1422 = vpop.permute.xlu0 %1421
        %1423 = vrot.lane.b32.xlu0 %v676, 124
        %v1424 = vpop.permute.xlu0 %1423
        %1425 = vrot.lane.b32.xlu0 %v617, 124
        %v1426 = vpop.permute.xlu0 %1425
        %1427 = vrot.lane.b32.xlu0 %v677, 124
        %v1428 = vpop.permute.xlu0 %1427
        %1429 = vrot.lane.b32.xlu0 %v618, 124
        %v1430 = vpop.permute.xlu0 %1429
        %1431 = vrot.lane.b32.xlu0 %v678, 124
        %v1432 = vpop.permute.xlu0 %1431
        %1433 = vrot.lane.b32.xlu0 %v619, 124
        %v1434 = vpop.permute.xlu0 %1433
        %1435 = vrot.lane.b32.xlu0 %v679, 124
        %v1436 = vpop.permute.xlu0 %1435
        %1437 = vrot.lane.b32.xlu0 %v620, 124
        %v1438 = vpop.permute.xlu0 %1437
        %1439 = vrot.lane.b32.xlu0 %v680, 124
        %v1440 = vpop.permute.xlu0 %1439
        %1441 = vrot.lane.b32.xlu0 %v621, 124
        %v1442 = vpop.permute.xlu0 %1441
        %1443 = vrot.lane.b32.xlu0 %v681, 124
        %v1444 = vpop.permute.xlu0 %1443
        %1445 = vrot.lane.b32.xlu0 %v622, 124
        %v1446 = vpop.permute.xlu0 %1445
        %1447 = vrot.lane.b32.xlu0 %v682, 124
        %v1448 = vpop.permute.xlu0 %1447
        %1449 = vrot.lane.b32.xlu0 %v623, 124
        %v1450 = vpop.permute.xlu0 %1449
        %1451 = vrot.lane.b32.xlu0 %v683, 124
        %v1452 = vpop.permute.xlu0 %1451
        %1453 = vrot.lane.b32.xlu0 %v624, 124
        %v1454 = vpop.permute.xlu0 %1453
        %1455 = vrot.lane.b32.xlu0 %v684, 124
        %v1456 = vpop.permute.xlu0 %1455
        %vm1457 = vcmask 1014784
        %v1458 = vsel %vm1457, %v1418, %v1420
        %v1459 = vsel %vm1457, %v1422, %v1424
        %v1460 = vsel %vm1457, %v1426, %v1428
        %v1461 = vsel %vm1457, %v1430, %v1432
        %v1462 = vsel %vm1457, %v1434, %v1436
        %v1463 = vsel %vm1457, %v1438, %v1440
        %v1464 = vsel %vm1457, %v1442, %v1444
        %v1465 = vsel %vm1457, %v1446, %v1448
        %v1466 = vsel %vm1457, %v1450, %v1452
        %v1467 = vsel %vm1457, %v1454, %v1456
        %v1479 = vsel %vm799, %v1406, 0
        %v1482 = vsel %vm799, %v1408, 0
        %v1485 = vsel %vm799, %v1410, 0
        %v1488 = vsel %vm799, %v1412, 0
        %1490 = vmatprep.subr.bf16.mxu0 0
        %1491 = vmatpush1.bf16.msra.mxu0 %v1458
        %1492 = vmatprep.subr.bf16.mxu0 0
        %1493 = vmatpush1.bf16.msra.mxu0 %v1459
        %1494 = vmatprep.subr.bf16.mxu0 0
        %1495 = vmatpush1.bf16.msra.mxu0 %v1460
        %1496 = vmatprep.subr.bf16.mxu0 0
        %1497 = vmatpush1.bf16.msra.mxu0 %v1461
        %1498 = vmatprep.subr.bf16.mxu0 0
        %1499 = vmatpush1.bf16.msra.mxu0 %v1462
        %1500 = vmatprep.subr.bf16.mxu0 0
        %1501 = vmatpush1.bf16.msra.mxu0 %v1463
        %1502 = vmatprep.subr.bf16.mxu0 0
        %1503 = vmatpush1.bf16.msra.mxu0 %v1464
        %1504 = vmatprep.subr.bf16.mxu0 0
        %1505 = vmatpush1.bf16.msra.mxu0 %v1465
        %1506 = vmatprep.subr.bf16.mxu0 0
        %1507 = vmatpush1.bf16.msra.mxu0 %v1466
        %1508 = vmatprep.subr.bf16.mxu0 0
        %1509 = vmatpush1.bf16.msra.mxu0 %v1467
        %1510 = vmatprep.subr.bf16.mxu0 0
        %1511 = vmatpush1.bf16.msra.mxu0 0
        %1512 = vmatprep.subr.bf16.mxu0 0
        %1513 = vmatpush1.bf16.msra.mxu0 0
        %1514 = vmatprep.subr.bf16.mxu0 0
        %1515 = vmatpush1.bf16.msra.mxu0 0
        %1516 = vmatprep.subr.bf16.mxu0 0
        %1517 = vmatpush1.bf16.msra.mxu0 0
        %1518 = vmatprep.subr.bf16.mxu0 0
        %1519 = vmatpush1.bf16.msra.mxu0 0
        %1520 = vmatprep.subr.bf16.mxu0 0
        %1521 = vmatpush1.bf16.msra.mxu0 0
        %1522 = vmatprep.mubr.bf16.mxu0 %v1479
        %1523 = vmatmul.mubr.bf16.gmra.mrb[0].mxu0 %v1405
        %v1524 = vpop.f32.mrb[0].mxu0
        %v1525 = vadd.f32 0.0, %v1524
        %v1526 = vpop.f32.mrb[0].mxu0
        %v1527 = vpop.f32.mrb[0].mxu0
        %v1528 = vadd.f32 0.0, %v1527
        %v1529 = vpop.f32.mrb[0].mxu0
        %1530 = vmatprep.mubr.bf16.mxu0 %v1482
        %1531 = vmatmul.mubr.bf16.gmra.mrb[0].mxu0 %v1407
        %v1532 = vpop.f32.mrb[0].mxu0
        %v1533 = vadd.f32 0.0, %v1532
        %v1534 = vpop.f32.mrb[0].mxu0
        %v1535 = vpop.f32.mrb[0].mxu0
        %v1536 = vadd.f32 0.0, %v1535
        %v1537 = vpop.f32.mrb[0].mxu0
        %1538 = vmatprep.mubr.bf16.mxu0 %v1485
        %1539 = vmatmul.mubr.bf16.gmra.mrb[0].mxu0 %v1409
        %v1540 = vpop.f32.mrb[0].mxu0
        %v1541 = vadd.f32 0.0, %v1540
        %v1542 = vpop.f32.mrb[0].mxu0
        %v1543 = vpop.f32.mrb[0].mxu0
        %v1544 = vadd.f32 0.0, %v1543
        %v1545 = vpop.f32.mrb[0].mxu0
        %1546 = vmatprep.mubr.bf16.mxu0 %v1488
        %1547 = vmatmul.mubr.bf16.gmra.mrb[0].mxu0 %v1411
        %v1548 = vpop.f32.mrb[0].mxu0
        %v1549 = vadd.f32 0.0, %v1548
        %v1550 = vpop.f32.mrb[0].mxu0
        %v1551 = vpop.f32.mrb[0].mxu0
        %v1552 = vadd.f32 0.0, %v1551
        %v1553 = vpop.f32.mrb[0].mxu0
        %1554 = vdwg.mxu0
        %v1555 = vadd.f32 %v1364, %v1525
        %v1556 = vadd.f32 %v1365, %v1528
        %v1557 = vadd.f32 %v1366, %v1533
        %v1558 = vadd.f32 %v1367, %v1536
        %v1559 = vadd.f32 %v1368, %v1541
        %v1560 = vadd.f32 %v1369, %v1544
        %v1561 = vadd.f32 %v1370, %v1549
        %v1562 = vadd.f32 %v1371, %v1552
        %s1563 = scalar_lea.vmem %s2, 320
        %v1564 = vld [vmem:[%s1563] sm:$0xff]
        %v1565 = vld [vmem:[%s1563 + $0x8] sm:$0xff]
        %v1566 = vld [vmem:[%s1563 + $0x10] sm:$0xff]
        %v1567 = vld [vmem:[%s1563 + $0x18] sm:$0xff]
        %v1568 = vld [vmem:[%s1563 + $0x20] sm:$0xff]
        %v1569 = vld [vmem:[%s1563 + $0x28] sm:$0xff]
        %v1570 = vld [vmem:[%s1563 + $0x30] sm:$0xff]
        %v1571 = vld [vmem:[%s1563 + $0x38] sm:$0xff]
        %v1580 = vunpack.c.l.b16 %v1564
        %v1581 = vunpack.c.h.b16 %v1564
        %v1582 = vunpack.c.l.b16 %v1565
        %v1583 = vunpack.c.h.b16 %v1565
        %v1584 = vunpack.c.l.b16 %v1566
        %v1585 = vunpack.c.h.b16 %v1566
        %v1586 = vunpack.c.l.b16 %v1567
        %v1587 = vunpack.c.h.b16 %v1567
        %v1588 = vunpack.c.l.b16 %v1568
        %v1589 = vunpack.c.h.b16 %v1568
        %v1590 = vunpack.c.l.b16 %v1569
        %v1591 = vunpack.c.h.b16 %v1569
        %v1592 = vunpack.c.l.b16 %v1570
        %v1593 = vunpack.c.h.b16 %v1570
        %v1594 = vunpack.c.l.b16 %v1571
        %v1595 = vunpack.c.h.b16 %v1571
        %v1596 = vpack.c.b16 %v1582, %v1580
        %v1597 = vpack.c.b16 %v1583, %v1581
        %v1598 = vpack.c.b16 %v1586, %v1584
        %v1599 = vpack.c.b16 %v1587, %v1585
        %v1600 = vpack.c.b16 %v1590, %v1588
        %v1601 = vpack.c.b16 %v1591, %v1589
        %v1602 = vpack.c.b16 %v1594, %v1592
        %v1603 = vpack.c.b16 %v1595, %v1593
        %1608 = vrot.lane.b32.xlu0 %v615, 123
        %v1609 = vpop.permute.xlu0 %1608
        %1610 = vrot.lane.b32.xlu0 %v675, 123
        %v1611 = vpop.permute.xlu0 %1610
        %1612 = vrot.lane.b32.xlu0 %v616, 123
        %v1613 = vpop.permute.xlu0 %1612
        %1614 = vrot.lane.b32.xlu0 %v676, 123
        %v1615 = vpop.permute.xlu0 %1614
        %1616 = vrot.lane.b32.xlu0 %v617, 123
        %v1617 = vpop.permute.xlu0 %1616
        %1618 = vrot.lane.b32.xlu0 %v677, 123
        %v1619 = vpop.permute.xlu0 %1618
        %1620 = vrot.lane.b32.xlu0 %v618, 123
        %v1621 = vpop.permute.xlu0 %1620
        %1622 = vrot.lane.b32.xlu0 %v678, 123
        %v1623 = vpop.permute.xlu0 %1622
        %1624 = vrot.lane.b32.xlu0 %v619, 123
        %v1625 = vpop.permute.xlu0 %1624
        %1626 = vrot.lane.b32.xlu0 %v679, 123
        %v1627 = vpop.permute.xlu0 %1626
        %1628 = vrot.lane.b32.xlu0 %v620, 123
        %v1629 = vpop.permute.xlu0 %1628
        %1630 = vrot.lane.b32.xlu0 %v680, 123
        %v1631 = vpop.permute.xlu0 %1630
        %1632 = vrot.lane.b32.xlu0 %v621, 123
        %v1633 = vpop.permute.xlu0 %1632
        %1634 = vrot.lane.b32.xlu0 %v681, 123
        %v1635 = vpop.permute.xlu0 %1634
        %1636 = vrot.lane.b32.xlu0 %v622, 123
        %v1637 = vpop.permute.xlu0 %1636
        %1638 = vrot.lane.b32.xlu0 %v682, 123
        %v1639 = vpop.permute.xlu0 %1638
        %1640 = vrot.lane.b32.xlu0 %v623, 123
        %v1641 = vpop.permute.xlu0 %1640
        %1642 = vrot.lane.b32.xlu0 %v683, 123
        %v1643 = vpop.permute.xlu0 %1642
        %1644 = vrot.lane.b32.xlu0 %v624, 123
        %v1645 = vpop.permute.xlu0 %1644
        %1646 = vrot.lane.b32.xlu0 %v684, 123
        %v1647 = vpop.permute.xlu0 %1646
        %vm1648 = vcmask 1006592
        %v1649 = vsel %vm1648, %v1609, %v1611
        %v1650 = vsel %vm1648, %v1613, %v1615
        %v1651 = vsel %vm1648, %v1617, %v1619
        %v1652 = vsel %vm1648, %v1621, %v1623
        %v1653 = vsel %vm1648, %v1625, %v1627
        %v1654 = vsel %vm1648, %v1629, %v1631
        %v1655 = vsel %vm1648, %v1633, %v1635
        %v1656 = vsel %vm1648, %v1637, %v1639
        %v1657 = vsel %vm1648, %v1641, %v1643
        %v1658 = vsel %vm1648, %v1645, %v1647
        %v1670 = vsel %vm799, %v1597, 0
        %v1673 = vsel %vm799, %v1599, 0
        %v1676 = vsel %vm799, %v1601, 0
        %v1679 = vsel %vm799, %v1603, 0
        %1681 = vmatprep.subr.bf16.mxu0 0
        %1682 = vmatpush1.bf16.msra.mxu0 %v1649
        %1683 = vmatprep.subr.bf16.mxu0 0
        %1684 = vmatpush1.bf16.msra.mxu0 %v1650
        %1685 = vmatprep.subr.bf16.mxu0 0
        %1686 = vmatpush1.bf16.msra.mxu0 %v1651
        %1687 = vmatprep.subr.bf16.mxu0 0
        %1688 = vmatpush1.bf16.msra.mxu0 %v1652
        %1689 = vmatprep.subr.bf16.mxu0 0
        %1690 = vmatpush1.bf16.msra.mxu0 %v1653
        %1691 = vmatprep.subr.bf16.mxu0 0
        %1692 = vmatpush1.bf16.msra.mxu0 %v1654
        %1693 = vmatprep.subr.bf16.mxu0 0
        %1694 = vmatpush1.bf16.msra.mxu0 %v1655
        %1695 = vmatprep.subr.bf16.mxu0 0
        %1696 = vmatpush1.bf16.msra.mxu0 %v1656
        %1697 = vmatprep.subr.bf16.mxu0 0
        %1698 = vmatpush1.bf16.msra.mxu0 %v1657
        %1699 = vmatprep.subr.bf16.mxu0 0
        %1700 = vmatpush1.bf16.msra.mxu0 %v1658
        %1701 = vmatprep.subr.bf16.mxu0 0
        %1702 = vmatpush1.bf16.msra.mxu0 0
        %1703 = vmatprep.subr.bf16.mxu0 0
        %1704 = vmatpush1.bf16.msra.mxu0 0
        %1705 = vmatprep.subr.bf16.mxu0 0
        %1706 = vmatpush1.bf16.msra.mxu0 0
        %1707 = vmatprep.subr.bf16.mxu0 0
        %1708 = vmatpush1.bf16.msra.mxu0 0
        %1709 = vmatprep.subr.bf16.mxu0 0
        %1710 = vmatpush1.bf16.msra.mxu0 0
        %1711 = vmatprep.subr.bf16.mxu0 0
        %1712 = vmatpush1.bf16.msra.mxu0 0
        %1713 = vmatprep.mubr.bf16.mxu0 %v1670
        %1714 = vmatmul.mubr.bf16.gmra.mrb[0].mxu0 %v1596
        %v1715 = vpop.f32.mrb[0].mxu0
        %v1716 = vadd.f32 0.0, %v1715
        %v1717 = vpop.f32.mrb[0].mxu0
        %v1718 = vpop.f32.mrb[0].mxu0
        %v1719 = vadd.f32 0.0, %v1718
        %v1720 = vpop.f32.mrb[0].mxu0
        %1721 = vmatprep.mubr.bf16.mxu0 %v1673
        %1722 = vmatmul.mubr.bf16.gmra.mrb[0].mxu0 %v1598
        %v1723 = vpop.f32.mrb[0].mxu0
        %v1724 = vadd.f32 0.0, %v1723
        %v1725 = vpop.f32.mrb[0].mxu0
        %v1726 = vpop.f32.mrb[0].mxu0
        %v1727 = vadd.f32 0.0, %v1726
        %v1728 = vpop.f32.mrb[0].mxu0
        %1729 = vmatprep.mubr.bf16.mxu0 %v1676
        %1730 = vmatmul.mubr.bf16.gmra.mrb[0].mxu0 %v1600
        %v1731 = vpop.f32.mrb[0].mxu0
        %v1732 = vadd.f32 0.0, %v1731
        %v1733 = vpop.f32.mrb[0].mxu0
        %v1734 = vpop.f32.mrb[0].mxu0
        %v1735 = vadd.f32 0.0, %v1734
        %v1736 = vpop.f32.mrb[0].mxu0
        %1737 = vmatprep.mubr.bf16.mxu0 %v1679
        %1738 = vmatmul.mubr.bf16.gmra.mrb[0].mxu0 %v1602
        %v1739 = vpop.f32.mrb[0].mxu0
        %v1740 = vadd.f32 0.0, %v1739
        %v1741 = vpop.f32.mrb[0].mxu0
        %v1742 = vpop.f32.mrb[0].mxu0
        %v1743 = vadd.f32 0.0, %v1742
        %v1744 = vpop.f32.mrb[0].mxu0
        %1745 = vdwg.mxu0
        %v1746 = vadd.f32 %v1555, %v1716
        %v1747 = vadd.f32 %v1556, %v1719
        %v1748 = vadd.f32 %v1557, %v1724
        %v1749 = vadd.f32 %v1558, %v1727
        %v1750 = vadd.f32 %v1559, %v1732
        %v1751 = vadd.f32 %v1560, %v1735
        %v1752 = vadd.f32 %v1561, %v1740
        %v1753 = vadd.f32 %v1562, %v1743
        %s1754 = scalar_lea.vmem %s2, 384
        %v1755 = vld [vmem:[%s1754] sm:$0xff]
        %v1756 = vld [vmem:[%s1754 + $0x8] sm:$0xff]
        %v1757 = vld [vmem:[%s1754 + $0x10] sm:$0xff]
        %v1758 = vld [vmem:[%s1754 + $0x18] sm:$0xff]
        %v1759 = vld [vmem:[%s1754 + $0x20] sm:$0xff]
        %v1760 = vld [vmem:[%s1754 + $0x28] sm:$0xff]
        %v1761 = vld [vmem:[%s1754 + $0x30] sm:$0xff]
        %v1762 = vld [vmem:[%s1754 + $0x38] sm:$0xff]
        %v1771 = vunpack.c.l.b16 %v1755
        %v1772 = vunpack.c.h.b16 %v1755
        %v1773 = vunpack.c.l.b16 %v1756
        %v1774 = vunpack.c.h.b16 %v1756
        %v1775 = vunpack.c.l.b16 %v1757
        %v1776 = vunpack.c.h.b16 %v1757
        %v1777 = vunpack.c.l.b16 %v1758
        %v1778 = vunpack.c.h.b16 %v1758
        %v1779 = vunpack.c.l.b16 %v1759
        %v1780 = vunpack.c.h.b16 %v1759
        %v1781 = vunpack.c.l.b16 %v1760
        %v1782 = vunpack.c.h.b16 %v1760
        %v1783 = vunpack.c.l.b16 %v1761
        %v1784 = vunpack.c.h.b16 %v1761
        %v1785 = vunpack.c.l.b16 %v1762
        %v1786 = vunpack.c.h.b16 %v1762
        %v1787 = vpack.c.b16 %v1773, %v1771
        %v1788 = vpack.c.b16 %v1774, %v1772
        %v1789 = vpack.c.b16 %v1777, %v1775
        %v1790 = vpack.c.b16 %v1778, %v1776
        %v1791 = vpack.c.b16 %v1781, %v1779
        %v1792 = vpack.c.b16 %v1782, %v1780
        %v1793 = vpack.c.b16 %v1785, %v1783
        %v1794 = vpack.c.b16 %v1786, %v1784
        %1799 = vrot.lane.b32.xlu0 %v615, 122
        %v1800 = vpop.permute.xlu0 %1799
        %1801 = vrot.lane.b32.xlu0 %v675, 122
        %v1802 = vpop.permute.xlu0 %1801
        %1803 = vrot.lane.b32.xlu0 %v616, 122
        %v1804 = vpop.permute.xlu0 %1803
        %1805 = vrot.lane.b32.xlu0 %v676, 122
        %v1806 = vpop.permute.xlu0 %1805
        %1807 = vrot.lane.b32.xlu0 %v617, 122
        %v1808 = vpop.permute.xlu0 %1807
        %1809 = vrot.lane.b32.xlu0 %v677, 122
        %v1810 = vpop.permute.xlu0 %1809
        %1811 = vrot.lane.b32.xlu0 %v618, 122
        %v1812 = vpop.permute.xlu0 %1811
        %1813 = vrot.lane.b32.xlu0 %v678, 122
        %v1814 = vpop.permute.xlu0 %1813
        %1815 = vrot.lane.b32.xlu0 %v619, 122
        %v1816 = vpop.permute.xlu0 %1815
        %1817 = vrot.lane.b32.xlu0 %v679, 122
        %v1818 = vpop.permute.xlu0 %1817
        %1819 = vrot.lane.b32.xlu0 %v620, 122
        %v1820 = vpop.permute.xlu0 %1819
        %1821 = vrot.lane.b32.xlu0 %v680, 122
        %v1822 = vpop.permute.xlu0 %1821
        %1823 = vrot.lane.b32.xlu0 %v621, 122
        %v1824 = vpop.permute.xlu0 %1823
        %1825 = vrot.lane.b32.xlu0 %v681, 122
        %v1826 = vpop.permute.xlu0 %1825
        %1827 = vrot.lane.b32.xlu0 %v622, 122
        %v1828 = vpop.permute.xlu0 %1827
        %1829 = vrot.lane.b32.xlu0 %v682, 122
        %v1830 = vpop.permute.xlu0 %1829
        %1831 = vrot.lane.b32.xlu0 %v623, 122
        %v1832 = vpop.permute.xlu0 %1831
        %1833 = vrot.lane.b32.xlu0 %v683, 122
        %v1834 = vpop.permute.xlu0 %1833
        %1835 = vrot.lane.b32.xlu0 %v624, 122
        %v1836 = vpop.permute.xlu0 %1835
        %1837 = vrot.lane.b32.xlu0 %v684, 122
        %v1838 = vpop.permute.xlu0 %1837
        %vm1839 = vcmask 998400
        %v1840 = vsel %vm1839, %v1800, %v1802
        %v1841 = vsel %vm1839, %v1804, %v1806
        %v1842 = vsel %vm1839, %v1808, %v1810
        %v1843 = vsel %vm1839, %v1812, %v1814
        %v1844 = vsel %vm1839, %v1816, %v1818
        %v1845 = vsel %vm1839, %v1820, %v1822
        %v1846 = vsel %vm1839, %v1824, %v1826
        %v1847 = vsel %vm1839, %v1828, %v1830
        %v1848 = vsel %vm1839, %v1832, %v1834
        %v1849 = vsel %vm1839, %v1836, %v1838
        %v1861 = vsel %vm799, %v1788, 0
        %v1864 = vsel %vm799, %v1790, 0
        %v1867 = vsel %vm799, %v1792, 0
        %v1870 = vsel %vm799, %v1794, 0
        %1872 = vmatprep.subr.bf16.mxu0 0
        %1873 = vmatpush1.bf16.msra.mxu0 %v1840
        %1874 = vmatprep.subr.bf16.mxu0 0
        %1875 = vmatpush1.bf16.msra.mxu0 %v1841
        %1876 = vmatprep.subr.bf16.mxu0 0
        %1877 = vmatpush1.bf16.msra.mxu0 %v1842
        %1878 = vmatprep.subr.bf16.mxu0 0
        %1879 = vmatpush1.bf16.msra.mxu0 %v1843
        %1880 = vmatprep.subr.bf16.mxu0 0
        %1881 = vmatpush1.bf16.msra.mxu0 %v1844
        %1882 = vmatprep.subr.bf16.mxu0 0
        %1883 = vmatpush1.bf16.msra.mxu0 %v1845
        %1884 = vmatprep.subr.bf16.mxu0 0
        %1885 = vmatpush1.bf16.msra.mxu0 %v1846
        %1886 = vmatprep.subr.bf16.mxu0 0
        %1887 = vmatpush1.bf16.msra.mxu0 %v1847
        %1888 = vmatprep.subr.bf16.mxu0 0
        %1889 = vmatpush1.bf16.msra.mxu0 %v1848
        %1890 = vmatprep.subr.bf16.mxu0 0
        %1891 = vmatpush1.bf16.msra.mxu0 %v1849
        %1892 = vmatprep.subr.bf16.mxu0 0
        %1893 = vmatpush1.bf16.msra.mxu0 0
        %1894 = vmatprep.subr.bf16.mxu0 0
        %1895 = vmatpush1.bf16.msra.mxu0 0
        %1896 = vmatprep.subr.bf16.mxu0 0
        %1897 = vmatpush1.bf16.msra.mxu0 0
        %1898 = vmatprep.subr.bf16.mxu0 0
        %1899 = vmatpush1.bf16.msra.mxu0 0
        %1900 = vmatprep.subr.bf16.mxu0 0
        %1901 = vmatpush1.bf16.msra.mxu0 0
        %1902 = vmatprep.subr.bf16.mxu0 0
        %1903 = vmatpush1.bf16.msra.mxu0 0
        %1904 = vmatprep.mubr.bf16.mxu0 %v1861
        %1905 = vmatmul.mubr.bf16.gmra.mrb[0].mxu0 %v1787
        %v1906 = vpop.f32.mrb[0].mxu0
        %v1907 = vadd.f32 0.0, %v1906
        %v1908 = vpop.f32.mrb[0].mxu0
        %v1909 = vpop.f32.mrb[0].mxu0
        %v1910 = vadd.f32 0.0, %v1909
        %v1911 = vpop.f32.mrb[0].mxu0
        %1912 = vmatprep.mubr.bf16.mxu0 %v1864
        %1913 = vmatmul.mubr.bf16.gmra.mrb[0].mxu0 %v1789
        %v1914 = vpop.f32.mrb[0].mxu0
        %v1915 = vadd.f32 0.0, %v1914
        %v1916 = vpop.f32.mrb[0].mxu0
        %v1917 = vpop.f32.mrb[0].mxu0
        %v1918 = vadd.f32 0.0, %v1917
        %v1919 = vpop.f32.mrb[0].mxu0
        %1920 = vmatprep.mubr.bf16.mxu0 %v1867
        %1921 = vmatmul.mubr.bf16.gmra.mrb[0].mxu0 %v1791
        %v1922 = vpop.f32.mrb[0].mxu0
        %v1923 = vadd.f32 0.0, %v1922
        %v1924 = vpop.f32.mrb[0].mxu0
        %v1925 = vpop.f32.mrb[0].mxu0
        %v1926 = vadd.f32 0.0, %v1925
        %v1927 = vpop.f32.mrb[0].mxu0
        %1928 = vmatprep.mubr.bf16.mxu0 %v1870
        %1929 = vmatmul.mubr.bf16.gmra.mrb[0].mxu0 %v1793
        %v1930 = vpop.f32.mrb[0].mxu0
        %v1931 = vadd.f32 0.0, %v1930
        %v1932 = vpop.f32.mrb[0].mxu0
        %v1933 = vpop.f32.mrb[0].mxu0
        %v1934 = vadd.f32 0.0, %v1933
        %v1935 = vpop.f32.mrb[0].mxu0
        %1936 = vdwg.mxu0
        %v1937 = vadd.f32 %v1746, %v1907
        %v1938 = vadd.f32 %v1747, %v1910
        %v1939 = vadd.f32 %v1748, %v1915
        %v1940 = vadd.f32 %v1749, %v1918
        %v1941 = vadd.f32 %v1750, %v1923
        %v1942 = vadd.f32 %v1751, %v1926
        %v1943 = vadd.f32 %v1752, %v1931
        %v1944 = vadd.f32 %v1753, %v1934
        %s1945 = scalar_lea.vmem %s2, 448
        %v1946 = vld [vmem:[%s1945] sm:$0xff]
        %v1947 = vld [vmem:[%s1945 + $0x8] sm:$0xff]
        %v1948 = vld [vmem:[%s1945 + $0x10] sm:$0xff]
        %v1949 = vld [vmem:[%s1945 + $0x18] sm:$0xff]
        %v1950 = vld [vmem:[%s1945 + $0x20] sm:$0xff]
        %v1951 = vld [vmem:[%s1945 + $0x28] sm:$0xff]
        %v1952 = vld [vmem:[%s1945 + $0x30] sm:$0xff]
        %v1953 = vld [vmem:[%s1945 + $0x38] sm:$0xff]
        %v1962 = vunpack.c.l.b16 %v1946
        %v1963 = vunpack.c.h.b16 %v1946
        %v1964 = vunpack.c.l.b16 %v1947
        %v1965 = vunpack.c.h.b16 %v1947
        %v1966 = vunpack.c.l.b16 %v1948
        %v1967 = vunpack.c.h.b16 %v1948
        %v1968 = vunpack.c.l.b16 %v1949
        %v1969 = vunpack.c.h.b16 %v1949
        %v1970 = vunpack.c.l.b16 %v1950
        %v1971 = vunpack.c.h.b16 %v1950
        %v1972 = vunpack.c.l.b16 %v1951
        %v1973 = vunpack.c.h.b16 %v1951
        %v1974 = vunpack.c.l.b16 %v1952
        %v1975 = vunpack.c.h.b16 %v1952
        %v1976 = vunpack.c.l.b16 %v1953
        %v1977 = vunpack.c.h.b16 %v1953
        %v1978 = vpack.c.b16 %v1964, %v1962
        %v1979 = vpack.c.b16 %v1965, %v1963
        %v1980 = vpack.c.b16 %v1968, %v1966
        %v1981 = vpack.c.b16 %v1969, %v1967
        %v1982 = vpack.c.b16 %v1972, %v1970
        %v1983 = vpack.c.b16 %v1973, %v1971
        %v1984 = vpack.c.b16 %v1976, %v1974
        %v1985 = vpack.c.b16 %v1977, %v1975
        %1990 = vrot.lane.b32.xlu0 %v615, 121
        %v1991 = vpop.permute.xlu0 %1990
        %1992 = vrot.lane.b32.xlu0 %v675, 121
        %v1993 = vpop.permute.xlu0 %1992
        %1994 = vrot.lane.b32.xlu0 %v616, 121
        %v1995 = vpop.permute.xlu0 %1994
        %1996 = vrot.lane.b32.xlu0 %v676, 121
        %v1997 = vpop.permute.xlu0 %1996
        %1998 = vrot.lane.b32.xlu0 %v617, 121
        %v1999 = vpop.permute.xlu0 %1998
        %2000 = vrot.lane.b32.xlu0 %v677, 121
        %v2001 = vpop.permute.xlu0 %2000
        %2002 = vrot.lane.b32.xlu0 %v618, 121
        %v2003 = vpop.permute.xlu0 %2002
        %2004 = vrot.lane.b32.xlu0 %v678, 121
        %v2005 = vpop.permute.xlu0 %2004
        %2006 = vrot.lane.b32.xlu0 %v619, 121
        %v2007 = vpop.permute.xlu0 %2006
        %2008 = vrot.lane.b32.xlu0 %v679, 121
        %v2009 = vpop.permute.xlu0 %2008
        %2010 = vrot.lane.b32.xlu0 %v620, 121
        %v2011 = vpop.permute.xlu0 %2010
        %2012 = vrot.lane.b32.xlu0 %v680, 121
        %v2013 = vpop.permute.xlu0 %2012
        %2014 = vrot.lane.b32.xlu0 %v621, 121
        %v2015 = vpop.permute.xlu0 %2014
        %2016 = vrot.lane.b32.xlu0 %v681, 121
        %v2017 = vpop.permute.xlu0 %2016
        %2018 = vrot.lane.b32.xlu0 %v622, 121
        %v2019 = vpop.permute.xlu0 %2018
        %2020 = vrot.lane.b32.xlu0 %v682, 121
        %v2021 = vpop.permute.xlu0 %2020
        %2022 = vrot.lane.b32.xlu0 %v623, 121
        %v2023 = vpop.permute.xlu0 %2022
        %2024 = vrot.lane.b32.xlu0 %v683, 121
        %v2025 = vpop.permute.xlu0 %2024
        %2026 = vrot.lane.b32.xlu0 %v624, 121
        %v2027 = vpop.permute.xlu0 %2026
        %2028 = vrot.lane.b32.xlu0 %v684, 121
        %v2029 = vpop.permute.xlu0 %2028
        %vm2030 = vcmask 990208
        %v2031 = vsel %vm2030, %v1991, %v1993
        %v2032 = vsel %vm2030, %v1995, %v1997
        %v2033 = vsel %vm2030, %v1999, %v2001
        %v2034 = vsel %vm2030, %v2003, %v2005
        %v2035 = vsel %vm2030, %v2007, %v2009
        %v2036 = vsel %vm2030, %v2011, %v2013
        %v2037 = vsel %vm2030, %v2015, %v2017
        %v2038 = vsel %vm2030, %v2019, %v2021
        %v2039 = vsel %vm2030, %v2023, %v2025
        %v2040 = vsel %vm2030, %v2027, %v2029
        %v2052 = vsel %vm799, %v1979, 0
        %v2055 = vsel %vm799, %v1981, 0
        %v2058 = vsel %vm799, %v1983, 0
        %v2061 = vsel %vm799, %v1985, 0
        %2063 = vmatprep.subr.bf16.mxu0 0
        %2064 = vmatpush1.bf16.msra.mxu0 %v2031
        %2065 = vmatprep.subr.bf16.mxu0 0
        %2066 = vmatpush1.bf16.msra.mxu0 %v2032
        %2067 = vmatprep.subr.bf16.mxu0 0
        %2068 = vmatpush1.bf16.msra.mxu0 %v2033
        %2069 = vmatprep.subr.bf16.mxu0 0
        %2070 = vmatpush1.bf16.msra.mxu0 %v2034
        %2071 = vmatprep.subr.bf16.mxu0 0
        %2072 = vmatpush1.bf16.msra.mxu0 %v2035
        %2073 = vmatprep.subr.bf16.mxu0 0
        %2074 = vmatpush1.bf16.msra.mxu0 %v2036
        %2075 = vmatprep.subr.bf16.mxu0 0
        %2076 = vmatpush1.bf16.msra.mxu0 %v2037
        %2077 = vmatprep.subr.bf16.mxu0 0
        %2078 = vmatpush1.bf16.msra.mxu0 %v2038
        %2079 = vmatprep.subr.bf16.mxu0 0
        %2080 = vmatpush1.bf16.msra.mxu0 %v2039
        %2081 = vmatprep.subr.bf16.mxu0 0
        %2082 = vmatpush1.bf16.msra.mxu0 %v2040
        %2083 = vmatprep.subr.bf16.mxu0 0
        %2084 = vmatpush1.bf16.msra.mxu0 0
        %2085 = vmatprep.subr.bf16.mxu0 0
        %2086 = vmatpush1.bf16.msra.mxu0 0
        %2087 = vmatprep.subr.bf16.mxu0 0
        %2088 = vmatpush1.bf16.msra.mxu0 0
        %2089 = vmatprep.subr.bf16.mxu0 0
        %2090 = vmatpush1.bf16.msra.mxu0 0
        %2091 = vmatprep.subr.bf16.mxu0 0
        %2092 = vmatpush1.bf16.msra.mxu0 0
        %2093 = vmatprep.subr.bf16.mxu0 0
        %2094 = vmatpush1.bf16.msra.mxu0 0
        %2095 = vmatprep.mubr.bf16.mxu0 %v2052
        %2096 = vmatmul.mubr.bf16.gmra.mrb[0].mxu0 %v1978
        %v2097 = vpop.f32.mrb[0].mxu0
        %v2098 = vadd.f32 0.0, %v2097
        %v2099 = vpop.f32.mrb[0].mxu0
        %v2100 = vpop.f32.mrb[0].mxu0
        %v2101 = vadd.f32 0.0, %v2100
        %v2102 = vpop.f32.mrb[0].mxu0
        %2103 = vmatprep.mubr.bf16.mxu0 %v2055
        %2104 = vmatmul.mubr.bf16.gmra.mrb[0].mxu0 %v1980
        %v2105 = vpop.f32.mrb[0].mxu0
        %v2106 = vadd.f32 0.0, %v2105
        %v2107 = vpop.f32.mrb[0].mxu0
        %v2108 = vpop.f32.mrb[0].mxu0
        %v2109 = vadd.f32 0.0, %v2108
        %v2110 = vpop.f32.mrb[0].mxu0
        %2111 = vmatprep.mubr.bf16.mxu0 %v2058
        %2112 = vmatmul.mubr.bf16.gmra.mrb[0].mxu0 %v1982
        %v2113 = vpop.f32.mrb[0].mxu0
        %v2114 = vadd.f32 0.0, %v2113
        %v2115 = vpop.f32.mrb[0].mxu0
        %v2116 = vpop.f32.mrb[0].mxu0
        %v2117 = vadd.f32 0.0, %v2116
        %v2118 = vpop.f32.mrb[0].mxu0
        %2119 = vmatprep.mubr.bf16.mxu0 %v2061
        %2120 = vmatmul.mubr.bf16.gmra.mrb[0].mxu0 %v1984
        %v2121 = vpop.f32.mrb[0].mxu0
        %v2122 = vadd.f32 0.0, %v2121
        %v2123 = vpop.f32.mrb[0].mxu0
        %v2124 = vpop.f32.mrb[0].mxu0
        %v2125 = vadd.f32 0.0, %v2124
        %v2126 = vpop.f32.mrb[0].mxu0
        %2127 = vdwg.mxu0
        %v2128 = vadd.f32 %v1937, %v2098
        %v2129 = vadd.f32 %v1938, %v2101
        %v2130 = vadd.f32 %v1939, %v2106
        %v2131 = vadd.f32 %v1940, %v2109
        %v2132 = vadd.f32 %v1941, %v2114
        %v2133 = vadd.f32 %v1942, %v2117
        %v2134 = vadd.f32 %v1943, %v2122
        %v2135 = vadd.f32 %v1944, %v2125
        %s2136 = scalar_lea.vmem %s2, 512
        %v2137 = vld [vmem:[%s2136] sm:$0xff]
        %v2138 = vld [vmem:[%s2136 + $0x8] sm:$0xff]
        %v2139 = vld [vmem:[%s2136 + $0x10] sm:$0xff]
        %v2140 = vld [vmem:[%s2136 + $0x18] sm:$0xff]
        %v2141 = vld [vmem:[%s2136 + $0x20] sm:$0xff]
        %v2142 = vld [vmem:[%s2136 + $0x28] sm:$0xff]
        %v2143 = vld [vmem:[%s2136 + $0x30] sm:$0xff]
        %v2144 = vld [vmem:[%s2136 + $0x38] sm:$0xff]
        %v2153 = vunpack.c.l.b16 %v2137
        %v2154 = vunpack.c.h.b16 %v2137
        %v2155 = vunpack.c.l.b16 %v2138
        %v2156 = vunpack.c.h.b16 %v2138
        %v2157 = vunpack.c.l.b16 %v2139
        %v2158 = vunpack.c.h.b16 %v2139
        %v2159 = vunpack.c.l.b16 %v2140
        %v2160 = vunpack.c.h.b16 %v2140
        %v2161 = vunpack.c.l.b16 %v2141
        %v2162 = vunpack.c.h.b16 %v2141
        %v2163 = vunpack.c.l.b16 %v2142
        %v2164 = vunpack.c.h.b16 %v2142
        %v2165 = vunpack.c.l.b16 %v2143
        %v2166 = vunpack.c.h.b16 %v2143
        %v2167 = vunpack.c.l.b16 %v2144
        %v2168 = vunpack.c.h.b16 %v2144
        %v2169 = vpack.c.b16 %v2155, %v2153
        %v2170 = vpack.c.b16 %v2156, %v2154
        %v2171 = vpack.c.b16 %v2159, %v2157
        %v2172 = vpack.c.b16 %v2160, %v2158
        %v2173 = vpack.c.b16 %v2163, %v2161
        %v2174 = vpack.c.b16 %v2164, %v2162
        %v2175 = vpack.c.b16 %v2167, %v2165
        %v2176 = vpack.c.b16 %v2168, %v2166
        %2181 = vrot.lane.b32.xlu0 %v615, 120
        %v2182 = vpop.permute.xlu0 %2181
        %2183 = vrot.lane.b32.xlu0 %v675, 120
        %v2184 = vpop.permute.xlu0 %2183
        %2185 = vrot.lane.b32.xlu0 %v616, 120
        %v2186 = vpop.permute.xlu0 %2185
        %2187 = vrot.lane.b32.xlu0 %v676, 120
        %v2188 = vpop.permute.xlu0 %2187
        %2189 = vrot.lane.b32.xlu0 %v617, 120
        %v2190 = vpop.permute.xlu0 %2189
        %2191 = vrot.lane.b32.xlu0 %v677, 120
        %v2192 = vpop.permute.xlu0 %2191
        %2193 = vrot.lane.b32.xlu0 %v618, 120
        %v2194 = vpop.permute.xlu0 %2193
        %2195 = vrot.lane.b32.xlu0 %v678, 120
        %v2196 = vpop.permute.xlu0 %2195
        %2197 = vrot.lane.b32.xlu0 %v619, 120
        %v2198 = vpop.permute.xlu0 %2197
        %2199 = vrot.lane.b32.xlu0 %v679, 120
        %v2200 = vpop.permute.xlu0 %2199
        %2201 = vrot.lane.b32.xlu0 %v620, 120
        %v2202 = vpop.permute.xlu0 %2201
        %2203 = vrot.lane.b32.xlu0 %v680, 120
        %v2204 = vpop.permute.xlu0 %2203
        %2205 = vrot.lane.b32.xlu0 %v621, 120
        %v2206 = vpop.permute.xlu0 %2205
        %2207 = vrot.lane.b32.xlu0 %v681, 120
        %v2208 = vpop.permute.xlu0 %2207
        %2209 = vrot.lane.b32.xlu0 %v622, 120
        %v2210 = vpop.permute.xlu0 %2209
        %2211 = vrot.lane.b32.xlu0 %v682, 120
        %v2212 = vpop.permute.xlu0 %2211
        %2213 = vrot.lane.b32.xlu0 %v623, 120
        %v2214 = vpop.permute.xlu0 %2213
        %2215 = vrot.lane.b32.xlu0 %v683, 120
        %v2216 = vpop.permute.xlu0 %2215
        %2217 = vrot.lane.b32.xlu0 %v624, 120
        %v2218 = vpop.permute.xlu0 %2217
        %2219 = vrot.lane.b32.xlu0 %v684, 120
        %v2220 = vpop.permute.xlu0 %2219
        %vm2221 = vcmask 982016
        %v2222 = vsel %vm2221, %v2182, %v2184
        %v2223 = vsel %vm2221, %v2186, %v2188
        %v2224 = vsel %vm2221, %v2190, %v2192
        %v2225 = vsel %vm2221, %v2194, %v2196
        %v2226 = vsel %vm2221, %v2198, %v2200
        %v2227 = vsel %vm2221, %v2202, %v2204
        %v2228 = vsel %vm2221, %v2206, %v2208
        %v2229 = vsel %vm2221, %v2210, %v2212
        %v2230 = vsel %vm2221, %v2214, %v2216
        %v2231 = vsel %vm2221, %v2218, %v2220
        %v2243 = vsel %vm799, %v2170, 0
        %v2246 = vsel %vm799, %v2172, 0
        %v2249 = vsel %vm799, %v2174, 0
        %v2252 = vsel %vm799, %v2176, 0
        %2254 = vmatprep.subr.bf16.mxu0 0
        %2255 = vmatpush1.bf16.msra.mxu0 %v2222
        %2256 = vmatprep.subr.bf16.mxu0 0
        %2257 = vmatpush1.bf16.msra.mxu0 %v2223
        %2258 = vmatprep.subr.bf16.mxu0 0
        %2259 = vmatpush1.bf16.msra.mxu0 %v2224
        %2260 = vmatprep.subr.bf16.mxu0 0
        %2261 = vmatpush1.bf16.msra.mxu0 %v2225
        %2262 = vmatprep.subr.bf16.mxu0 0
        %2263 = vmatpush1.bf16.msra.mxu0 %v2226
        %2264 = vmatprep.subr.bf16.mxu0 0
        %2265 = vmatpush1.bf16.msra.mxu0 %v2227
        %2266 = vmatprep.subr.bf16.mxu0 0
        %2267 = vmatpush1.bf16.msra.mxu0 %v2228
        %2268 = vmatprep.subr.bf16.mxu0 0
        %2269 = vmatpush1.bf16.msra.mxu0 %v2229
        %2270 = vmatprep.subr.bf16.mxu0 0
        %2271 = vmatpush1.bf16.msra.mxu0 %v2230
        %2272 = vmatprep.subr.bf16.mxu0 0
        %2273 = vmatpush1.bf16.msra.mxu0 %v2231
        %2274 = vmatprep.subr.bf16.mxu0 0
        %2275 = vmatpush1.bf16.msra.mxu0 0
        %2276 = vmatprep.subr.bf16.mxu0 0
        %2277 = vmatpush1.bf16.msra.mxu0 0
        %2278 = vmatprep.subr.bf16.mxu0 0
        %2279 = vmatpush1.bf16.msra.mxu0 0
        %2280 = vmatprep.subr.bf16.mxu0 0
        %2281 = vmatpush1.bf16.msra.mxu0 0
        %2282 = vmatprep.subr.bf16.mxu0 0
        %2283 = vmatpush1.bf16.msra.mxu0 0
        %2284 = vmatprep.subr.bf16.mxu0 0
        %2285 = vmatpush1.bf16.msra.mxu0 0
        %2286 = vmatprep.mubr.bf16.mxu0 %v2243
        %2287 = vmatmul.mubr.bf16.gmra.mrb[0].mxu0 %v2169
        %v2288 = vpop.f32.mrb[0].mxu0
        %v2289 = vadd.f32 0.0, %v2288
        %v2290 = vpop.f32.mrb[0].mxu0
        %v2291 = vpop.f32.mrb[0].mxu0
        %v2292 = vadd.f32 0.0, %v2291
        %v2293 = vpop.f32.mrb[0].mxu0
        %2294 = vmatprep.mubr.bf16.mxu0 %v2246
        %2295 = vmatmul.mubr.bf16.gmra.mrb[0].mxu0 %v2171
        %v2296 = vpop.f32.mrb[0].mxu0
        %v2297 = vadd.f32 0.0, %v2296
        %v2298 = vpop.f32.mrb[0].mxu0
        %v2299 = vpop.f32.mrb[0].mxu0
        %v2300 = vadd.f32 0.0, %v2299
        %v2301 = vpop.f32.mrb[0].mxu0
        %2302 = vmatprep.mubr.bf16.mxu0 %v2249
        %2303 = vmatmul.mubr.bf16.gmra.mrb[0].mxu0 %v2173
        %v2304 = vpop.f32.mrb[0].mxu0
        %v2305 = vadd.f32 0.0, %v2304
        %v2306 = vpop.f32.mrb[0].mxu0
        %v2307 = vpop.f32.mrb[0].mxu0
        %v2308 = vadd.f32 0.0, %v2307
        %v2309 = vpop.f32.mrb[0].mxu0
        %2310 = vmatprep.mubr.bf16.mxu0 %v2252
        %2311 = vmatmul.mubr.bf16.gmra.mrb[0].mxu0 %v2175
        %v2312 = vpop.f32.mrb[0].mxu0
        %v2313 = vadd.f32 0.0, %v2312
        %v2314 = vpop.f32.mrb[0].mxu0
        %v2315 = vpop.f32.mrb[0].mxu0
        %v2316 = vadd.f32 0.0, %v2315
        %v2317 = vpop.f32.mrb[0].mxu0
        %2318 = vdwg.mxu0
        %v2319 = vadd.f32 %v2128, %v2289
        %v2320 = vadd.f32 %v2129, %v2292
        %v2321 = vadd.f32 %v2130, %v2297
        %v2322 = vadd.f32 %v2131, %v2300
        %v2323 = vadd.f32 %v2132, %v2305
        %v2324 = vadd.f32 %v2133, %v2308
        %v2325 = vadd.f32 %v2134, %v2313
        %v2326 = vadd.f32 %v2135, %v2316
        %s2327 = scalar_lea.vmem %s2, 576
        %v2328 = vld [vmem:[%s2327] sm:$0xff]
        %v2329 = vld [vmem:[%s2327 + $0x8] sm:$0xff]
        %v2330 = vld [vmem:[%s2327 + $0x10] sm:$0xff]
        %v2331 = vld [vmem:[%s2327 + $0x18] sm:$0xff]
        %v2332 = vld [vmem:[%s2327 + $0x20] sm:$0xff]
        %v2333 = vld [vmem:[%s2327 + $0x28] sm:$0xff]
        %v2334 = vld [vmem:[%s2327 + $0x30] sm:$0xff]
        %v2335 = vld [vmem:[%s2327 + $0x38] sm:$0xff]
        %v2344 = vunpack.c.l.b16 %v2328
        %v2345 = vunpack.c.h.b16 %v2328
        %v2346 = vunpack.c.l.b16 %v2329
        %v2347 = vunpack.c.h.b16 %v2329
        %v2348 = vunpack.c.l.b16 %v2330
        %v2349 = vunpack.c.h.b16 %v2330
        %v2350 = vunpack.c.l.b16 %v2331
        %v2351 = vunpack.c.h.b16 %v2331
        %v2352 = vunpack.c.l.b16 %v2332
        %v2353 = vunpack.c.h.b16 %v2332
        %v2354 = vunpack.c.l.b16 %v2333
        %v2355 = vunpack.c.h.b16 %v2333
        %v2356 = vunpack.c.l.b16 %v2334
        %v2357 = vunpack.c.h.b16 %v2334
        %v2358 = vunpack.c.l.b16 %v2335
        %v2359 = vunpack.c.h.b16 %v2335
        %v2360 = vpack.c.b16 %v2346, %v2344
        %v2361 = vpack.c.b16 %v2347, %v2345
        %v2362 = vpack.c.b16 %v2350, %v2348
        %v2363 = vpack.c.b16 %v2351, %v2349
        %v2364 = vpack.c.b16 %v2354, %v2352
        %v2365 = vpack.c.b16 %v2355, %v2353
        %v2366 = vpack.c.b16 %v2358, %v2356
        %v2367 = vpack.c.b16 %v2359, %v2357
        %2372 = vrot.lane.b32.xlu0 %v615, 119
        %v2373 = vpop.permute.xlu0 %2372
        %2374 = vrot.lane.b32.xlu0 %v675, 119
        %v2375 = vpop.permute.xlu0 %2374
        %2376 = vrot.lane.b32.xlu0 %v616, 119
        %v2377 = vpop.permute.xlu0 %2376
        %2378 = vrot.lane.b32.xlu0 %v676, 119
        %v2379 = vpop.permute.xlu0 %2378
        %2380 = vrot.lane.b32.xlu0 %v617, 119
        %v2381 = vpop.permute.xlu0 %2380
        %2382 = vrot.lane.b32.xlu0 %v677, 119
        %v2383 = vpop.permute.xlu0 %2382
        %2384 = vrot.lane.b32.xlu0 %v618, 119
        %v2385 = vpop.permute.xlu0 %2384
        %2386 = vrot.lane.b32.xlu0 %v678, 119
        %v2387 = vpop.permute.xlu0 %2386
        %2388 = vrot.lane.b32.xlu0 %v619, 119
        %v2389 = vpop.permute.xlu0 %2388
        %2390 = vrot.lane.b32.xlu0 %v679, 119
        %v2391 = vpop.permute.xlu0 %2390
        %2392 = vrot.lane.b32.xlu0 %v620, 119
        %v2393 = vpop.permute.xlu0 %2392
        %2394 = vrot.lane.b32.xlu0 %v680, 119
        %v2395 = vpop.permute.xlu0 %2394
        %2396 = vrot.lane.b32.xlu0 %v621, 119
        %v2397 = vpop.permute.xlu0 %2396
        %2398 = vrot.lane.b32.xlu0 %v681, 119
        %v2399 = vpop.permute.xlu0 %2398
        %2400 = vrot.lane.b32.xlu0 %v622, 119
        %v2401 = vpop.permute.xlu0 %2400
        %2402 = vrot.lane.b32.xlu0 %v682, 119
        %v2403 = vpop.permute.xlu0 %2402
        %2404 = vrot.lane.b32.xlu0 %v623, 119
        %v2405 = vpop.permute.xlu0 %2404
        %2406 = vrot.lane.b32.xlu0 %v683, 119
        %v2407 = vpop.permute.xlu0 %2406
        %2408 = vrot.lane.b32.xlu0 %v624, 119
        %v2409 = vpop.permute.xlu0 %2408
        %2410 = vrot.lane.b32.xlu0 %v684, 119
        %v2411 = vpop.permute.xlu0 %2410
        %vm2412 = vcmask 973824
        %v2413 = vsel %vm2412, %v2373, %v2375
        %v2414 = vsel %vm2412, %v2377, %v2379
        %v2415 = vsel %vm2412, %v2381, %v2383
        %v2416 = vsel %vm2412, %v2385, %v2387
        %v2417 = vsel %vm2412, %v2389, %v2391
        %v2418 = vsel %vm2412, %v2393, %v2395
        %v2419 = vsel %vm2412, %v2397, %v2399
        %v2420 = vsel %vm2412, %v2401, %v2403
        %v2421 = vsel %vm2412, %v2405, %v2407
        %v2422 = vsel %vm2412, %v2409, %v2411
        %v2434 = vsel %vm799, %v2361, 0
        %v2437 = vsel %vm799, %v2363, 0
        %v2440 = vsel %vm799, %v2365, 0
        %v2443 = vsel %vm799, %v2367, 0
        %2445 = vmatprep.subr.bf16.mxu0 0
        %2446 = vmatpush1.bf16.msra.mxu0 %v2413
        %2447 = vmatprep.subr.bf16.mxu0 0
        %2448 = vmatpush1.bf16.msra.mxu0 %v2414
        %2449 = vmatprep.subr.bf16.mxu0 0
        %2450 = vmatpush1.bf16.msra.mxu0 %v2415
        %2451 = vmatprep.subr.bf16.mxu0 0
        %2452 = vmatpush1.bf16.msra.mxu0 %v2416
        %2453 = vmatprep.subr.bf16.mxu0 0
        %2454 = vmatpush1.bf16.msra.mxu0 %v2417
        %2455 = vmatprep.subr.bf16.mxu0 0
        %2456 = vmatpush1.bf16.msra.mxu0 %v2418
        %2457 = vmatprep.subr.bf16.mxu0 0
        %2458 = vmatpush1.bf16.msra.mxu0 %v2419
        %2459 = vmatprep.subr.bf16.mxu0 0
        %2460 = vmatpush1.bf16.msra.mxu0 %v2420
        %2461 = vmatprep.subr.bf16.mxu0 0
        %2462 = vmatpush1.bf16.msra.mxu0 %v2421
        %2463 = vmatprep.subr.bf16.mxu0 0
        %2464 = vmatpush1.bf16.msra.mxu0 %v2422
        %2465 = vmatprep.subr.bf16.mxu0 0
        %2466 = vmatpush1.bf16.msra.mxu0 0
        %2467 = vmatprep.subr.bf16.mxu0 0
        %2468 = vmatpush1.bf16.msra.mxu0 0
        %2469 = vmatprep.subr.bf16.mxu0 0
        %2470 = vmatpush1.bf16.msra.mxu0 0
        %2471 = vmatprep.subr.bf16.mxu0 0
        %2472 = vmatpush1.bf16.msra.mxu0 0
        %2473 = vmatprep.subr.bf16.mxu0 0
        %2474 = vmatpush1.bf16.msra.mxu0 0
        %2475 = vmatprep.subr.bf16.mxu0 0
        %2476 = vmatpush1.bf16.msra.mxu0 0
        %2477 = vmatprep.mubr.bf16.mxu0 %v2434
        %2478 = vmatmul.mubr.bf16.gmra.mrb[0].mxu0 %v2360
        %v2479 = vpop.f32.mrb[0].mxu0
        %v2480 = vadd.f32 0.0, %v2479
        %v2481 = vpop.f32.mrb[0].mxu0
        %v2482 = vpop.f32.mrb[0].mxu0
        %v2483 = vadd.f32 0.0, %v2482
        %v2484 = vpop.f32.mrb[0].mxu0
        %2485 = vmatprep.mubr.bf16.mxu0 %v2437
        %2486 = vmatmul.mubr.bf16.gmra.mrb[0].mxu0 %v2362
        %v2487 = vpop.f32.mrb[0].mxu0
        %v2488 = vadd.f32 0.0, %v2487
        %v2489 = vpop.f32.mrb[0].mxu0
        %v2490 = vpop.f32.mrb[0].mxu0
        %v2491 = vadd.f32 0.0, %v2490
        %v2492 = vpop.f32.mrb[0].mxu0
        %2493 = vmatprep.mubr.bf16.mxu0 %v2440
        %2494 = vmatmul.mubr.bf16.gmra.mrb[0].mxu0 %v2364
        %v2495 = vpop.f32.mrb[0].mxu0
        %v2496 = vadd.f32 0.0, %v2495
        %v2497 = vpop.f32.mrb[0].mxu0
        %v2498 = vpop.f32.mrb[0].mxu0
        %v2499 = vadd.f32 0.0, %v2498
        %v2500 = vpop.f32.mrb[0].mxu0
        %2501 = vmatprep.mubr.bf16.mxu0 %v2443
        %2502 = vmatmul.mubr.bf16.gmra.mrb[0].mxu0 %v2366
        %v2503 = vpop.f32.mrb[0].mxu0
        %v2504 = vadd.f32 0.0, %v2503
        %v2505 = vpop.f32.mrb[0].mxu0
        %v2506 = vpop.f32.mrb[0].mxu0
        %v2507 = vadd.f32 0.0, %v2506
        %v2508 = vpop.f32.mrb[0].mxu0
        %2509 = vdwg.mxu0
        %v2510 = vadd.f32 %v2319, %v2480
        %v2511 = vadd.f32 %v2320, %v2483
        %v2512 = vadd.f32 %v2321, %v2488
        %v2513 = vadd.f32 %v2322, %v2491
        %v2514 = vadd.f32 %v2323, %v2496
        %v2515 = vadd.f32 %v2324, %v2499
        %v2516 = vadd.f32 %v2325, %v2504
        %v2517 = vadd.f32 %v2326, %v2507
        %s2518 = scalar_lea.vmem %s2, 640
        %v2519 = vld [vmem:[%s2518] sm:$0xff]
        %v2520 = vld [vmem:[%s2518 + $0x8] sm:$0xff]
        %v2521 = vld [vmem:[%s2518 + $0x10] sm:$0xff]
        %v2522 = vld [vmem:[%s2518 + $0x18] sm:$0xff]
        %v2523 = vld [vmem:[%s2518 + $0x20] sm:$0xff]
        %v2524 = vld [vmem:[%s2518 + $0x28] sm:$0xff]
        %v2525 = vld [vmem:[%s2518 + $0x30] sm:$0xff]
        %v2526 = vld [vmem:[%s2518 + $0x38] sm:$0xff]
        %v2535 = vunpack.c.l.b16 %v2519
        %v2536 = vunpack.c.h.b16 %v2519
        %v2537 = vunpack.c.l.b16 %v2520
        %v2538 = vunpack.c.h.b16 %v2520
        %v2539 = vunpack.c.l.b16 %v2521
        %v2540 = vunpack.c.h.b16 %v2521
        %v2541 = vunpack.c.l.b16 %v2522
        %v2542 = vunpack.c.h.b16 %v2522
        %v2543 = vunpack.c.l.b16 %v2523
        %v2544 = vunpack.c.h.b16 %v2523
        %v2545 = vunpack.c.l.b16 %v2524
        %v2546 = vunpack.c.h.b16 %v2524
        %v2547 = vunpack.c.l.b16 %v2525
        %v2548 = vunpack.c.h.b16 %v2525
        %v2549 = vunpack.c.l.b16 %v2526
        %v2550 = vunpack.c.h.b16 %v2526
        %v2551 = vpack.c.b16 %v2537, %v2535
        %v2552 = vpack.c.b16 %v2538, %v2536
        %v2553 = vpack.c.b16 %v2541, %v2539
        %v2554 = vpack.c.b16 %v2542, %v2540
        %v2555 = vpack.c.b16 %v2545, %v2543
        %v2556 = vpack.c.b16 %v2546, %v2544
        %v2557 = vpack.c.b16 %v2549, %v2547
        %v2558 = vpack.c.b16 %v2550, %v2548
        %2563 = vrot.lane.b32.xlu0 %v615, 118
        %v2564 = vpop.permute.xlu0 %2563
        %2565 = vrot.lane.b32.xlu0 %v675, 118
        %v2566 = vpop.permute.xlu0 %2565
        %2567 = vrot.lane.b32.xlu0 %v616, 118
        %v2568 = vpop.permute.xlu0 %2567
        %2569 = vrot.lane.b32.xlu0 %v676, 118
        %v2570 = vpop.permute.xlu0 %2569
        %2571 = vrot.lane.b32.xlu0 %v617, 118
        %v2572 = vpop.permute.xlu0 %2571
        %2573 = vrot.lane.b32.xlu0 %v677, 118
        %v2574 = vpop.permute.xlu0 %2573
        %2575 = vrot.lane.b32.xlu0 %v618, 118
        %v2576 = vpop.permute.xlu0 %2575
        %2577 = vrot.lane.b32.xlu0 %v678, 118
        %v2578 = vpop.permute.xlu0 %2577
        %2579 = vrot.lane.b32.xlu0 %v619, 118
        %v2580 = vpop.permute.xlu0 %2579
        %2581 = vrot.lane.b32.xlu0 %v679, 118
        %v2582 = vpop.permute.xlu0 %2581
        %2583 = vrot.lane.b32.xlu0 %v620, 118
        %v2584 = vpop.permute.xlu0 %2583
        %2585 = vrot.lane.b32.xlu0 %v680, 118
        %v2586 = vpop.permute.xlu0 %2585
        %2587 = vrot.lane.b32.xlu0 %v621, 118
        %v2588 = vpop.permute.xlu0 %2587
        %2589 = vrot.lane.b32.xlu0 %v681, 118
        %v2590 = vpop.permute.xlu0 %2589
        %2591 = vrot.lane.b32.xlu0 %v622, 118
        %v2592 = vpop.permute.xlu0 %2591
        %2593 = vrot.lane.b32.xlu0 %v682, 118
        %v2594 = vpop.permute.xlu0 %2593
        %2595 = vrot.lane.b32.xlu0 %v623, 118
        %v2596 = vpop.permute.xlu0 %2595
        %2597 = vrot.lane.b32.xlu0 %v683, 118
        %v2598 = vpop.permute.xlu0 %2597
        %2599 = vrot.lane.b32.xlu0 %v624, 118
        %v2600 = vpop.permute.xlu0 %2599
        %2601 = vrot.lane.b32.xlu0 %v684, 118
        %v2602 = vpop.permute.xlu0 %2601
        %vm2603 = vcmask 965632
        %v2604 = vsel %vm2603, %v2564, %v2566
        %v2605 = vsel %vm2603, %v2568, %v2570
        %v2606 = vsel %vm2603, %v2572, %v2574
        %v2607 = vsel %vm2603, %v2576, %v2578
        %v2608 = vsel %vm2603, %v2580, %v2582
        %v2609 = vsel %vm2603, %v2584, %v2586
        %v2610 = vsel %vm2603, %v2588, %v2590
        %v2611 = vsel %vm2603, %v2592, %v2594
        %v2612 = vsel %vm2603, %v2596, %v2598
        %v2613 = vsel %vm2603, %v2600, %v2602
        %v2625 = vsel %vm799, %v2552, 0
        %v2628 = vsel %vm799, %v2554, 0
        %v2631 = vsel %vm799, %v2556, 0
        %v2634 = vsel %vm799, %v2558, 0
        %2636 = vmatprep.subr.bf16.mxu0 0
        %2637 = vmatpush1.bf16.msra.mxu0 %v2604
        %2638 = vmatprep.subr.bf16.mxu0 0
        %2639 = vmatpush1.bf16.msra.mxu0 %v2605
        %2640 = vmatprep.subr.bf16.mxu0 0
        %2641 = vmatpush1.bf16.msra.mxu0 %v2606
        %2642 = vmatprep.subr.bf16.mxu0 0
        %2643 = vmatpush1.bf16.msra.mxu0 %v2607
        %2644 = vmatprep.subr.bf16.mxu0 0
        %2645 = vmatpush1.bf16.msra.mxu0 %v2608
        %2646 = vmatprep.subr.bf16.mxu0 0
        %2647 = vmatpush1.bf16.msra.mxu0 %v2609
        %2648 = vmatprep.subr.bf16.mxu0 0
        %2649 = vmatpush1.bf16.msra.mxu0 %v2610
        %2650 = vmatprep.subr.bf16.mxu0 0
        %2651 = vmatpush1.bf16.msra.mxu0 %v2611
        %2652 = vmatprep.subr.bf16.mxu0 0
        %2653 = vmatpush1.bf16.msra.mxu0 %v2612
        %2654 = vmatprep.subr.bf16.mxu0 0
        %2655 = vmatpush1.bf16.msra.mxu0 %v2613
        %2656 = vmatprep.subr.bf16.mxu0 0
        %2657 = vmatpush1.bf16.msra.mxu0 0
        %2658 = vmatprep.subr.bf16.mxu0 0
        %2659 = vmatpush1.bf16.msra.mxu0 0
        %2660 = vmatprep.subr.bf16.mxu0 0
        %2661 = vmatpush1.bf16.msra.mxu0 0
        %2662 = vmatprep.subr.bf16.mxu0 0
        %2663 = vmatpush1.bf16.msra.mxu0 0
        %2664 = vmatprep.subr.bf16.mxu0 0
        %2665 = vmatpush1.bf16.msra.mxu0 0
        %2666 = vmatprep.subr.bf16.mxu0 0
        %2667 = vmatpush1.bf16.msra.mxu0 0
        %2668 = vmatprep.mubr.bf16.mxu0 %v2625
        %2669 = vmatmul.mubr.bf16.gmra.mrb[0].mxu0 %v2551
        %v2670 = vpop.f32.mrb[0].mxu0
        %v2671 = vadd.f32 0.0, %v2670
        %v2672 = vpop.f32.mrb[0].mxu0
        %v2673 = vpop.f32.mrb[0].mxu0
        %v2674 = vadd.f32 0.0, %v2673
        %v2675 = vpop.f32.mrb[0].mxu0
        %2676 = vmatprep.mubr.bf16.mxu0 %v2628
        %2677 = vmatmul.mubr.bf16.gmra.mrb[0].mxu0 %v2553
        %v2678 = vpop.f32.mrb[0].mxu0
        %v2679 = vadd.f32 0.0, %v2678
        %v2680 = vpop.f32.mrb[0].mxu0
        %v2681 = vpop.f32.mrb[0].mxu0
        %v2682 = vadd.f32 0.0, %v2681
        %v2683 = vpop.f32.mrb[0].mxu0
        %2684 = vmatprep.mubr.bf16.mxu0 %v2631
        %2685 = vmatmul.mubr.bf16.gmra.mrb[0].mxu0 %v2555
        %v2686 = vpop.f32.mrb[0].mxu0
        %v2687 = vadd.f32 0.0, %v2686
        %v2688 = vpop.f32.mrb[0].mxu0
        %v2689 = vpop.f32.mrb[0].mxu0
        %v2690 = vadd.f32 0.0, %v2689
        %v2691 = vpop.f32.mrb[0].mxu0
        %2692 = vmatprep.mubr.bf16.mxu0 %v2634
        %2693 = vmatmul.mubr.bf16.gmra.mrb[0].mxu0 %v2557
        %v2694 = vpop.f32.mrb[0].mxu0
        %v2695 = vadd.f32 0.0, %v2694
        %v2696 = vpop.f32.mrb[0].mxu0
        %v2697 = vpop.f32.mrb[0].mxu0
        %v2698 = vadd.f32 0.0, %v2697
        %v2699 = vpop.f32.mrb[0].mxu0
        %2700 = vdwg.mxu0
        %v2701 = vadd.f32 %v2510, %v2671
        %v2702 = vadd.f32 %v2511, %v2674
        %v2703 = vadd.f32 %v2512, %v2679
        %v2704 = vadd.f32 %v2513, %v2682
        %v2705 = vadd.f32 %v2514, %v2687
        %v2706 = vadd.f32 %v2515, %v2690
        %v2707 = vadd.f32 %v2516, %v2695
        %v2708 = vadd.f32 %v2517, %v2698
        %v2709 = vld [vmem:[%s3] sm:$0xff]
        %v2710 = vld [vmem:[%s3 + $0x8] sm:$0xff]
        %v2711 = vld [vmem:[%s3 + $0x10] sm:$0xff]
        %v2712 = vld [vmem:[%s3 + $0x18] sm:$0xff]
        %v2713 = vld [vmem:[%s3 + $0x20] sm:$0xff]
        %v2714 = vld [vmem:[%s3 + $0x28] sm:$0xff]
        %v2715 = vld [vmem:[%s3 + $0x30] sm:$0xff]
        %v2716 = vld [vmem:[%s3 + $0x38] sm:$0xff]
        %2718 = vset.pattern.permute.xlu0 0
        %2719 = vperm.xlu0 %2718, %v2709
        %v2720 = vpop.permute.xlu0 %2719
        %2723 = vset.pattern.permute.xlu0 0
        %2724 = vperm.xlu0 %2723, %v2710
        %v2725 = vpop.permute.xlu0 %2724
        %2728 = vset.pattern.permute.xlu0 0
        %2729 = vperm.xlu0 %2728, %v2711
        %v2730 = vpop.permute.xlu0 %2729
        %2733 = vset.pattern.permute.xlu0 0
        %2734 = vperm.xlu0 %2733, %v2712
        %v2735 = vpop.permute.xlu0 %2734
        %2738 = vset.pattern.permute.xlu0 0
        %2739 = vperm.xlu0 %2738, %v2713
        %v2740 = vpop.permute.xlu0 %2739
        %2743 = vset.pattern.permute.xlu0 0
        %2744 = vperm.xlu0 %2743, %v2714
        %v2745 = vpop.permute.xlu0 %2744
        %2748 = vset.pattern.permute.xlu0 0
        %2749 = vperm.xlu0 %2748, %v2715
        %v2750 = vpop.permute.xlu0 %2749
        %2753 = vset.pattern.permute.xlu0 0
        %2754 = vperm.xlu0 %2753, %v2716
        %v2755 = vpop.permute.xlu0 %2754
        %v2757 = vadd.f32 %v2701, %v2720
        %v2758 = vadd.f32 %v2702, %v2725
        %v2759 = vadd.f32 %v2703, %v2730
        %v2760 = vadd.f32 %v2704, %v2735
        %v2761 = vadd.f32 %v2705, %v2740
        %v2762 = vadd.f32 %v2706, %v2745
        %v2763 = vadd.f32 %v2707, %v2750
        %v2764 = vadd.f32 %v2708, %v2755
        %v2765 = vmax.f32 %v2757, 0.0
        %v2766 = vmax.f32 %v2758, 0.0
        %v2767 = vmax.f32 %v2759, 0.0
        %v2768 = vmax.f32 %v2760, 0.0
        %v2769 = vmax.f32 %v2761, 0.0
        %v2770 = vmax.f32 %v2762, 0.0
        %v2771 = vmax.f32 %v2763, 0.0
        %v2772 = vmax.f32 %v2764, 0.0
        %2773 = vst [vmem:[%s524] sm:$0xff] %v2765
        %2774 = vst [vmem:[%s524 + $0x8] sm:$0xff] %v2766
        %2775 = vst [vmem:[%s524 + $0x10] sm:$0xff] %v2767
        %2776 = vst [vmem:[%s524 + $0x18] sm:$0xff] %v2768
        %2777 = vst [vmem:[%s524 + $0x20] sm:$0xff] %v2769
        %2778 = vst [vmem:[%s524 + $0x28] sm:$0xff] %v2770
        %2779 = vst [vmem:[%s524 + $0x30] sm:$0xff] %v2771
        %2780 = vst [vmem:[%s524 + $0x38] sm:$0xff] %v2772
        %s2781 = smul.u32 %s22, 128
        %v2782 = vlaneseq
        %v2783 = vand.u32 %v2782, 127
        %v2784 = vstv %s2781
        %v2785 = vadd.s32 %v2784, %v2783
        %vm2786 = vcmp.lt.s32.totalorder %v2785, 16
        %v2787 = vsel %vm2786, 1, 0
        %vm2788 = vcmp.eq.s32.totalorder %v2787, 1
        %v2789 = vsel %vm2788, %v2765, 0.0
        %v2790 = vsel %vm2788, %v2766, 0.0
        %v2791 = vsel %vm2788, %v2767, 0.0
        %v2792 = vsel %vm2788, %v2768, 0.0
        %v2793 = vsel %vm2788, %v2769, 0.0
        %v2794 = vsel %vm2788, %v2770, 0.0
        %v2795 = vsel %vm2788, %v2771, 0.0
        %v2796 = vsel %vm2788, %v2772, 0.0
        %2797 = vadd.xlane.f32.xlu0 %v2789
        %v2798 = vpop.xlane.xlu0 %2797
        %2799 = vadd.xlane.f32.xlu0 %v2790
        %v2800 = vpop.xlane.xlu0 %2799
        %2801 = vadd.xlane.f32.xlu0 %v2791
        %v2802 = vpop.xlane.xlu0 %2801
        %2803 = vadd.xlane.f32.xlu0 %v2792
        %v2804 = vpop.xlane.xlu0 %2803
        %2805 = vadd.xlane.f32.xlu0 %v2793
        %v2806 = vpop.xlane.xlu0 %2805
        %2807 = vadd.xlane.f32.xlu0 %v2794
        %v2808 = vpop.xlane.xlu0 %2807
        %2809 = vadd.xlane.f32.xlu0 %v2795
        %v2810 = vpop.xlane.xlu0 %2809
        %2811 = vadd.xlane.f32.xlu0 %v2796
        %v2812 = vpop.xlane.xlu0 %2811
        %v2813 = vmul.f32 %v2789, %v2789
        %v2814 = vmul.f32 %v2790, %v2790
        %v2815 = vmul.f32 %v2791, %v2791
        %v2816 = vmul.f32 %v2792, %v2792
        %v2817 = vmul.f32 %v2793, %v2793
        %v2818 = vmul.f32 %v2794, %v2794
        %v2819 = vmul.f32 %v2795, %v2795
        %v2820 = vmul.f32 %v2796, %v2796
        %2821 = vadd.xlane.f32.xlu0 %v2813
        %v2822 = vpop.xlane.xlu0 %2821
        %2823 = vadd.xlane.f32.xlu0 %v2814
        %v2824 = vpop.xlane.xlu0 %2823
        %2825 = vadd.xlane.f32.xlu0 %v2815
        %v2826 = vpop.xlane.xlu0 %2825
        %2827 = vadd.xlane.f32.xlu0 %v2816
        %v2828 = vpop.xlane.xlu0 %2827
        %2829 = vadd.xlane.f32.xlu0 %v2817
        %v2830 = vpop.xlane.xlu0 %2829
        %2831 = vadd.xlane.f32.xlu0 %v2818
        %v2832 = vpop.xlane.xlu0 %2831
        %2833 = vadd.xlane.f32.xlu0 %v2819
        %v2834 = vpop.xlane.xlu0 %2833
        %2835 = vadd.xlane.f32.xlu0 %v2820
        %v2836 = vpop.xlane.xlu0 %2835
        %vm2837 = vcmask 7168
        %v2838 = vsel %vm2837, %v2798, %v2822
        %v2839 = vsel %vm2837, %v2800, %v2824
        %v2840 = vsel %vm2837, %v2802, %v2826
        %v2841 = vsel %vm2837, %v2804, %v2828
        %v2842 = vsel %vm2837, %v2806, %v2830
        %v2843 = vsel %vm2837, %v2808, %v2832
        %v2844 = vsel %vm2837, %v2810, %v2834
        %v2845 = vsel %vm2837, %v2812, %v2836
        %vm2846 = vcmask 15360
        %2847 = vst.msk [vmem:[%s533] sm:$0xff] %vm2846, %v2838
        %2848 = vst.msk [vmem:[%s533 + $0x8] sm:$0xff] %vm2846, %v2839
        %2849 = vst.msk [vmem:[%s533 + $0x10] sm:$0xff] %vm2846, %v2840
        %2850 = vst.msk [vmem:[%s533 + $0x18] sm:$0xff] %vm2846, %v2841
        %2851 = vst.msk [vmem:[%s533 + $0x20] sm:$0xff] %vm2846, %v2842
        %2852 = vst.msk [vmem:[%s533 + $0x28] sm:$0xff] %vm2846, %v2843
        %2853 = vst.msk [vmem:[%s533 + $0x30] sm:$0xff] %vm2846, %v2844
        %2854 = vst.msk [vmem:[%s533 + $0x38] sm:$0xff] %vm2846, %v2845
        %p2855 = scmp.lt.s32.totalorder %s21, 1
        %s2856 = scalar_select %p2855, %s21, 1
        %p2857 = scmp.lt.s32.totalorder %s22, 0
        %s2858 = scalar_select %p2857, %s22, 0
        %s2859 = smul.addr %s2856, 8
        %s2860 = sadd.s32 %s2858, %s2859
        %s2861 = smul.addr %s2860, 8
        %s2862 = scalar_lea.vmem %s4, %s2861
        %p2863 = scmp.lt.s32.totalorder %s21, 1
        %s2864 = scalar_select %p2863, %s21, 1
        %p2865 = scmp.lt.s32.totalorder %s22, 0
        %s2866 = scalar_select %p2865, %s22, 0
        %s2867 = smul.addr %s2866, 8
        %s2868 = smul.addr %s2864, 8
        %s2869 = sadd.s32 %s2867, %s2868
        %s2870 = smul.addr %s2869, 8
        %s2871 = scalar_lea.vmem %s5, %s2870
        // Predicated region
        $region119: #{conv_block_forward.2} parent=109 // pred_check
          %p2872 = pneg %p149
        $region120: #{conv_block_forward.2} parent=109 // pred_check_branch
          %2874 = sbr.rel (%p2872) target = $region122
        $region121: #{conv_block_forward.2} parent=109 // pred_region
          _
        $region122: #{conv_block_forward.2} parent=109 // pred_fallthru
          _
        // Predicated region
        $region123: #{conv_block_forward.2} parent=109 // pred_check
          %p2875 = pneg %p177
        $region124: #{conv_block_forward.2} parent=109 // pred_check_branch
          %2877 = sbr.rel (%p2875) target = $region126
        $region125: #{conv_block_forward.2} parent=109 // pred_region
          _
        $region126: #{conv_block_forward.2} parent=109 // pred_fallthru
          _
      $region110: #{conv_block_forward.2} parent=5 // pred_fallthru
        _
      %p2878 = scmp.le.s32.totalorder 2, %s12
      // Predicated region
      $region127: #{conv_block_forward.2} parent=5 // pred_check
        %p2879 = pneg %p2878
      $region128: #{conv_block_forward.2} parent=5 // pred_check_branch
        %2881 = sbr.rel (%p2879) target = $region130
      $region129: #{conv_block_forward.2} parent=5 // pred_region
        %s2882 = ssub.s32 %s12, 2
        // Predicated region
        $region131: #{conv_block_forward.2} parent=129 // pred_check
          %p2883 = pneg %p155
        $region132: #{conv_block_forward.2} parent=129 // pred_check_branch
          %2885 = sbr.rel (%p2883) target = $region134
        $region133: #{conv_block_forward.2} parent=129 // pred_region
          %p2886 = scmp.lt.s32.totalorder %s23, 1
          %s2887 = scalar_select %p2886, %s23, 1
          %p2888 = scmp.lt.s32.totalorder %s24, 0
          %s2889 = scalar_select %p2888, %s24, 0
          %s2890 = smul.addr %s2887, 8
          %s2891 = sadd.s32 %s2889, %s2890
          %s2892 = smul.addr %s2891, 8
          %s2893 = scalar_lea.vmem %s4, %s2892
        $region134: #{conv_block_forward.2} parent=129 // pred_fallthru
          _
        // Predicated region
        $region135: #{conv_block_forward.2} parent=129 // pred_check
          %p2894 = pneg %p183
        $region136: #{conv_block_forward.2} parent=129 // pred_check_branch
          %2896 = sbr.rel (%p2894) target = $region138
        $region137: #{conv_block_forward.2} parent=129 // pred_region
          %p2897 = scmp.lt.s32.totalorder %s23, 1
          %s2898 = scalar_select %p2897, %s23, 1
          %p2899 = scmp.lt.s32.totalorder %s24, 0
          %s2900 = scalar_select %p2899, %s24, 0
          %s2901 = smul.addr %s2900, 8
          %s2902 = smul.addr %s2898, 8
          %s2903 = sadd.s32 %s2901, %s2902
          %s2904 = smul.addr %s2903, 8
          %s2905 = scalar_lea.vmem %s5, %s2904
        $region138: #{conv_block_forward.2} parent=129 // pred_fallthru
          _
      $region130: #{conv_block_forward.2} parent=5 // pred_fallthru
        _
    $region6: #{conv_block_forward.2} parent=1 // loop_footer
      %s16 = sadd.s32 1, %s12
    $region7: #{conv_block_forward.2} parent=1 // loop_footer_branch
      %11 = sbr.rel target = $region3
    $region8: #{conv_block_forward.2} parent=1 // loop_exit
      _

</llo_original>
